<compile_context>
chip_gen: v7x
topology: tpu7x:2x2x1
jax: 0.10.0
libtpu: 0.0.40
codegen_flags: <defaults>
</compile_context>

<pallas_src>
from typing import NamedTuple, Dict, List, Tuple

import jax
import jax.numpy as jnp
from jax.experimental import pallas as pl
from jax.experimental.pallas import tpu as pltpu


class NestedTensor(NamedTuple):
    tensors: jax.Array  # (N, C, H, W) float32
    mask: jax.Array     # (N, H, W)    bool


# ----------------------------------------------------------------------------
# Pallas kernels: matmul + bias + ReLU (the conv hot path after im2col)
# ----------------------------------------------------------------------------
def _mm_bias_relu_kernel(a_ref, w_ref, b_ref, o_ref):
    """Single-K-step path (no accumulator scratch): o = relu(a @ w + b)."""
    acc = jnp.dot(a_ref[...], w_ref[...], preferred_element_type=jnp.float32)
    o_ref[...] = jnp.maximum(acc + b_ref[...], 0.0).astype(o_ref.dtype)


def _mm_bias_relu_acc_kernel(a_ref, w_ref, b_ref, o_ref, acc_ref):
    """K-tiled fallback path with an f32 VMEM accumulator."""
    @pl.when(pl.program_id(2) == 0)
    def _init():
        acc_ref[...] = jnp.zeros_like(acc_ref)

    acc_ref[...] += jnp.dot(a_ref[...], w_ref[...],
                            preferred_element_type=jnp.float32)

    @pl.when(pl.program_id(2) == pl.num_programs(2) - 1)
    def _finalize():
        o_ref[...] = jnp.maximum(acc_ref[...] + b_ref[...], 0.0).astype(o_ref.dtype)


def _round_up(x: int, m: int) -> int:
    return (x + m - 1) // m * m


def _pick_tm(M8: int) -> int:
    """Row tile for an M that is already a multiple of 8.

    Up to 256 rows (fills the 2x256 MXU); tries to give >=2 row tiles so both
    v7x TensorCores get a 'parallel' step.
    """
    if M8 <= 8:
        return 8
    half = M8 // 2
    if half % 8 == 0:
        return min(256, half)
    return 8


def _pick_tn(cout_pad: int, n_m: int) -> int:
    """Cout tile.  cout_pad is a multiple of 128 by construction; force 128
    when the M axis has a single tile so the parallel grid product stays >=2."""
    if cout_pad % 256 == 0 and n_m >= 2:
        return 256
    if cout_pad % 128 == 0:
        return 128
    return cout_pad


def _pick_tk(K: int, tm: int, tn: int) -> int:
    """Full-K single reduction step whenever the double-buffered A/W blocks fit
    comfortably (grid-step overhead dominates at these sizes)."""
    full_k_bytes = 2 * (tm * K + K * tn) * 2          # double-buffered bf16
    if full_k_bytes <= 8 * 1024 * 1024:
        return K
    for cand in (512, 384, 256, 128):
        if K % cand == 0:
            return cand
    return K


def matmul_bias_relu(a, w2d, b2d, out_dtype=jnp.bfloat16):
    """relu(a @ w2d + b2d) on the MXU.

    a:   (M, K)        bf16
    w2d: (K, Cout_pad) bf16   (Cout_pad a multiple of 128)
    b2d: (1, Cout_pad) f32
    Returns (M, Cout_pad) out_dtype (bf16 by default, f32 accumulation).
    """
    M, K = a.shape
    cout_pad = w2d.shape[1]

    M8 = _round_up(max(M, 8), 8)
    tm = _pick_tm(M8)
    M_pad = _round_up(M8, tm)
    if M_pad != M:
        a = jnp.pad(a, ((0, M_pad - M), (0, 0)))

    n_m = M_pad // tm
    tn = _pick_tn(cout_pad, n_m)
    n_n = cout_pad // tn
    tk = _pick_tk(K, tm, tn)
    n_k = K // tk

    out_bytes = jnp.dtype(out_dtype).itemsize
    cost = pl.CostEstimate(
        flops=2 * M_pad * K * cout_pad,
        transcendentals=0,
        bytes_accessed=(M_pad * K * 2) * n_n            # A re-read per Cout tile
                       + (K * cout_pad * 2) * n_m       # W re-read per M tile
                       + cout_pad * 4 * n_m
                       + M_pad * cout_pad * out_bytes,
    )

    # VMEM budget derived from the tile working set (double-buffered inputs,
    # double-buffered output, optional f32 accumulator) with 4x headroom,
    # clamped to 8..32 MiB (well under v7x's 64 MiB per TensorCore).
    ws = 2 * (tm * tk + tk * tn) * 2 + 2 * tn * 4 + 2 * tm * tn * out_bytes
    if n_k > 1:
        ws += tm * tn * 4
    vmem_limit = int(min(32 * 1024 * 1024, max(8 * 1024 * 1024, 4 * ws)))

    out_shape = jax.ShapeDtypeStruct((M_pad, cout_pad), out_dtype)

    if n_k == 1:
        out = pl.pallas_call(
            _mm_bias_relu_kernel,
            out_shape=out_shape,
            grid_spec=pltpu.PrefetchScalarGridSpec(
                num_scalar_prefetch=0,
                grid=(n_m, n_n),
                in_specs=[
                    pl.BlockSpec((tm, K), lambda i, j: (i, 0)),
                    pl.BlockSpec((K, tn), lambda i, j: (0, j)),
                    pl.BlockSpec((1, tn), lambda i, j: (0, j)),
                ],
                out_specs=pl.BlockSpec((tm, tn), lambda i, j: (i, j)),
            ),
            compiler_params=pltpu.CompilerParams(
                dimension_semantics=("parallel", "parallel"),
                vmem_limit_bytes=vmem_limit,
            ),
            cost_estimate=cost,
        )(a, w2d, b2d)
    else:
        out = pl.pallas_call(
            _mm_bias_relu_acc_kernel,
            out_shape=out_shape,
            grid_spec=pltpu.PrefetchScalarGridSpec(
                num_scalar_prefetch=0,
                grid=(n_m, n_n, n_k),
                in_specs=[
                    pl.BlockSpec((tm, tk), lambda i, j, k: (i, k)),
                    pl.BlockSpec((tk, tn), lambda i, j, k: (k, j)),
                    pl.BlockSpec((1, tn), lambda i, j, k: (0, j)),
                ],
                out_specs=pl.BlockSpec((tm, tn), lambda i, j, k: (i, j)),
                scratch_shapes=[pltpu.VMEM((tm, tn), jnp.float32)],
            ),
            compiler_params=pltpu.CompilerParams(
                dimension_semantics=("parallel", "parallel", "arbitrary"),
                vmem_limit_bytes=vmem_limit,
            ),
            cost_estimate=cost,
        )(a, w2d, b2d)

    return out if M_pad == M else out[:M]


# ----------------------------------------------------------------------------
# Glue: im2col (pure slices, bf16), conv wrapper, mask downsample, forward
# ----------------------------------------------------------------------------
def im2col_3x3(x_nhwc, stride):
    """x: (N, H, W, C) -> (N*Ho*Wo, 9*C) patches for a 3x3, pad=1, stride conv."""
    N, H, W, C = x_nhwc.shape
    Ho = (H + 2 - 3) // stride + 1
    Wo = (W + 2 - 3) // stride + 1
    xp = jnp.pad(x_nhwc, ((0, 0), (1, 1), (1, 1), (0, 0)))
    cols = []
    for dy in range(3):
        for dx in range(3):
            cols.append(xp[:, dy:dy + (Ho - 1) * stride + 1:stride,
                              dx:dx + (Wo - 1) * stride + 1:stride, :])
    patches = jnp.concatenate(cols, axis=-1)      # (N, Ho, Wo, 9*C), order (dy,dx,c)
    return patches.reshape(N * Ho * Wo, 9 * C), (N, Ho, Wo)


class StageCfg(NamedTuple):
    cin: int
    cout: int
    stride: int
    k: int          # 9 * cin
    k_pad: int      # lane-friendly reduction dim (>= 128-aligned for small K)
    cout_pad: int   # Cout rounded up to a multiple of 128 (lane-dense store)


# Synthetic backbone config (scaled-down ResNet-style stages).
STAGE_CHANNELS = [32, 64, 128, 256]   # stands in for [256, 512, 1024, 2048]
STAGE_STRIDES = [4, 2, 2, 2]          # cumulative strides: [4, 8, 16, 32]
RETURN_LAYERS = {0: '0', 1: '1', 2: '2', 3: '3'}   # return_interm_layers=True


def make_stage_cfgs(c_in=3) -> List[StageCfg]:
    cfgs = []
    cin = c_in
    for cout, s in zip(STAGE_CHANNELS, STAGE_STRIDES):
        k = 9 * cin
        k_pad = 128 if k < 128 else k
        cout_pad = _round_up(cout, 128)
        cfgs.append(StageCfg(cin, cout, s, k, k_pad, cout_pad))
        cin = cout
    return cfgs


STAGE_CFGS = make_stage_cfgs(c_in=3)


def init_backbone_params(key) -> List[Tuple[jax.Array, jax.Array]]:
    """Per stage: (w2d (k_pad, cout_pad) bf16, bias (1, cout_pad) f32).

    Weights are reshaped / zero-padded / cast to bf16 once here so the forward
    pass does no per-call weight prep.
    """
    params = []
    for cfg in STAGE_CFGS:
        key, kw = jax.random.split(key)
        fan_in = 9 * cfg.cin
        w = jax.random.normal(kw, (3, 3, cfg.cin, cfg.cout), jnp.float32) / jnp.sqrt(fan_in)
        w2d = w.reshape(cfg.k, cfg.cout)          # (dy, dx, c) row ordering
        w2d = jnp.pad(w2d, ((0, cfg.k_pad - cfg.k), (0, cfg.cout_pad - cfg.cout)))
        b = jnp.zeros((1, cfg.cout_pad), jnp.float32)
        params.append((w2d.astype(jnp.bfloat16), b))
    return params


def conv3x3_bias_relu(x_nhwc, w2d_pad, b_pad, cfg: StageCfg):
    """3x3 / pad=1 / stride conv + bias + ReLU.  Returns (N, Ho, Wo, Cout) bf16."""
    a, (N, Ho, Wo) = im2col_3x3(x_nhwc, cfg.stride)           # (M, 9*Cin) bf16
    if cfg.k_pad != cfg.k:
        a = jnp.pad(a, ((0, 0), (0, cfg.k_pad - cfg.k)))      # lane-align K
    y = matmul_bias_relu(a, w2d_pad, b_pad)                   # (M, cout_pad) bf16
    return y[:, :cfg.cout].reshape(N, Ho, Wo, cfg.cout)


def mask_downsample_nearest(mask_bool, out_h, out_w):
    """Exact PyTorch F.interpolate(mode='nearest') + .to(bool).

    src = floor(dst * in/out) is an integer gather, so it is done outside any
    kernel (no MXU work; a kernel would just re-DMA the mask per scale).
    """
    N, H, W = mask_bool.shape
    idx_h = (jnp.arange(out_h) * H) // out_h
    idx_w = (jnp.arange(out_w) * W) // out_w
    return mask_bool[:, idx_h[:, None], idx_w[None, :]]


def backbone_base_forward(tensors_nchw, mask, params) -> Dict[str, NestedTensor]:
    """Mirrors BackboneBase.forward(NestedTensor(tensors, mask))."""
    # Single layout change in: NCHW -> NHWC, cast to bf16 once.  Everything
    # between stages stays NHWC bf16; returned tensors are transposed back to
    # NCHW and cast to f32 exactly once each.
    x = jnp.transpose(tensors_nchw, (0, 2, 3, 1)).astype(jnp.bfloat16)
    feats = []
    for (w2d, b), cfg in zip(params, STAGE_CFGS):
        x = conv3x3_bias_relu(x, w2d, b, cfg)
        feats.append(x)

    out: Dict[str, NestedTensor] = {}
    for idx, name in RETURN_LAYERS.items():
        xf = feats[idx]                              # (N, Ho, Wo, C) bf16
        Ho, Wo = xf.shape[1], xf.shape[2]
        m_out = mask_downsample_nearest(mask, Ho, Wo)            # bool
        out[name] = NestedTensor(
            jnp.transpose(xf, (0, 3, 1, 2)).astype(jnp.float32), m_out)
    return out


if __name__ == "__main__":
    key = jax.random.PRNGKey(0)
    k_x, k_p = jax.random.split(key)

    N, C_IN, H, W = 2, 3, 64, 64
    tensors = jax.random.normal(k_x, (N, C_IN, H, W), jnp.float32)

    # Deterministic padding mask (True = padded), like NestedTensor.mask.
    mask = jnp.zeros((N, H, W), dtype=bool)
    mask = mask.at[1, :, 3 * W // 4:].set(True)
    mask = mask.at[1, 3 * H // 4:, :].set(True)

    params = init_backbone_params(k_p)
    fwd = jax.jit(backbone_base_forward)
    out = fwd(tensors, mask, params)

    expected = {'0': (32, 16), '1': (64, 8), '2': (128, 4), '3': (256, 2)}
    for name, nt in out.items():
        jax.block_until_ready(nt.tensors)
        jax.block_until_ready(nt.mask)
        c, hw = expected[name]
        assert nt.tensors.shape == (N, c, hw, hw), (name, nt.tensors.shape)
        assert nt.tensors.dtype == jnp.float32
        assert nt.mask.shape == (N, hw, hw) and nt.mask.dtype == jnp.bool_

    print("KERNEL_OK")
</pallas_src>

<mosaic_0001>
module attributes {stable_mosaic.version = 11 : i64} {
  func.func @_mm_bias_relu_kernel(%arg0: i32, %arg1: i32, %arg2: memref<256x128xbf16, #tpu.memory_space<vmem>>, %arg3: memref<128x128xbf16, #tpu.memory_space<vmem>>, %arg4: memref<1x128xf32, #tpu.memory_space<vmem>>, %arg5: memref<256x128xbf16, #tpu.memory_space<vmem>>) attributes {dimension_semantics = [#tpu.dimension_semantics<parallel>, #tpu.dimension_semantics<parallel>], iteration_bounds = array<i64: 2, 1>, scalar_prefetch = 0 : i64, scratch_operands = 0 : i64, tpu.core_type = #tpu.core_type<tc>, window_params = [{transform_indices = @transform_0, window_bounds = array<i64: 256, 128>}, {transform_indices = @transform_1, window_bounds = array<i64: 128, 128>}, {transform_indices = @transform_2, window_bounds = array<i64: 1, 128>}, {transform_indices = @transform_3, window_bounds = array<i64: 256, 128>}]} {
    %c0 = arith.constant 0 : index
    %c0_0 = arith.constant 0 : index
    %0 = vector.load %arg2[%c0, %c0_0] : memref<256x128xbf16, #tpu.memory_space<vmem>>, vector<256x128xbf16>
    %c0_1 = arith.constant 0 : index
    %c0_2 = arith.constant 0 : index
    %1 = vector.load %arg3[%c0_1, %c0_2] : memref<128x128xbf16, #tpu.memory_space<vmem>>, vector<128x128xbf16>
    %cst = arith.constant dense<0.000000e+00> : vector<256x128xf32>
    %2 = tpu.matmul %0, %1, %cst {dimension_numbers = #tpu.dot_dimension_numbers<[1], [0], [0], [1], [0, 0, 1, 1], [], []>} : vector<256x128xbf16>, vector<128x128xbf16>, vector<256x128xf32> -> vector<256x128xf32>
    %c0_3 = arith.constant 0 : index
    %c0_4 = arith.constant 0 : index
    %3 = vector.load %arg4[%c0_3, %c0_4] : memref<1x128xf32, #tpu.memory_space<vmem>>, vector<1x128xf32>
    %4 = vector.broadcast %3 : vector<1x128xf32> to vector<256x128xf32>
    %5 = arith.addf %2, %4 : vector<256x128xf32>
    %cst_5 = arith.constant 0.000000e+00 : f32
    %6 = vector.broadcast %cst_5 : f32 to vector<256x128xf32>
    %7 = arith.maximumf %5, %6 : vector<256x128xf32>
    %8 = arith.truncf %7 : vector<256x128xf32> to vector<256x128xbf16>
    %c0_6 = arith.constant 0 : index
    %c0_7 = arith.constant 0 : index
    %9 = vector.load %arg5[%c0_6, %c0_7] : memref<256x128xbf16, #tpu.memory_space<vmem>>, vector<256x128xbf16>
    tpu.vector_store %arg5[%c0_6, %c0_7], %8 {strides = array<i32>} : memref<256x128xbf16, #tpu.memory_space<vmem>>, vector<256x128xbf16>,
    return
  }
  func.func @transform_0(%arg0: i32, %arg1: i32) -> (i32, i32) {
    %c0_i32 = arith.constant 0 : i32
    %c0_i32_0 = arith.constant 0 : i32
    return %arg0, %c0_i32 : i32, i32
  }
  func.func @transform_1(%arg0: i32, %arg1: i32) -> (i32, i32) {
    %c0_i32 = arith.constant 0 : i32
    %c0_i32_0 = arith.constant 0 : i32
    return %c0_i32, %arg1 : i32, i32
  }
  func.func @transform_2(%arg0: i32, %arg1: i32) -> (i32, i32) {
    %c0_i32 = arith.constant 0 : i32
    %c0_i32_0 = arith.constant 0 : i32
    return %c0_i32, %arg1 : i32, i32
  }
  func.func @transform_3(%arg0: i32, %arg1: i32) -> (i32, i32) {
    %c0_i32 = arith.constant 0 : i32
    return %arg0, %arg1 : i32, i32
  }
}

module attributes {stable_mosaic.version = 11 : i64} {
  func.func @_mm_bias_relu_kernel(%arg0: i32, %arg1: i32, %arg2: memref<64x288xbf16, #tpu.memory_space<vmem>>, %arg3: memref<288x128xbf16, #tpu.memory_space<vmem>>, %arg4: memref<1x128xf32, #tpu.memory_space<vmem>>, %arg5: memref<64x128xbf16, #tpu.memory_space<vmem>>) attributes {dimension_semantics = [#tpu.dimension_semantics<parallel>, #tpu.dimension_semantics<parallel>], iteration_bounds = array<i64: 2, 1>, scalar_prefetch = 0 : i64, scratch_operands = 0 : i64, tpu.core_type = #tpu.core_type<tc>, window_params = [{transform_indices = @transform_0, window_bounds = array<i64: 64, 288>}, {transform_indices = @transform_1, window_bounds = array<i64: 288, 128>}, {transform_indices = @transform_2, window_bounds = array<i64: 1, 128>}, {transform_indices = @transform_3, window_bounds = array<i64: 64, 128>}]} {
    %c0 = arith.constant 0 : index
    %c0_0 = arith.constant 0 : index
    %0 = vector.load %arg2[%c0, %c0_0] : memref<64x288xbf16, #tpu.memory_space<vmem>>, vector<64x288xbf16>
    %c0_1 = arith.constant 0 : index
    %c0_2 = arith.constant 0 : index
    %1 = vector.load %arg3[%c0_1, %c0_2] : memref<288x128xbf16, #tpu.memory_space<vmem>>, vector<288x128xbf16>
    %cst = arith.constant dense<0.000000e+00> : vector<64x128xf32>
    %2 = tpu.matmul %0, %1, %cst {dimension_numbers = #tpu.dot_dimension_numbers<[1], [0], [0], [1], [0, 0, 1, 1], [], []>} : vector<64x288xbf16>, vector<288x128xbf16>, vector<64x128xf32> -> vector<64x128xf32>
    %c0_3 = arith.constant 0 : index
    %c0_4 = arith.constant 0 : index
    %3 = vector.load %arg4[%c0_3, %c0_4] : memref<1x128xf32, #tpu.memory_space<vmem>>, vector<1x128xf32>
    %4 = vector.broadcast %3 : vector<1x128xf32> to vector<64x128xf32>
    %5 = arith.addf %2, %4 : vector<64x128xf32>
    %cst_5 = arith.constant 0.000000e+00 : f32
    %6 = vector.broadcast %cst_5 : f32 to vector<64x128xf32>
    %7 = arith.maximumf %5, %6 : vector<64x128xf32>
    %8 = arith.truncf %7 : vector<64x128xf32> to vector<64x128xbf16>
    %c0_6 = arith.constant 0 : index
    %c0_7 = arith.constant 0 : index
    %9 = vector.load %arg5[%c0_6, %c0_7] : memref<64x128xbf16, #tpu.memory_space<vmem>>, vector<64x128xbf16>
    tpu.vector_store %arg5[%c0_6, %c0_7], %8 {strides = array<i32>} : memref<64x128xbf16, #tpu.memory_space<vmem>>, vector<64x128xbf16>,
    return
  }
  func.func @transform_0(%arg0: i32, %arg1: i32) -> (i32, i32) {
    %c0_i32 = arith.constant 0 : i32
    %c0_i32_0 = arith.constant 0 : i32
    return %arg0, %c0_i32 : i32, i32
  }
  func.func @transform_1(%arg0: i32, %arg1: i32) -> (i32, i32) {
    %c0_i32 = arith.constant 0 : i32
    %c0_i32_0 = arith.constant 0 : i32
    return %c0_i32, %arg1 : i32, i32
  }
  func.func @transform_2(%arg0: i32, %arg1: i32) -> (i32, i32) {
    %c0_i32 = arith.constant 0 : i32
    %c0_i32_0 = arith.constant 0 : i32
    return %c0_i32, %arg1 : i32, i32
  }
  func.func @transform_3(%arg0: i32, %arg1: i32) -> (i32, i32) {
    %c0_i32 = arith.constant 0 : i32
    return %arg0, %arg1 : i32, i32
  }
}

module attributes {stable_mosaic.version = 11 : i64} {
  func.func @_mm_bias_relu_kernel(%arg0: i32, %arg1: i32, %arg2: memref<16x576xbf16, #tpu.memory_space<vmem>>, %arg3: memref<576x128xbf16, #tpu.memory_space<vmem>>, %arg4: memref<1x128xf32, #tpu.memory_space<vmem>>, %arg5: memref<16x128xbf16, #tpu.memory_space<vmem>>) attributes {dimension_semantics = [#tpu.dimension_semantics<parallel>, #tpu.dimension_semantics<parallel>], iteration_bounds = array<i64: 2, 1>, scalar_prefetch = 0 : i64, scratch_operands = 0 : i64, tpu.core_type = #tpu.core_type<tc>, window_params = [{transform_indices = @transform_0, window_bounds = array<i64: 16, 576>}, {transform_indices = @transform_1, window_bounds = array<i64: 576, 128>}, {transform_indices = @transform_2, window_bounds = array<i64: 1, 128>}, {transform_indices = @transform_3, window_bounds = array<i64: 16, 128>}]} {
    %c0 = arith.constant 0 : index
    %c0_0 = arith.constant 0 : index
    %0 = vector.load %arg2[%c0, %c0_0] : memref<16x576xbf16, #tpu.memory_space<vmem>>, vector<16x576xbf16>
    %c0_1 = arith.constant 0 : index
    %c0_2 = arith.constant 0 : index
    %1 = vector.load %arg3[%c0_1, %c0_2] : memref<576x128xbf16, #tpu.memory_space<vmem>>, vector<576x128xbf16>
    %cst = arith.constant dense<0.000000e+00> : vector<16x128xf32>
    %2 = tpu.matmul %0, %1, %cst {dimension_numbers = #tpu.dot_dimension_numbers<[1], [0], [0], [1], [0, 0, 1, 1], [], []>} : vector<16x576xbf16>, vector<576x128xbf16>, vector<16x128xf32> -> vector<16x128xf32>
    %c0_3 = arith.constant 0 : index
    %c0_4 = arith.constant 0 : index
    %3 = vector.load %arg4[%c0_3, %c0_4] : memref<1x128xf32, #tpu.memory_space<vmem>>, vector<1x128xf32>
    %4 = vector.broadcast %3 : vector<1x128xf32> to vector<16x128xf32>
    %5 = arith.addf %2, %4 : vector<16x128xf32>
    %cst_5 = arith.constant 0.000000e+00 : f32
    %6 = vector.broadcast %cst_5 : f32 to vector<16x128xf32>
    %7 = arith.maximumf %5, %6 : vector<16x128xf32>
    %8 = arith.truncf %7 : vector<16x128xf32> to vector<16x128xbf16>
    %c0_6 = arith.constant 0 : index
    %c0_7 = arith.constant 0 : index
    %9 = vector.load %arg5[%c0_6, %c0_7] : memref<16x128xbf16, #tpu.memory_space<vmem>>, vector<16x128xbf16>
    tpu.vector_store %arg5[%c0_6, %c0_7], %8 {strides = array<i32>} : memref<16x128xbf16, #tpu.memory_space<vmem>>, vector<16x128xbf16>,
    return
  }
  func.func @transform_0(%arg0: i32, %arg1: i32) -> (i32, i32) {
    %c0_i32 = arith.constant 0 : i32
    %c0_i32_0 = arith.constant 0 : i32
    return %arg0, %c0_i32 : i32, i32
  }
  func.func @transform_1(%arg0: i32, %arg1: i32) -> (i32, i32) {
    %c0_i32 = arith.constant 0 : i32
    %c0_i32_0 = arith.constant 0 : i32
    return %c0_i32, %arg1 : i32, i32
  }
  func.func @transform_2(%arg0: i32, %arg1: i32) -> (i32, i32) {
    %c0_i32 = arith.constant 0 : i32
    %c0_i32_0 = arith.constant 0 : i32
    return %c0_i32, %arg1 : i32, i32
  }
  func.func @transform_3(%arg0: i32, %arg1: i32) -> (i32, i32) {
    %c0_i32 = arith.constant 0 : i32
    return %arg0, %arg1 : i32, i32
  }
}

module attributes {stable_mosaic.version = 11 : i64} {
  func.func @_mm_bias_relu_kernel(%arg0: i32, %arg1: i32, %arg2: memref<8x1152xbf16, #tpu.memory_space<vmem>>, %arg3: memref<1152x128xbf16, #tpu.memory_space<vmem>>, %arg4: memref<1x128xf32, #tpu.memory_space<vmem>>, %arg5: memref<8x128xbf16, #tpu.memory_space<vmem>>) attributes {dimension_semantics = [#tpu.dimension_semantics<parallel>, #tpu.dimension_semantics<parallel>], iteration_bounds = array<i64: 1, 2>, scalar_prefetch = 0 : i64, scratch_operands = 0 : i64, tpu.core_type = #tpu.core_type<tc>, window_params = [{transform_indices = @transform_0, window_bounds = array<i64: 8, 1152>}, {transform_indices = @transform_1, window_bounds = array<i64: 1152, 128>}, {transform_indices = @transform_2, window_bounds = array<i64: 1, 128>}, {transform_indices = @transform_3, window_bounds = array<i64: 8, 128>}]} {
    %c0 = arith.constant 0 : index
    %c0_0 = arith.constant 0 : index
    %0 = vector.load %arg2[%c0, %c0_0] : memref<8x1152xbf16, #tpu.memory_space<vmem>>, vector<8x1152xbf16>
    %c0_1 = arith.constant 0 : index
    %c0_2 = arith.constant 0 : index
    %1 = vector.load %arg3[%c0_1, %c0_2] : memref<1152x128xbf16, #tpu.memory_space<vmem>>, vector<1152x128xbf16>
    %cst = arith.constant dense<0.000000e+00> : vector<8x128xf32>
    %2 = tpu.matmul %0, %1, %cst {dimension_numbers = #tpu.dot_dimension_numbers<[1], [0], [0], [1], [0, 0, 1, 1], [], []>} : vector<8x1152xbf16>, vector<1152x128xbf16>, vector<8x128xf32> -> vector<8x128xf32>
    %c0_3 = arith.constant 0 : index
    %c0_4 = arith.constant 0 : index
    %3 = vector.load %arg4[%c0_3, %c0_4] : memref<1x128xf32, #tpu.memory_space<vmem>>, vector<1x128xf32>
    %4 = vector.broadcast %3 : vector<1x128xf32> to vector<8x128xf32>
    %5 = arith.addf %2, %4 : vector<8x128xf32>
    %cst_5 = arith.constant 0.000000e+00 : f32
    %6 = vector.broadcast %cst_5 : f32 to vector<8x128xf32>
    %7 = arith.maximumf %5, %6 : vector<8x128xf32>
    %8 = arith.truncf %7 : vector<8x128xf32> to vector<8x128xbf16>
    %c0_6 = arith.constant 0 : index
    %c0_7 = arith.constant 0 : index
    %9 = vector.load %arg5[%c0_6, %c0_7] : memref<8x128xbf16, #tpu.memory_space<vmem>>, vector<8x128xbf16>
    tpu.vector_store %arg5[%c0_6, %c0_7], %8 {strides = array<i32>} : memref<8x128xbf16, #tpu.memory_space<vmem>>, vector<8x128xbf16>,
    return
  }
  func.func @transform_0(%arg0: i32, %arg1: i32) -> (i32, i32) {
    %c0_i32 = arith.constant 0 : i32
    %c0_i32_0 = arith.constant 0 : i32
    return %arg0, %c0_i32 : i32, i32
  }
  func.func @transform_1(%arg0: i32, %arg1: i32) -> (i32, i32) {
    %c0_i32 = arith.constant 0 : i32
    %c0_i32_0 = arith.constant 0 : i32
    return %c0_i32, %arg1 : i32, i32
  }
  func.func @transform_2(%arg0: i32, %arg1: i32) -> (i32, i32) {
    %c0_i32 = arith.constant 0 : i32
    %c0_i32_0 = arith.constant 0 : i32
    return %c0_i32, %arg1 : i32, i32
  }
  func.func @transform_3(%arg0: i32, %arg1: i32) -> (i32, i32) {
    %c0_i32 = arith.constant 0 : i32
    return %arg0, %arg1 : i32, i32
  }
}

</mosaic_0001>

<llo_original>
// kernel: backbone_base_forward.4
$region0: #{backbone_base_forward.4}
  #allocation0 [shape = 'u32[]', space=smem, size = 0x4, offset = 0x4, fixed_abs, tag = 'smem constant byte address 0x4 - core index']
  #allocation1 [shape = 'u32[144,128]{1,0:T(1,128)}', space=vmem, size = 0x12000, scoped, tag = 'internal scratch']
  %s0 = inlined_call_operand.vmem [shape: bf16[512,128], index: 0, kind: input, shape index: {}]
  %s1 = inlined_call_operand.vmem [shape: bf16[128,128], index: 1, kind: input, shape index: {}]
  %s2 = inlined_call_operand.vmem [shape: f32[1,128], index: 2, kind: input, shape index: {}]
  %s3 = inlined_call_operand.vmem [shape: bf16[512,128], index: 3, kind: output, shape index: {}]
  %s4 = sld [smem:[#allocation0]]
  $region45: #{backbone_base_forward.4} parent=0
    _
  %s6 = ssub.s32 1, %s4
  %s7 = scalar_select 0, %s6, %s4
  loop: start=0, step=1, limit=4
  $region2: #{backbone_base_forward.4} parent=0 // loop_pre_header
    _
  $region3: #{backbone_base_forward.4} parent=0 // loop_header
    %s9 = sphi 0, %s13
    %p10 = scmp.ge.s32.totalorder %s9, 4
    %s16 = sphi 0, %s28
    %s17 = sphi 0, %s24
    %s18 = sphi 0, %s16
    %s19 = sphi 0, %s17
    %s20 = sphi 0, %s18
    %s21 = sphi 0, %s19
    %s31 = sphi 0, %s33
    %s34 = sphi 0, %s31
    %s35 = sphi 0, %s34
    %s51 = sphi 0, %s35
    %s57 = sphi 0, %s59
    %s60 = sphi 0, %s57
    %s61 = sphi 0, %s60
    %s77 = sphi 0, %s61
    %s83 = sphi 0, %s85
    %s86 = sphi 0, %s83
    %s87 = sphi 0, %s86
    %s103 = sphi 0, %s87
    %s111 = sphi 0, %s113
    %s114 = sphi 0, %s111
    %s115 = sphi 0, %s114
    %s131 = sphi 0, %s115
  $region4: #{backbone_base_forward.4} parent=0 // loop_header_branch
    %12 = sbr.rel (%p10) target = $region8
  $region5: #{backbone_base_forward.4} parent=0 // loop_body
    %s14 = ssub.s32 %s9, 1
    %s15 = ssub.s32 %s9, 2
    %s22 = sadd.s32 1, %s17
    %p23 = scmp.ge.s32.totalorder %s22, 1
    %s24 = scalar_select %p23, 0, %s22
    %s25 = sadd.s32 1, %s16
    %s26 = scalar_select %p23, %s25, %s16
    %p27 = scmp.ge.s32.totalorder %s26, 2
    %s28 = scalar_select %p27, 0, %s26
    %s29 = ssub.s32 %s16, %s28
    %p30 = scmp.eq.s32.totalorder %s29, 0
    %s32 = sadd.s32 %s31, 1
    %s33 = scalar_select %p30, %s31, %s32
    %p36 = pneg %p30
    %p37 = scmp.eq.s32.totalorder %s9, 1
    %p38 = por %p36, %p37
    %p39 = scmp.ne.s32.totalorder %s31, %s34
    %p40 = scmp.eq.s32.totalorder %s9, 0
    %p41 = por %p39, %p40
    %p42 = scmp.ne.s32.totalorder %s31, %s34
    %p43 = scmp.eq.s32.totalorder %s14, 1
    %p44 = por %p42, %p43
    %p45 = scmp.ne.s32.totalorder %s34, %s35
    %p46 = scmp.eq.s32.totalorder %s14, 0
    %p47 = por %p45, %p46
    %p48 = scmp.ne.s32.totalorder %s34, %s35
    %p49 = scmp.eq.s32.totalorder %s15, 1
    %p50 = por %p48, %p49
    %p52 = scmp.ne.s32.totalorder %s35, %s51
    %p53 = scmp.eq.s32.totalorder %s15, 0
    %p54 = por %p52, %p53
    %s55 = ssub.s32 %s17, %s24
    %p56 = scmp.eq.s32.totalorder %s55, 0
    %s58 = sadd.s32 %s57, 1
    %s59 = scalar_select %p56, %s57, %s58
    %p62 = pneg %p56
    %p63 = scmp.eq.s32.totalorder %s9, 1
    %p64 = por %p62, %p63
    %p65 = scmp.ne.s32.totalorder %s57, %s60
    %p66 = scmp.eq.s32.totalorder %s9, 0
    %p67 = por %p65, %p66
    %p68 = scmp.ne.s32.totalorder %s57, %s60
    %p69 = scmp.eq.s32.totalorder %s14, 1
    %p70 = por %p68, %p69
    %p71 = scmp.ne.s32.totalorder %s60, %s61
    %p72 = scmp.eq.s32.totalorder %s14, 0
    %p73 = por %p71, %p72
    %p74 = scmp.ne.s32.totalorder %s60, %s61
    %p75 = scmp.eq.s32.totalorder %s15, 1
    %p76 = por %p74, %p75
    %p78 = scmp.ne.s32.totalorder %s61, %s77
    %p79 = scmp.eq.s32.totalorder %s15, 0
    %p80 = por %p78, %p79
    %s81 = ssub.s32 %s17, %s24
    %p82 = scmp.eq.s32.totalorder %s81, 0
    %s84 = sadd.s32 %s83, 1
    %s85 = scalar_select %p82, %s83, %s84
    %p88 = pneg %p82
    %p89 = scmp.eq.s32.totalorder %s9, 1
    %p90 = por %p88, %p89
    %p91 = scmp.ne.s32.totalorder %s83, %s86
    %p92 = scmp.eq.s32.totalorder %s9, 0
    %p93 = por %p91, %p92
    %p94 = scmp.ne.s32.totalorder %s83, %s86
    %p95 = scmp.eq.s32.totalorder %s14, 1
    %p96 = por %p94, %p95
    %p97 = scmp.ne.s32.totalorder %s86, %s87
    %p98 = scmp.eq.s32.totalorder %s14, 0
    %p99 = por %p97, %p98
    %p100 = scmp.ne.s32.totalorder %s86, %s87
    %p101 = scmp.eq.s32.totalorder %s15, 1
    %p102 = por %p100, %p101
    %p104 = scmp.ne.s32.totalorder %s87, %s103
    %p105 = scmp.eq.s32.totalorder %s15, 0
    %p106 = por %p104, %p105
    %s107 = ssub.s32 %s16, %s28
    %s108 = ssub.s32 %s17, %s24
    %s109 = sor.u32 %s107, %s108
    %p110 = scmp.eq.s32.totalorder %s109, 0
    %s112 = sadd.s32 %s111, 1
    %s113 = scalar_select %p110, %s111, %s112
    %p116 = pneg %p110
    %p117 = scmp.eq.s32.totalorder %s9, 1
    %p118 = por %p116, %p117
    %p119 = scmp.ne.s32.totalorder %s111, %s114
    %p120 = scmp.eq.s32.totalorder %s9, 0
    %p121 = por %p119, %p120
    %p122 = scmp.ne.s32.totalorder %s111, %s114
    %p123 = scmp.eq.s32.totalorder %s14, 1
    %p124 = por %p122, %p123
    %p125 = scmp.ne.s32.totalorder %s114, %s115
    %p126 = scmp.eq.s32.totalorder %s14, 0
    %p127 = por %p125, %p126
    %p128 = scmp.ne.s32.totalorder %s114, %s115
    %p129 = scmp.eq.s32.totalorder %s15, 1
    %p130 = por %p128, %p129
    %p132 = scmp.ne.s32.totalorder %s115, %s131
    %p133 = scmp.eq.s32.totalorder %s15, 0
    %p134 = por %p132, %p133
    %p135 = scmp.le.s32.totalorder 1, %s9
    %p136 = scmp.lt.s32.totalorder %s9, 3
    %p137 = pnand %p135, %p136
    %p138 = pneg %p137
    // Predicated region
    $region9: #{backbone_base_forward.4} parent=5 // pred_check
      _
    $region10: #{backbone_base_forward.4} parent=5 // pred_check_branch
      %140 = sbr.rel (%p137) target = $region12
    $region11: #{backbone_base_forward.4} parent=5 // pred_region
      %s141 = ssub.s32 %s9, 1
      // Predicated region
      $region13: #{backbone_base_forward.4} parent=11 // pred_check
        %p142 = pneg %p73
      $region14: #{backbone_base_forward.4} parent=11 // pred_check_branch
        %144 = sbr.rel (%p142) target = $region16
      $region15: #{backbone_base_forward.4} parent=11 // pred_region
        %p145 = scmp.lt.s32.totalorder %s19, 0
        %s146 = scalar_select %p145, %s19, 0
        %s147 = smul.addr %s146, 4
        %s148 = scalar_lea.vmem %s1, %s147
      $region16: #{backbone_base_forward.4} parent=11 // pred_fallthru
        _
      // Predicated region
      $region17: #{backbone_base_forward.4} parent=11 // pred_check
        %p149 = pneg %p99
      $region18: #{backbone_base_forward.4} parent=11 // pred_check_branch
        %151 = sbr.rel (%p149) target = $region20
      $region19: #{backbone_base_forward.4} parent=11 // pred_region
        %p152 = scmp.lt.s32.totalorder %s19, 0
        %s153 = scalar_select %p152, %s19, 0
        %s154 = scalar_lea.vmem %s2, %s153
      $region20: #{backbone_base_forward.4} parent=11 // pred_fallthru
        _
    $region12: #{backbone_base_forward.4} parent=5 // pred_fallthru
      _
    %p155 = scmp.lt.s32.totalorder %s9, 2
    // Predicated region
    $region21: #{backbone_base_forward.4} parent=5 // pred_check
      %p156 = pneg %p155
    $region22: #{backbone_base_forward.4} parent=5 // pred_check_branch
      %158 = sbr.rel (%p156) target = $region24
    $region23: #{backbone_base_forward.4} parent=5 // pred_region
      // Predicated region
      $region25: #{backbone_base_forward.4} parent=23 // pred_check
        %p159 = pneg %p41
      $region26: #{backbone_base_forward.4} parent=23 // pred_check_branch
        %161 = sbr.rel (%p159) target = $region28
      $region27: #{backbone_base_forward.4} parent=23 // pred_region
        %s162 = smul.u32 32, %s16
        %p163 = scmp.lt.s32.totalorder %s162, 63
        %s164 = scalar_select %p163, %s162, 63
        %s165 = smul.addr %s164, 4
        %s166 = scalar_lea.vmem %s0, %s165
        %s167 = smul.u32 32, %s16
      $region28: #{backbone_base_forward.4} parent=23 // pred_fallthru
        _
    $region24: #{backbone_base_forward.4} parent=5 // pred_fallthru
      _
    %p168 = scmp.le.s32.totalorder 1, %s9
    %p169 = scmp.lt.s32.totalorder %s9, 3
    %p170 = pnand %p168, %p169
    %p171 = pneg %p170
    // Predicated region
    $region29: #{backbone_base_forward.4} parent=5 // pred_check
      _
    $region30: #{backbone_base_forward.4} parent=5 // pred_check_branch
      %173 = sbr.rel (%p170) target = $region32
    $region31: #{backbone_base_forward.4} parent=5 // pred_region
      %s174 = ssub.s32 %s9, 1
      %s175 = smul.u32 32, %s18
      %p176 = scmp.lt.s32.totalorder %s175, 63
      %s177 = scalar_select %p176, %s175, 63
      %s178 = smul.addr %s177, 4
      %s179 = scalar_lea.vmem %s0, %s178
      %p180 = pneg %p47
      %p181 = pneg %p44
      %p182 = scmp.lt.s32.totalorder %s19, 0
      %s183 = scalar_select %p182, %s19, 0
      %s184 = smul.addr %s183, 4
      %s185 = scalar_lea.vmem %s1, %s184
      %p186 = pneg %p73
      %p187 = pneg %p70
      %p188 = scmp.lt.s32.totalorder %s19, 0
      %s189 = scalar_select %p188, %s19, 0
      %s190 = scalar_lea.vmem %s2, %s189
      %p191 = pneg %p99
      %p192 = pneg %p96
      %p193 = pneg %p127
      %p194 = pneg %p124
      %s195 = smul.u32 32, %s18
      %p196 = scmp.lt.s32.totalorder %s195, 63
      %s197 = scalar_select %p196, %s195, 63
      %p198 = scmp.lt.s32.totalorder %s19, 0
      %s199 = scalar_select %p198, %s19, 0
      %s200 = sadd.s32 %s199, %s197
      %s201 = smul.addr %s200, 4
      %s202 = scalar_lea.vmem %s3, %s201
      %s203 = smul.u32 32, %s18
      %p204 = scmp.lt.s32.totalorder %s203, 63
      %s205 = scalar_select %p204, %s203, 63
      %s206 = smul.addr %s205, 4
      %s207 = scalar_lea.vmem %s0, %s206
      %s208 = smul.u32 32, %s18
      %p209 = scmp.lt.s32.totalorder %s19, 0
      %s210 = scalar_select %p209, %s19, 0
      %s211 = smul.addr %s210, 4
      %s212 = scalar_lea.vmem %s1, %s211
      %p213 = scmp.lt.s32.totalorder %s19, 0
      %s214 = scalar_select %p213, %s19, 0
      %s215 = scalar_lea.vmem %s2, %s214
      %s216 = smul.u32 32, %s18
      %p217 = scmp.lt.s32.totalorder %s216, 63
      %s218 = scalar_select %p217, %s216, 63
      %p219 = scmp.lt.s32.totalorder %s19, 0
      %s220 = scalar_select %p219, %s19, 0
      %s221 = sadd.s32 %s220, %s218
      %s222 = smul.addr %s221, 4
      %s223 = scalar_lea.vmem %s3, %s222
      %s224 = smul.u32 32, %s18
      %v226 = vld [vmem:[%s207] sm:$0xf]
      %v227 = vld [vmem:[%s207 + $0x4] sm:$0xf]
      %v228 = vld [vmem:[%s207 + $0x8] sm:$0xf]
      %v229 = vld [vmem:[%s207 + $0xc] sm:$0xf]
      %v230 = vld [vmem:[%s207 + $0x10] sm:$0xf]
      %v231 = vld [vmem:[%s207 + $0x14] sm:$0xf]
      %v232 = vld [vmem:[%s207 + $0x18] sm:$0xf]
      %v233 = vld [vmem:[%s207 + $0x1c] sm:$0xf]
      %v234 = vld [vmem:[%s207 + $0x20] sm:$0xf]
      %v235 = vld [vmem:[%s207 + $0x24] sm:$0xf]
      %v236 = vld [vmem:[%s207 + $0x28] sm:$0xf]
      %v237 = vld [vmem:[%s207 + $0x2c] sm:$0xf]
      %v238 = vld [vmem:[%s207 + $0x30] sm:$0xf]
      %v239 = vld [vmem:[%s207 + $0x34] sm:$0xf]
      %v240 = vld [vmem:[%s207 + $0x38] sm:$0xf]
      %v241 = vld [vmem:[%s207 + $0x3c] sm:$0xf]
      %v242 = vld [vmem:[%s207 + $0x40] sm:$0xf]
      %v243 = vld [vmem:[%s207 + $0x44] sm:$0xf]
      %v244 = vld [vmem:[%s207 + $0x48] sm:$0xf]
      %v245 = vld [vmem:[%s207 + $0x4c] sm:$0xf]
      %v246 = vld [vmem:[%s207 + $0x50] sm:$0xf]
      %v247 = vld [vmem:[%s207 + $0x54] sm:$0xf]
      %v248 = vld [vmem:[%s207 + $0x58] sm:$0xf]
      %v249 = vld [vmem:[%s207 + $0x5c] sm:$0xf]
      %v250 = vld [vmem:[%s207 + $0x60] sm:$0xf]
      %v251 = vld [vmem:[%s207 + $0x64] sm:$0xf]
      %v252 = vld [vmem:[%s207 + $0x68] sm:$0xf]
      %v253 = vld [vmem:[%s207 + $0x6c] sm:$0xf]
      %v254 = vld [vmem:[%s207 + $0x70] sm:$0xf]
      %v255 = vld [vmem:[%s207 + $0x74] sm:$0xf]
      %v256 = vld [vmem:[%s207 + $0x78] sm:$0xf]
      %v257 = vld [vmem:[%s207 + $0x7c] sm:$0xf]
      %v258 = vld [vmem:[%s212] sm:$0xf]
      %v259 = vld [vmem:[%s212 + $0x4] sm:$0xf]
      %v260 = vld [vmem:[%s212 + $0x8] sm:$0xf]
      %v261 = vld [vmem:[%s212 + $0xc] sm:$0xf]
      %v262 = vld [vmem:[%s212 + $0x10] sm:$0xf]
      %v263 = vld [vmem:[%s212 + $0x14] sm:$0xf]
      %v264 = vld [vmem:[%s212 + $0x18] sm:$0xf]
      %v265 = vld [vmem:[%s212 + $0x1c] sm:$0xf]
      %v266 = vld [vmem:[%s212 + $0x20] sm:$0xf]
      %v267 = vld [vmem:[%s212 + $0x24] sm:$0xf]
      %v268 = vld [vmem:[%s212 + $0x28] sm:$0xf]
      %v269 = vld [vmem:[%s212 + $0x2c] sm:$0xf]
      %v270 = vld [vmem:[%s212 + $0x30] sm:$0xf]
      %v271 = vld [vmem:[%s212 + $0x34] sm:$0xf]
      %v272 = vld [vmem:[%s212 + $0x38] sm:$0xf]
      %v273 = vld [vmem:[%s212 + $0x3c] sm:$0xf]
      %v274 = vld [vmem:[%s215] sm:$0x1]
      %v276 = vlaneseq
      %v277 = vshrl.u32 %v276, 7
      %v278 = vsub.s32 0, %v277
      %v279 = vrot.slane %v274, %v278
      %v313 = vunpack.c.l.b16 %v226
      %v314 = vunpack.c.l.b16 %v227
      %v315 = vunpack.c.l.b16 %v228
      %v316 = vunpack.c.l.b16 %v229
      %v317 = vunpack.c.l.b16 %v230
      %v318 = vunpack.c.l.b16 %v231
      %v319 = vunpack.c.l.b16 %v232
      %v320 = vunpack.c.l.b16 %v233
      %v321 = vunpack.c.l.b16 %v234
      %v322 = vunpack.c.l.b16 %v235
      %v323 = vunpack.c.l.b16 %v236
      %v324 = vunpack.c.l.b16 %v237
      %v325 = vunpack.c.l.b16 %v238
      %v326 = vunpack.c.l.b16 %v239
      %v327 = vunpack.c.l.b16 %v240
      %v328 = vunpack.c.l.b16 %v241
      %v329 = vunpack.c.l.b16 %v242
      %v330 = vunpack.c.l.b16 %v243
      %v331 = vunpack.c.l.b16 %v244
      %v332 = vunpack.c.l.b16 %v245
      %v333 = vunpack.c.l.b16 %v246
      %v334 = vunpack.c.l.b16 %v247
      %v335 = vunpack.c.l.b16 %v248
      %v336 = vunpack.c.l.b16 %v249
      %v337 = vunpack.c.l.b16 %v250
      %v338 = vunpack.c.l.b16 %v251
      %v339 = vunpack.c.l.b16 %v252
      %v340 = vunpack.c.l.b16 %v253
      %v341 = vunpack.c.l.b16 %v254
      %v342 = vunpack.c.l.b16 %v255
      %v343 = vunpack.c.l.b16 %v256
      %v344 = vunpack.c.l.b16 %v257
      %v345 = vpack.c.b16 %v314, %v313
      %v346 = vpack.c.b16 %v316, %v315
      %v347 = vpack.c.b16 %v318, %v317
      %v348 = vpack.c.b16 %v320, %v319
      %v349 = vpack.c.b16 %v322, %v321
      %v350 = vpack.c.b16 %v324, %v323
      %v351 = vpack.c.b16 %v326, %v325
      %v352 = vpack.c.b16 %v328, %v327
      %v353 = vpack.c.b16 %v330, %v329
      %v354 = vpack.c.b16 %v332, %v331
      %v355 = vpack.c.b16 %v334, %v333
      %v356 = vpack.c.b16 %v336, %v335
      %v357 = vpack.c.b16 %v338, %v337
      %v358 = vpack.c.b16 %v340, %v339
      %v359 = vpack.c.b16 %v342, %v341
      %v360 = vpack.c.b16 %v344, %v343
      %v393 = vunpack.c.l.b16 %v258
      %v394 = vunpack.c.l.b16 %v259
      %v395 = vunpack.c.l.b16 %v260
      %v396 = vunpack.c.l.b16 %v261
      %v397 = vunpack.c.l.b16 %v262
      %v398 = vunpack.c.l.b16 %v263
      %v399 = vunpack.c.l.b16 %v264
      %v400 = vunpack.c.l.b16 %v265
      %v401 = vunpack.c.l.b16 %v266
      %v402 = vunpack.c.l.b16 %v267
      %v403 = vunpack.c.l.b16 %v268
      %v404 = vunpack.c.l.b16 %v269
      %v405 = vunpack.c.l.b16 %v270
      %v406 = vunpack.c.l.b16 %v271
      %v407 = vunpack.c.l.b16 %v272
      %v408 = vunpack.c.l.b16 %v273
      %v409 = vpack.c.b16 %v394, %v393
      %v410 = vpack.c.b16 %v396, %v395
      %v411 = vpack.c.b16 %v398, %v397
      %v412 = vpack.c.b16 %v400, %v399
      %v413 = vpack.c.b16 %v402, %v401
      %v414 = vpack.c.b16 %v404, %v403
      %v415 = vpack.c.b16 %v406, %v405
      %v416 = vpack.c.b16 %v408, %v407
      %425 = vmatprep.subr.bf16.mxu0 0
      %426 = vmatpush1.bf16.msra.mxu0 %v409
      %427 = vmatprep.subr.bf16.mxu0 0
      %428 = vmatpush1.bf16.msra.mxu0 %v410
      %429 = vmatprep.subr.bf16.mxu0 0
      %430 = vmatpush1.bf16.msra.mxu0 %v411
      %431 = vmatprep.subr.bf16.mxu0 0
      %432 = vmatpush1.bf16.msra.mxu0 %v412
      %433 = vmatprep.subr.bf16.mxu0 0
      %434 = vmatpush1.bf16.msra.mxu0 %v413
      %435 = vmatprep.subr.bf16.mxu0 0
      %436 = vmatpush1.bf16.msra.mxu0 %v414
      %437 = vmatprep.subr.bf16.mxu0 0
      %438 = vmatpush1.bf16.msra.mxu0 %v415
      %439 = vmatprep.subr.bf16.mxu0 0
      %440 = vmatpush1.bf16.msra.mxu0 %v416
      %441 = vmatprep.subr.bf16.mxu0 0
      %442 = vmatpush1.bf16.msra.mxu0 0
      %443 = vmatprep.subr.bf16.mxu0 0
      %444 = vmatpush1.bf16.msra.mxu0 0
      %445 = vmatprep.subr.bf16.mxu0 0
      %446 = vmatpush1.bf16.msra.mxu0 0
      %447 = vmatprep.subr.bf16.mxu0 0
      %448 = vmatpush1.bf16.msra.mxu0 0
      %449 = vmatprep.subr.bf16.mxu0 0
      %450 = vmatpush1.bf16.msra.mxu0 0
      %451 = vmatprep.subr.bf16.mxu0 0
      %452 = vmatpush1.bf16.msra.mxu0 0
      %453 = vmatprep.subr.bf16.mxu0 0
      %454 = vmatpush1.bf16.msra.mxu0 0
      %455 = vmatprep.subr.bf16.mxu0 0
      %456 = vmatpush1.bf16.msra.mxu0 0
      %457 = vmatprep.mubr.bf16.mxu0 0
      %458 = vmatmul.mubr.bf16.gmra.mrb[0].mxu0 %v345
      %v459 = vpop.f32.mrb[0].mxu0
      %v460 = vadd.f32 %v279, %v459
      %v461 = vpop.f32.mrb[0].mxu0
      %v462 = vpop.f32.mrb[0].mxu0
      %v463 = vadd.f32 %v279, %v462
      %v464 = vpop.f32.mrb[0].mxu0
      %465 = vmatprep.mubr.bf16.mxu0 0
      %466 = vmatmul.mubr.bf16.gmra.mrb[0].mxu0 %v346
      %v467 = vpop.f32.mrb[0].mxu0
      %v468 = vadd.f32 %v279, %v467
      %v469 = vpop.f32.mrb[0].mxu0
      %v470 = vpop.f32.mrb[0].mxu0
      %v471 = vadd.f32 %v279, %v470
      %v472 = vpop.f32.mrb[0].mxu0
      %473 = vmatprep.mubr.bf16.mxu0 0
      %474 = vmatmul.mubr.bf16.gmra.mrb[0].mxu0 %v347
      %v475 = vpop.f32.mrb[0].mxu0
      %v476 = vadd.f32 %v279, %v475
      %v477 = vpop.f32.mrb[0].mxu0
      %v478 = vpop.f32.mrb[0].mxu0
      %v479 = vadd.f32 %v279, %v478
      %v480 = vpop.f32.mrb[0].mxu0
      %481 = vmatprep.mubr.bf16.mxu0 0
      %482 = vmatmul.mubr.bf16.gmra.mrb[0].mxu0 %v348
      %v483 = vpop.f32.mrb[0].mxu0
      %v484 = vadd.f32 %v279, %v483
      %v485 = vpop.f32.mrb[0].mxu0
      %v486 = vpop.f32.mrb[0].mxu0
      %v487 = vadd.f32 %v279, %v486
      %v488 = vpop.f32.mrb[0].mxu0
      %489 = vmatprep.mubr.bf16.mxu0 0
      %490 = vmatmul.mubr.bf16.gmra.mrb[0].mxu0 %v349
      %v491 = vpop.f32.mrb[0].mxu0
      %v492 = vadd.f32 %v279, %v491
      %v493 = vpop.f32.mrb[0].mxu0
      %v494 = vpop.f32.mrb[0].mxu0
      %v495 = vadd.f32 %v279, %v494
      %v496 = vpop.f32.mrb[0].mxu0
      %497 = vmatprep.mubr.bf16.mxu0 0
      %498 = vmatmul.mubr.bf16.gmra.mrb[0].mxu0 %v350
      %v499 = vpop.f32.mrb[0].mxu0
      %v500 = vadd.f32 %v279, %v499
      %v501 = vpop.f32.mrb[0].mxu0
      %v502 = vpop.f32.mrb[0].mxu0
      %v503 = vadd.f32 %v279, %v502
      %v504 = vpop.f32.mrb[0].mxu0
      %505 = vmatprep.mubr.bf16.mxu0 0
      %506 = vmatmul.mubr.bf16.gmra.mrb[0].mxu0 %v351
      %v507 = vpop.f32.mrb[0].mxu0
      %v508 = vadd.f32 %v279, %v507
      %v509 = vpop.f32.mrb[0].mxu0
      %v510 = vpop.f32.mrb[0].mxu0
      %v511 = vadd.f32 %v279, %v510
      %v512 = vpop.f32.mrb[0].mxu0
      %513 = vmatprep.mubr.bf16.mxu0 0
      %514 = vmatmul.mubr.bf16.gmra.mrb[0].mxu0 %v352
      %v515 = vpop.f32.mrb[0].mxu0
      %v516 = vadd.f32 %v279, %v515
      %v517 = vpop.f32.mrb[0].mxu0
      %v518 = vpop.f32.mrb[0].mxu0
      %v519 = vadd.f32 %v279, %v518
      %v520 = vpop.f32.mrb[0].mxu0
      %521 = vmatprep.mubr.bf16.mxu0 0
      %522 = vmatmul.mubr.bf16.gmra.mrb[0].mxu0 %v353
      %v523 = vpop.f32.mrb[0].mxu0
      %v524 = vadd.f32 %v279, %v523
      %v525 = vpop.f32.mrb[0].mxu0
      %v526 = vpop.f32.mrb[0].mxu0
      %v527 = vadd.f32 %v279, %v526
      %v528 = vpop.f32.mrb[0].mxu0
      %529 = vmatprep.mubr.bf16.mxu0 0
      %530 = vmatmul.mubr.bf16.gmra.mrb[0].mxu0 %v354
      %v531 = vpop.f32.mrb[0].mxu0
      %v532 = vadd.f32 %v279, %v531
      %v533 = vpop.f32.mrb[0].mxu0
      %v534 = vpop.f32.mrb[0].mxu0
      %v535 = vadd.f32 %v279, %v534
      %v536 = vpop.f32.mrb[0].mxu0
      %537 = vmatprep.mubr.bf16.mxu0 0
      %538 = vmatmul.mubr.bf16.gmra.mrb[0].mxu0 %v355
      %v539 = vpop.f32.mrb[0].mxu0
      %v540 = vadd.f32 %v279, %v539
      %v541 = vpop.f32.mrb[0].mxu0
      %v542 = vpop.f32.mrb[0].mxu0
      %v543 = vadd.f32 %v279, %v542
      %v544 = vpop.f32.mrb[0].mxu0
      %545 = vmatprep.mubr.bf16.mxu0 0
      %546 = vmatmul.mubr.bf16.gmra.mrb[0].mxu0 %v356
      %v547 = vpop.f32.mrb[0].mxu0
      %v548 = vadd.f32 %v279, %v547
      %v549 = vpop.f32.mrb[0].mxu0
      %v550 = vpop.f32.mrb[0].mxu0
      %v551 = vadd.f32 %v279, %v550
      %v552 = vpop.f32.mrb[0].mxu0
      %553 = vmatprep.mubr.bf16.mxu0 0
      %554 = vmatmul.mubr.bf16.gmra.mrb[0].mxu0 %v357
      %v555 = vpop.f32.mrb[0].mxu0
      %v556 = vadd.f32 %v279, %v555
      %v557 = vpop.f32.mrb[0].mxu0
      %v558 = vpop.f32.mrb[0].mxu0
      %v559 = vadd.f32 %v279, %v558
      %v560 = vpop.f32.mrb[0].mxu0
      %561 = vmatprep.mubr.bf16.mxu0 0
      %562 = vmatmul.mubr.bf16.gmra.mrb[0].mxu0 %v358
      %v563 = vpop.f32.mrb[0].mxu0
      %v564 = vadd.f32 %v279, %v563
      %v565 = vpop.f32.mrb[0].mxu0
      %v566 = vpop.f32.mrb[0].mxu0
      %v567 = vadd.f32 %v279, %v566
      %v568 = vpop.f32.mrb[0].mxu0
      %569 = vmatprep.mubr.bf16.mxu0 0
      %570 = vmatmul.mubr.bf16.gmra.mrb[0].mxu0 %v359
      %v571 = vpop.f32.mrb[0].mxu0
      %v572 = vadd.f32 %v279, %v571
      %v573 = vpop.f32.mrb[0].mxu0
      %v574 = vpop.f32.mrb[0].mxu0
      %v575 = vadd.f32 %v279, %v574
      %v576 = vpop.f32.mrb[0].mxu0
      %577 = vmatprep.mubr.bf16.mxu0 0
      %578 = vmatmul.mubr.bf16.gmra.mrb[0].mxu0 %v360
      %v579 = vpop.f32.mrb[0].mxu0
      %v580 = vadd.f32 %v279, %v579
      %v581 = vpop.f32.mrb[0].mxu0
      %v582 = vpop.f32.mrb[0].mxu0
      %v583 = vadd.f32 %v279, %v582
      %v584 = vpop.f32.mrb[0].mxu0
      %585 = vdwg.mxu0
      %v586 = vmax.f32 %v460, 0.0
      %v587 = vmax.f32 %v463, 0.0
      %v588 = vmax.f32 %v468, 0.0
      %v589 = vmax.f32 %v471, 0.0
      %v590 = vmax.f32 %v476, 0.0
      %v591 = vmax.f32 %v479, 0.0
      %v592 = vmax.f32 %v484, 0.0
      %v593 = vmax.f32 %v487, 0.0
      %v594 = vmax.f32 %v492, 0.0
      %v595 = vmax.f32 %v495, 0.0
      %v596 = vmax.f32 %v500, 0.0
      %v597 = vmax.f32 %v503, 0.0
      %v598 = vmax.f32 %v508, 0.0
      %v599 = vmax.f32 %v511, 0.0
      %v600 = vmax.f32 %v516, 0.0
      %v601 = vmax.f32 %v519, 0.0
      %v602 = vmax.f32 %v524, 0.0
      %v603 = vmax.f32 %v527, 0.0
      %v604 = vmax.f32 %v532, 0.0
      %v605 = vmax.f32 %v535, 0.0
      %v606 = vmax.f32 %v540, 0.0
      %v607 = vmax.f32 %v543, 0.0
      %v608 = vmax.f32 %v548, 0.0
      %v609 = vmax.f32 %v551, 0.0
      %v610 = vmax.f32 %v556, 0.0
      %v611 = vmax.f32 %v559, 0.0
      %v612 = vmax.f32 %v564, 0.0
      %v613 = vmax.f32 %v567, 0.0
      %v614 = vmax.f32 %v572, 0.0
      %v615 = vmax.f32 %v575, 0.0
      %v616 = vmax.f32 %v580, 0.0
      %v617 = vmax.f32 %v583, 0.0
      %v618 = vpack.c.bf16 %v587, %v586
      %v619 = vpack.c.bf16 %v589, %v588
      %v620 = vpack.c.bf16 %v591, %v590
      %v621 = vpack.c.bf16 %v593, %v592
      %v622 = vpack.c.bf16 %v595, %v594
      %v623 = vpack.c.bf16 %v597, %v596
      %v624 = vpack.c.bf16 %v599, %v598
      %v625 = vpack.c.bf16 %v601, %v600
      %v626 = vpack.c.bf16 %v603, %v602
      %v627 = vpack.c.bf16 %v605, %v604
      %v628 = vpack.c.bf16 %v607, %v606
      %v629 = vpack.c.bf16 %v609, %v608
      %v630 = vpack.c.bf16 %v611, %v610
      %v631 = vpack.c.bf16 %v613, %v612
      %v632 = vpack.c.bf16 %v615, %v614
      %v633 = vpack.c.bf16 %v617, %v616
      %v650 = vunpack.c.l.b16 %v618
      %v651 = vunpack.c.h.b16 %v618
      %v652 = vunpack.c.l.b16 %v619
      %v653 = vunpack.c.h.b16 %v619
      %v654 = vunpack.c.l.b16 %v620
      %v655 = vunpack.c.h.b16 %v620
      %v656 = vunpack.c.l.b16 %v621
      %v657 = vunpack.c.h.b16 %v621
      %v658 = vunpack.c.l.b16 %v622
      %v659 = vunpack.c.h.b16 %v622
      %v660 = vunpack.c.l.b16 %v623
      %v661 = vunpack.c.h.b16 %v623
      %v662 = vunpack.c.l.b16 %v624
      %v663 = vunpack.c.h.b16 %v624
      %v664 = vunpack.c.l.b16 %v625
      %v665 = vunpack.c.h.b16 %v625
      %v666 = vunpack.c.l.b16 %v626
      %v667 = vunpack.c.h.b16 %v626
      %v668 = vunpack.c.l.b16 %v627
      %v669 = vunpack.c.h.b16 %v627
      %v670 = vunpack.c.l.b16 %v628
      %v671 = vunpack.c.h.b16 %v628
      %v672 = vunpack.c.l.b16 %v629
      %v673 = vunpack.c.h.b16 %v629
      %v674 = vunpack.c.l.b16 %v630
      %v675 = vunpack.c.h.b16 %v630
      %v676 = vunpack.c.l.b16 %v631
      %v677 = vunpack.c.h.b16 %v631
      %v678 = vunpack.c.l.b16 %v632
      %v679 = vunpack.c.h.b16 %v632
      %v680 = vunpack.c.l.b16 %v633
      %v681 = vunpack.c.h.b16 %v633
      %v682 = vpack.c.b16 %v650, %v650
      %v683 = vpack.c.b16 %v651, %v651
      %v684 = vpack.c.b16 %v652, %v652
      %v685 = vpack.c.b16 %v653, %v653
      %v686 = vpack.c.b16 %v654, %v654
      %v687 = vpack.c.b16 %v655, %v655
      %v688 = vpack.c.b16 %v656, %v656
      %v689 = vpack.c.b16 %v657, %v657
      %v690 = vpack.c.b16 %v658, %v658
      %v691 = vpack.c.b16 %v659, %v659
      %v692 = vpack.c.b16 %v660, %v660
      %v693 = vpack.c.b16 %v661, %v661
      %v694 = vpack.c.b16 %v662, %v662
      %v695 = vpack.c.b16 %v663, %v663
      %v696 = vpack.c.b16 %v664, %v664
      %v697 = vpack.c.b16 %v665, %v665
      %v698 = vpack.c.b16 %v666, %v666
      %v699 = vpack.c.b16 %v667, %v667
      %v700 = vpack.c.b16 %v668, %v668
      %v701 = vpack.c.b16 %v669, %v669
      %v702 = vpack.c.b16 %v670, %v670
      %v703 = vpack.c.b16 %v671, %v671
      %v704 = vpack.c.b16 %v672, %v672
      %v705 = vpack.c.b16 %v673, %v673
      %v706 = vpack.c.b16 %v674, %v674
      %v707 = vpack.c.b16 %v675, %v675
      %v708 = vpack.c.b16 %v676, %v676
      %v709 = vpack.c.b16 %v677, %v677
      %v710 = vpack.c.b16 %v678, %v678
      %v711 = vpack.c.b16 %v679, %v679
      %v712 = vpack.c.b16 %v680, %v680
      %v713 = vpack.c.b16 %v681, %v681
      %746 = vst [vmem:[%s223] sm:$0xf] %v682
      %747 = vst [vmem:[%s223 + $0x4] sm:$0xf] %v683
      %748 = vst [vmem:[%s223 + $0x8] sm:$0xf] %v684
      %749 = vst [vmem:[%s223 + $0xc] sm:$0xf] %v685
      %750 = vst [vmem:[%s223 + $0x10] sm:$0xf] %v686
      %751 = vst [vmem:[%s223 + $0x14] sm:$0xf] %v687
      %752 = vst [vmem:[%s223 + $0x18] sm:$0xf] %v688
      %753 = vst [vmem:[%s223 + $0x1c] sm:$0xf] %v689
      %754 = vst [vmem:[%s223 + $0x20] sm:$0xf] %v690
      %755 = vst [vmem:[%s223 + $0x24] sm:$0xf] %v691
      %756 = vst [vmem:[%s223 + $0x28] sm:$0xf] %v692
      %757 = vst [vmem:[%s223 + $0x2c] sm:$0xf] %v693
      %758 = vst [vmem:[%s223 + $0x30] sm:$0xf] %v694
      %759 = vst [vmem:[%s223 + $0x34] sm:$0xf] %v695
      %760 = vst [vmem:[%s223 + $0x38] sm:$0xf] %v696
      %761 = vst [vmem:[%s223 + $0x3c] sm:$0xf] %v697
      %762 = vst [vmem:[%s223 + $0x40] sm:$0xf] %v698
      %763 = vst [vmem:[%s223 + $0x44] sm:$0xf] %v699
      %764 = vst [vmem:[%s223 + $0x48] sm:$0xf] %v700
      %765 = vst [vmem:[%s223 + $0x4c] sm:$0xf] %v701
      %766 = vst [vmem:[%s223 + $0x50] sm:$0xf] %v702
      %767 = vst [vmem:[%s223 + $0x54] sm:$0xf] %v703
      %768 = vst [vmem:[%s223 + $0x58] sm:$0xf] %v704
      %769 = vst [vmem:[%s223 + $0x5c] sm:$0xf] %v705
      %770 = vst [vmem:[%s223 + $0x60] sm:$0xf] %v706
      %771 = vst [vmem:[%s223 + $0x64] sm:$0xf] %v707
      %772 = vst [vmem:[%s223 + $0x68] sm:$0xf] %v708
      %773 = vst [vmem:[%s223 + $0x6c] sm:$0xf] %v709
      %774 = vst [vmem:[%s223 + $0x70] sm:$0xf] %v710
      %775 = vst [vmem:[%s223 + $0x74] sm:$0xf] %v711
      %776 = vst [vmem:[%s223 + $0x78] sm:$0xf] %v712
      %777 = vst [vmem:[%s223 + $0x7c] sm:$0xf] %v713
      %s778 = smul.u32 32, %s18
      %p779 = scmp.lt.s32.totalorder %s778, 63
      %s780 = scalar_select %p779, %s778, 63
      %p781 = scmp.lt.s32.totalorder %s19, 0
      %s782 = scalar_select %p781, %s19, 0
      %s783 = sadd.s32 %s782, %s780
      %s784 = smul.addr %s783, 4
      %s785 = scalar_lea.vmem %s3, %s784
      // Predicated region
      $region33: #{backbone_base_forward.4} parent=31 // pred_check
        %p786 = pneg %p124
      $region34: #{backbone_base_forward.4} parent=31 // pred_check_branch
        %788 = sbr.rel (%p786) target = $region36
      $region35: #{backbone_base_forward.4} parent=31 // pred_region
        %s789 = smul.u32 32, %s18
      $region36: #{backbone_base_forward.4} parent=31 // pred_fallthru
        _
    $region32: #{backbone_base_forward.4} parent=5 // pred_fallthru
      _
    %p790 = scmp.le.s32.totalorder 2, %s9
    // Predicated region
    $region37: #{backbone_base_forward.4} parent=5 // pred_check
      %p791 = pneg %p790
    $region38: #{backbone_base_forward.4} parent=5 // pred_check_branch
      %793 = sbr.rel (%p791) target = $region40
    $region39: #{backbone_base_forward.4} parent=5 // pred_region
      %s794 = ssub.s32 %s9, 2
      // Predicated region
      $region41: #{backbone_base_forward.4} parent=39 // pred_check
        %p795 = pneg %p130
      $region42: #{backbone_base_forward.4} parent=39 // pred_check_branch
        %797 = sbr.rel (%p795) target = $region44
      $region43: #{backbone_base_forward.4} parent=39 // pred_region
        %s798 = smul.u32 32, %s20
        %p799 = scmp.lt.s32.totalorder %s798, 63
        %s800 = scalar_select %p799, %s798, 63
        %p801 = scmp.lt.s32.totalorder %s21, 0
        %s802 = scalar_select %p801, %s21, 0
        %s803 = sadd.s32 %s802, %s800
        %s804 = smul.addr %s803, 4
        %s805 = scalar_lea.vmem %s3, %s804
      $region44: #{backbone_base_forward.4} parent=39 // pred_fallthru
        _
    $region40: #{backbone_base_forward.4} parent=5 // pred_fallthru
      _
  $region6: #{backbone_base_forward.4} parent=0 // loop_footer
    %s13 = sadd.s32 1, %s9
  $region7: #{backbone_base_forward.4} parent=0 // loop_footer_branch
    %8 = sbr.rel target = $region3
  $region8: #{backbone_base_forward.4} parent=0 // loop_exit
    _

// kernel: backbone_base_forward.5
$region0: #{backbone_base_forward.5}
  #allocation0 [shape = 'u32[]', space=smem, size = 0x4, offset = 0x4, fixed_abs, tag = 'smem constant byte address 0x4 - core index']
  #allocation1 [shape = 'u32[144,128]{1,0:T(1,128)}', space=vmem, size = 0x12000, scoped, tag = 'internal scratch']
  %s0 = inlined_call_operand.vmem [shape: bf16[128,288], index: 0, kind: input, shape index: {}]
  %s1 = inlined_call_operand.vmem [shape: bf16[288,128], index: 1, kind: input, shape index: {}]
  %s2 = inlined_call_operand.vmem [shape: f32[1,128], index: 2, kind: input, shape index: {}]
  %s3 = inlined_call_operand.vmem [shape: bf16[128,128], index: 3, kind: output, shape index: {}]
  %s4 = sld [smem:[#allocation0]]
  $region45: #{backbone_base_forward.5} parent=0
    _
  %s6 = ssub.s32 1, %s4
  %s7 = scalar_select 0, %s6, %s4
  loop: start=0, step=1, limit=4
  $region2: #{backbone_base_forward.5} parent=0 // loop_pre_header
    _
  $region3: #{backbone_base_forward.5} parent=0 // loop_header
    %s9 = sphi 0, %s13
    %p10 = scmp.ge.s32.totalorder %s9, 4
    %s16 = sphi 0, %s28
    %s17 = sphi 0, %s24
    %s18 = sphi 0, %s16
    %s19 = sphi 0, %s17
    %s20 = sphi 0, %s18
    %s21 = sphi 0, %s19
    %s31 = sphi 0, %s33
    %s34 = sphi 0, %s31
    %s35 = sphi 0, %s34
    %s51 = sphi 0, %s35
    %s57 = sphi 0, %s59
    %s60 = sphi 0, %s57
    %s61 = sphi 0, %s60
    %s77 = sphi 0, %s61
    %s83 = sphi 0, %s85
    %s86 = sphi 0, %s83
    %s87 = sphi 0, %s86
    %s103 = sphi 0, %s87
    %s111 = sphi 0, %s113
    %s114 = sphi 0, %s111
    %s115 = sphi 0, %s114
    %s131 = sphi 0, %s115
  $region4: #{backbone_base_forward.5} parent=0 // loop_header_branch
    %12 = sbr.rel (%p10) target = $region8
  $region5: #{backbone_base_forward.5} parent=0 // loop_body
    %s14 = ssub.s32 %s9, 1
    %s15 = ssub.s32 %s9, 2
    %s22 = sadd.s32 1, %s17
    %p23 = scmp.ge.s32.totalorder %s22, 1
    %s24 = scalar_select %p23, 0, %s22
    %s25 = sadd.s32 1, %s16
    %s26 = scalar_select %p23, %s25, %s16
    %p27 = scmp.ge.s32.totalorder %s26, 2
    %s28 = scalar_select %p27, 0, %s26
    %s29 = ssub.s32 %s16, %s28
    %p30 = scmp.eq.s32.totalorder %s29, 0
    %s32 = sadd.s32 %s31, 1
    %s33 = scalar_select %p30, %s31, %s32
    %p36 = pneg %p30
    %p37 = scmp.eq.s32.totalorder %s9, 1
    %p38 = por %p36, %p37
    %p39 = scmp.ne.s32.totalorder %s31, %s34
    %p40 = scmp.eq.s32.totalorder %s9, 0
    %p41 = por %p39, %p40
    %p42 = scmp.ne.s32.totalorder %s31, %s34
    %p43 = scmp.eq.s32.totalorder %s14, 1
    %p44 = por %p42, %p43
    %p45 = scmp.ne.s32.totalorder %s34, %s35
    %p46 = scmp.eq.s32.totalorder %s14, 0
    %p47 = por %p45, %p46
    %p48 = scmp.ne.s32.totalorder %s34, %s35
    %p49 = scmp.eq.s32.totalorder %s15, 1
    %p50 = por %p48, %p49
    %p52 = scmp.ne.s32.totalorder %s35, %s51
    %p53 = scmp.eq.s32.totalorder %s15, 0
    %p54 = por %p52, %p53
    %s55 = ssub.s32 %s17, %s24
    %p56 = scmp.eq.s32.totalorder %s55, 0
    %s58 = sadd.s32 %s57, 1
    %s59 = scalar_select %p56, %s57, %s58
    %p62 = pneg %p56
    %p63 = scmp.eq.s32.totalorder %s9, 1
    %p64 = por %p62, %p63
    %p65 = scmp.ne.s32.totalorder %s57, %s60
    %p66 = scmp.eq.s32.totalorder %s9, 0
    %p67 = por %p65, %p66
    %p68 = scmp.ne.s32.totalorder %s57, %s60
    %p69 = scmp.eq.s32.totalorder %s14, 1
    %p70 = por %p68, %p69
    %p71 = scmp.ne.s32.totalorder %s60, %s61
    %p72 = scmp.eq.s32.totalorder %s14, 0
    %p73 = por %p71, %p72
    %p74 = scmp.ne.s32.totalorder %s60, %s61
    %p75 = scmp.eq.s32.totalorder %s15, 1
    %p76 = por %p74, %p75
    %p78 = scmp.ne.s32.totalorder %s61, %s77
    %p79 = scmp.eq.s32.totalorder %s15, 0
    %p80 = por %p78, %p79
    %s81 = ssub.s32 %s17, %s24
    %p82 = scmp.eq.s32.totalorder %s81, 0
    %s84 = sadd.s32 %s83, 1
    %s85 = scalar_select %p82, %s83, %s84
    %p88 = pneg %p82
    %p89 = scmp.eq.s32.totalorder %s9, 1
    %p90 = por %p88, %p89
    %p91 = scmp.ne.s32.totalorder %s83, %s86
    %p92 = scmp.eq.s32.totalorder %s9, 0
    %p93 = por %p91, %p92
    %p94 = scmp.ne.s32.totalorder %s83, %s86
    %p95 = scmp.eq.s32.totalorder %s14, 1
    %p96 = por %p94, %p95
    %p97 = scmp.ne.s32.totalorder %s86, %s87
    %p98 = scmp.eq.s32.totalorder %s14, 0
    %p99 = por %p97, %p98
    %p100 = scmp.ne.s32.totalorder %s86, %s87
    %p101 = scmp.eq.s32.totalorder %s15, 1
    %p102 = por %p100, %p101
    %p104 = scmp.ne.s32.totalorder %s87, %s103
    %p105 = scmp.eq.s32.totalorder %s15, 0
    %p106 = por %p104, %p105
    %s107 = ssub.s32 %s16, %s28
    %s108 = ssub.s32 %s17, %s24
    %s109 = sor.u32 %s107, %s108
    %p110 = scmp.eq.s32.totalorder %s109, 0
    %s112 = sadd.s32 %s111, 1
    %s113 = scalar_select %p110, %s111, %s112
    %p116 = pneg %p110
    %p117 = scmp.eq.s32.totalorder %s9, 1
    %p118 = por %p116, %p117
    %p119 = scmp.ne.s32.totalorder %s111, %s114
    %p120 = scmp.eq.s32.totalorder %s9, 0
    %p121 = por %p119, %p120
    %p122 = scmp.ne.s32.totalorder %s111, %s114
    %p123 = scmp.eq.s32.totalorder %s14, 1
    %p124 = por %p122, %p123
    %p125 = scmp.ne.s32.totalorder %s114, %s115
    %p126 = scmp.eq.s32.totalorder %s14, 0
    %p127 = por %p125, %p126
    %p128 = scmp.ne.s32.totalorder %s114, %s115
    %p129 = scmp.eq.s32.totalorder %s15, 1
    %p130 = por %p128, %p129
    %p132 = scmp.ne.s32.totalorder %s115, %s131
    %p133 = scmp.eq.s32.totalorder %s15, 0
    %p134 = por %p132, %p133
    %p135 = scmp.le.s32.totalorder 1, %s9
    %p136 = scmp.lt.s32.totalorder %s9, 3
    %p137 = pnand %p135, %p136
    %p138 = pneg %p137
    // Predicated region
    $region9: #{backbone_base_forward.5} parent=5 // pred_check
      _
    $region10: #{backbone_base_forward.5} parent=5 // pred_check_branch
      %140 = sbr.rel (%p137) target = $region12
    $region11: #{backbone_base_forward.5} parent=5 // pred_region
      %s141 = ssub.s32 %s9, 1
      // Predicated region
      $region13: #{backbone_base_forward.5} parent=11 // pred_check
        %p142 = pneg %p73
      $region14: #{backbone_base_forward.5} parent=11 // pred_check_branch
        %144 = sbr.rel (%p142) target = $region16
      $region15: #{backbone_base_forward.5} parent=11 // pred_region
        %p145 = scmp.lt.s32.totalorder %s19, 0
        %s146 = scalar_select %p145, %s19, 0
        %s147 = smul.addr %s146, 4
        %s148 = scalar_lea.vmem %s1, %s147
      $region16: #{backbone_base_forward.5} parent=11 // pred_fallthru
        _
      // Predicated region
      $region17: #{backbone_base_forward.5} parent=11 // pred_check
        %p149 = pneg %p99
      $region18: #{backbone_base_forward.5} parent=11 // pred_check_branch
        %151 = sbr.rel (%p149) target = $region20
      $region19: #{backbone_base_forward.5} parent=11 // pred_region
        %p152 = scmp.lt.s32.totalorder %s19, 0
        %s153 = scalar_select %p152, %s19, 0
        %s154 = scalar_lea.vmem %s2, %s153
      $region20: #{backbone_base_forward.5} parent=11 // pred_fallthru
        _
    $region12: #{backbone_base_forward.5} parent=5 // pred_fallthru
      _
    %p155 = scmp.lt.s32.totalorder %s9, 2
    // Predicated region
    $region21: #{backbone_base_forward.5} parent=5 // pred_check
      %p156 = pneg %p155
    $region22: #{backbone_base_forward.5} parent=5 // pred_check_branch
      %158 = sbr.rel (%p156) target = $region24
    $region23: #{backbone_base_forward.5} parent=5 // pred_region
      // Predicated region
      $region25: #{backbone_base_forward.5} parent=23 // pred_check
        %p159 = pneg %p41
      $region26: #{backbone_base_forward.5} parent=23 // pred_check_branch
        %161 = sbr.rel (%p159) target = $region28
      $region27: #{backbone_base_forward.5} parent=23 // pred_region
        %s162 = smul.u32 8, %s16
        %p163 = scmp.lt.s32.totalorder %s162, 15
        %s164 = scalar_select %p163, %s162, 15
        %s165 = smul.addr %s164, 3
        %s166 = smul.addr %s165, 4
        %s167 = scalar_lea.vmem %s0, %s166
        %s168 = smul.u32 8, %s16
      $region28: #{backbone_base_forward.5} parent=23 // pred_fallthru
        _
    $region24: #{backbone_base_forward.5} parent=5 // pred_fallthru
      _
    %p169 = scmp.le.s32.totalorder 1, %s9
    %p170 = scmp.lt.s32.totalorder %s9, 3
    %p171 = pnand %p169, %p170
    %p172 = pneg %p171
    // Predicated region
    $region29: #{backbone_base_forward.5} parent=5 // pred_check
      _
    $region30: #{backbone_base_forward.5} parent=5 // pred_check_branch
      %174 = sbr.rel (%p171) target = $region32
    $region31: #{backbone_base_forward.5} parent=5 // pred_region
      %s175 = ssub.s32 %s9, 1
      %s176 = smul.u32 8, %s18
      %p177 = scmp.lt.s32.totalorder %s176, 15
      %s178 = scalar_select %p177, %s176, 15
      %s179 = smul.addr %s178, 3
      %s180 = smul.addr %s179, 4
      %s181 = scalar_lea.vmem %s0, %s180
      %p182 = pneg %p47
      %p183 = pneg %p44
      %p184 = scmp.lt.s32.totalorder %s19, 0
      %s185 = scalar_select %p184, %s19, 0
      %s186 = smul.addr %s185, 4
      %s187 = scalar_lea.vmem %s1, %s186
      %p188 = pneg %p73
      %p189 = pneg %p70
      %p190 = scmp.lt.s32.totalorder %s19, 0
      %s191 = scalar_select %p190, %s19, 0
      %s192 = scalar_lea.vmem %s2, %s191
      %p193 = pneg %p99
      %p194 = pneg %p96
      %p195 = pneg %p127
      %p196 = pneg %p124
      %s197 = smul.u32 8, %s18
      %p198 = scmp.lt.s32.totalorder %s197, 15
      %s199 = scalar_select %p198, %s197, 15
      %p200 = scmp.lt.s32.totalorder %s19, 0
      %s201 = scalar_select %p200, %s19, 0
      %s202 = sadd.s32 %s201, %s199
      %s203 = smul.addr %s202, 4
      %s204 = scalar_lea.vmem %s3, %s203
      %s205 = smul.u32 8, %s18
      %p206 = scmp.lt.s32.totalorder %s205, 15
      %s207 = scalar_select %p206, %s205, 15
      %s208 = smul.addr %s207, 3
      %s209 = smul.addr %s208, 4
      %s210 = scalar_lea.vmem %s0, %s209
      %s211 = smul.u32 8, %s18
      %p212 = scmp.lt.s32.totalorder %s19, 0
      %s213 = scalar_select %p212, %s19, 0
      %s214 = smul.addr %s213, 4
      %s215 = scalar_lea.vmem %s1, %s214
      %p216 = scmp.lt.s32.totalorder %s19, 0
      %s217 = scalar_select %p216, %s19, 0
      %s218 = scalar_lea.vmem %s2, %s217
      %s219 = smul.u32 8, %s18
      %p220 = scmp.lt.s32.totalorder %s219, 15
      %s221 = scalar_select %p220, %s219, 15
      %p222 = scmp.lt.s32.totalorder %s19, 0
      %s223 = scalar_select %p222, %s19, 0
      %s224 = sadd.s32 %s223, %s221
      %s225 = smul.addr %s224, 4
      %s226 = scalar_lea.vmem %s3, %s225
      %s227 = smul.u32 8, %s18
      %v229 = vld [vmem:[%s210] sm:$0xff]
      %v230 = vld [vmem:[%s210 + $0x8] sm:$0xf]
      %v231 = vld [vmem:[%s210 + $0xc] sm:$0xff]
      %v232 = vld [vmem:[%s210 + $0x14] sm:$0xf]
      %v233 = vld [vmem:[%s210 + $0x18] sm:$0xff]
      %v234 = vld [vmem:[%s210 + $0x20] sm:$0xf]
      %v235 = vld [vmem:[%s210 + $0x24] sm:$0xff]
      %v236 = vld [vmem:[%s210 + $0x2c] sm:$0xf]
      %v237 = vld [vmem:[%s210 + $0x30] sm:$0xff]
      %v238 = vld [vmem:[%s210 + $0x38] sm:$0xf]
      %v239 = vld [vmem:[%s210 + $0x3c] sm:$0xff]
      %v240 = vld [vmem:[%s210 + $0x44] sm:$0xf]
      %v241 = vld [vmem:[%s210 + $0x48] sm:$0xff]
      %v242 = vld [vmem:[%s210 + $0x50] sm:$0xf]
      %v243 = vld [vmem:[%s210 + $0x54] sm:$0xff]
      %v244 = vld [vmem:[%s210 + $0x5c] sm:$0xf]
      %v245 = vld [vmem:[%s215] sm:$0xf]
      %v246 = vld [vmem:[%s215 + $0x4] sm:$0xf]
      %v247 = vld [vmem:[%s215 + $0x8] sm:$0xf]
      %v248 = vld [vmem:[%s215 + $0xc] sm:$0xf]
      %v249 = vld [vmem:[%s215 + $0x10] sm:$0xf]
      %v250 = vld [vmem:[%s215 + $0x14] sm:$0xf]
      %v251 = vld [vmem:[%s215 + $0x18] sm:$0xf]
      %v252 = vld [vmem:[%s215 + $0x1c] sm:$0xf]
      %v253 = vld [vmem:[%s215 + $0x20] sm:$0xf]
      %v254 = vld [vmem:[%s215 + $0x24] sm:$0xf]
      %v255 = vld [vmem:[%s215 + $0x28] sm:$0xf]
      %v256 = vld [vmem:[%s215 + $0x2c] sm:$0xf]
      %v257 = vld [vmem:[%s215 + $0x30] sm:$0xf]
      %v258 = vld [vmem:[%s215 + $0x34] sm:$0xf]
      %v259 = vld [vmem:[%s215 + $0x38] sm:$0xf]
      %v260 = vld [vmem:[%s215 + $0x3c] sm:$0xf]
      %v261 = vld [vmem:[%s215 + $0x40] sm:$0xf]
      %v262 = vld [vmem:[%s215 + $0x44] sm:$0xf]
      %v263 = vld [vmem:[%s215 + $0x48] sm:$0xf]
      %v264 = vld [vmem:[%s215 + $0x4c] sm:$0xf]
      %v265 = vld [vmem:[%s215 + $0x50] sm:$0xf]
      %v266 = vld [vmem:[%s215 + $0x54] sm:$0xf]
      %v267 = vld [vmem:[%s215 + $0x58] sm:$0xf]
      %v268 = vld [vmem:[%s215 + $0x5c] sm:$0xf]
      %v269 = vld [vmem:[%s215 + $0x60] sm:$0xf]
      %v270 = vld [vmem:[%s215 + $0x64] sm:$0xf]
      %v271 = vld [vmem:[%s215 + $0x68] sm:$0xf]
      %v272 = vld [vmem:[%s215 + $0x6c] sm:$0xf]
      %v273 = vld [vmem:[%s215 + $0x70] sm:$0xf]
      %v274 = vld [vmem:[%s215 + $0x74] sm:$0xf]
      %v275 = vld [vmem:[%s215 + $0x78] sm:$0xf]
      %v276 = vld [vmem:[%s215 + $0x7c] sm:$0xf]
      %v277 = vld [vmem:[%s215 + $0x80] sm:$0xf]
      %v278 = vld [vmem:[%s215 + $0x84] sm:$0xf]
      %v279 = vld [vmem:[%s215 + $0x88] sm:$0xf]
      %v280 = vld [vmem:[%s215 + $0x8c] sm:$0xf]
      %v281 = vld [vmem:[%s218] sm:$0x1]
      %v283 = vlaneseq
      %v284 = vshrl.u32 %v283, 7
      %v285 = vsub.s32 0, %v284
      %v286 = vrot.slane %v281, %v285
      %v304 = vunpack.c.l.b16 %v229
      %v305 = vunpack.c.h.b16 %v229
      %v306 = vunpack.c.l.b16 %v230
      %v307 = vunpack.c.l.b16 %v231
      %v308 = vunpack.c.h.b16 %v231
      %v309 = vunpack.c.l.b16 %v232
      %v310 = vunpack.c.l.b16 %v233
      %v311 = vunpack.c.h.b16 %v233
      %v312 = vunpack.c.l.b16 %v234
      %v313 = vunpack.c.l.b16 %v235
      %v314 = vunpack.c.h.b16 %v235
      %v315 = vunpack.c.l.b16 %v236
      %v316 = vunpack.c.l.b16 %v237
      %v317 = vunpack.c.h.b16 %v237
      %v318 = vunpack.c.l.b16 %v238
      %v319 = vunpack.c.l.b16 %v239
      %v320 = vunpack.c.h.b16 %v239
      %v321 = vunpack.c.l.b16 %v240
      %v322 = vunpack.c.l.b16 %v241
      %v323 = vunpack.c.h.b16 %v241
      %v324 = vunpack.c.l.b16 %v242
      %v325 = vunpack.c.l.b16 %v243
      %v326 = vunpack.c.h.b16 %v243
      %v327 = vunpack.c.l.b16 %v244
      %v328 = vpack.c.b16 %v307, %v304
      %v329 = vpack.c.b16 %v308, %v305
      %v330 = vpack.c.b16 %v309, %v306
      %v331 = vpack.c.b16 %v313, %v310
      %v332 = vpack.c.b16 %v314, %v311
      %v333 = vpack.c.b16 %v315, %v312
      %v334 = vpack.c.b16 %v319, %v316
      %v335 = vpack.c.b16 %v320, %v317
      %v336 = vpack.c.b16 %v321, %v318
      %v337 = vpack.c.b16 %v325, %v322
      %v338 = vpack.c.b16 %v326, %v323
      %v339 = vpack.c.b16 %v327, %v324
      %v384 = vunpack.c.l.b16 %v245
      %v385 = vunpack.c.l.b16 %v246
      %v386 = vunpack.c.l.b16 %v247
      %v387 = vunpack.c.l.b16 %v248
      %v388 = vunpack.c.l.b16 %v249
      %v389 = vunpack.c.l.b16 %v250
      %v390 = vunpack.c.l.b16 %v251
      %v391 = vunpack.c.l.b16 %v252
      %v392 = vunpack.c.l.b16 %v253
      %v393 = vunpack.c.l.b16 %v254
      %v394 = vunpack.c.l.b16 %v255
      %v395 = vunpack.c.l.b16 %v256
      %v396 = vunpack.c.l.b16 %v257
      %v397 = vunpack.c.l.b16 %v258
      %v398 = vunpack.c.l.b16 %v259
      %v399 = vunpack.c.l.b16 %v260
      %v400 = vunpack.c.l.b16 %v261
      %v401 = vunpack.c.l.b16 %v262
      %v402 = vunpack.c.l.b16 %v263
      %v403 = vunpack.c.l.b16 %v264
      %v404 = vunpack.c.l.b16 %v265
      %v405 = vunpack.c.l.b16 %v266
      %v406 = vunpack.c.l.b16 %v267
      %v407 = vunpack.c.l.b16 %v268
      %v408 = vunpack.c.l.b16 %v269
      %v409 = vunpack.c.l.b16 %v270
      %v410 = vunpack.c.l.b16 %v271
      %v411 = vunpack.c.l.b16 %v272
      %v412 = vunpack.c.l.b16 %v273
      %v413 = vunpack.c.l.b16 %v274
      %v414 = vunpack.c.l.b16 %v275
      %v415 = vunpack.c.l.b16 %v276
      %v416 = vunpack.c.l.b16 %v277
      %v417 = vunpack.c.l.b16 %v278
      %v418 = vunpack.c.l.b16 %v279
      %v419 = vunpack.c.l.b16 %v280
      %v420 = vpack.c.b16 %v385, %v384
      %v421 = vpack.c.b16 %v387, %v386
      %v422 = vpack.c.b16 %v389, %v388
      %v423 = vpack.c.b16 %v391, %v390
      %v424 = vpack.c.b16 %v393, %v392
      %v425 = vpack.c.b16 %v395, %v394
      %v426 = vpack.c.b16 %v397, %v396
      %v427 = vpack.c.b16 %v399, %v398
      %v428 = vpack.c.b16 %v401, %v400
      %v429 = vpack.c.b16 %v403, %v402
      %v430 = vpack.c.b16 %v405, %v404
      %v431 = vpack.c.b16 %v407, %v406
      %v432 = vpack.c.b16 %v409, %v408
      %v433 = vpack.c.b16 %v411, %v410
      %v434 = vpack.c.b16 %v413, %v412
      %v435 = vpack.c.b16 %v415, %v414
      %v436 = vpack.c.b16 %v417, %v416
      %v437 = vpack.c.b16 %v419, %v418
      %vm456 = vcmask 261120
      %v458 = vsel %vm456, %v330, 0
      %v461 = vsel %vm456, %v333, 0
      %v464 = vsel %vm456, %v336, 0
      %v467 = vsel %vm456, %v339, 0
      %469 = vmatprep.subr.bf16.mxu0 0
      %470 = vmatpush1.bf16.msra.mxu0 %v420
      %471 = vmatprep.subr.bf16.mxu0 0
      %472 = vmatpush1.bf16.msra.mxu0 %v421
      %473 = vmatprep.subr.bf16.mxu0 0
      %474 = vmatpush1.bf16.msra.mxu0 %v422
      %475 = vmatprep.subr.bf16.mxu0 0
      %476 = vmatpush1.bf16.msra.mxu0 %v423
      %477 = vmatprep.subr.bf16.mxu0 0
      %478 = vmatpush1.bf16.msra.mxu0 %v424
      %479 = vmatprep.subr.bf16.mxu0 0
      %480 = vmatpush1.bf16.msra.mxu0 %v425
      %481 = vmatprep.subr.bf16.mxu0 0
      %482 = vmatpush1.bf16.msra.mxu0 %v426
      %483 = vmatprep.subr.bf16.mxu0 0
      %484 = vmatpush1.bf16.msra.mxu0 %v427
      %485 = vmatprep.subr.bf16.mxu0 0
      %486 = vmatpush1.bf16.msra.mxu0 %v428
      %487 = vmatprep.subr.bf16.mxu0 0
      %488 = vmatpush1.bf16.msra.mxu0 %v429
      %489 = vmatprep.subr.bf16.mxu0 0
      %490 = vmatpush1.bf16.msra.mxu0 %v430
      %491 = vmatprep.subr.bf16.mxu0 0
      %492 = vmatpush1.bf16.msra.mxu0 %v431
      %493 = vmatprep.subr.bf16.mxu0 0
      %494 = vmatpush1.bf16.msra.mxu0 %v432
      %495 = vmatprep.subr.bf16.mxu0 0
      %496 = vmatpush1.bf16.msra.mxu0 %v433
      %497 = vmatprep.subr.bf16.mxu0 0
      %498 = vmatpush1.bf16.msra.mxu0 %v434
      %499 = vmatprep.subr.bf16.mxu0 0
      %500 = vmatpush1.bf16.msra.mxu0 %v435
      %501 = vmatprep.mubr.bf16.mxu0 %v329
      %502 = vmatmul.mubr.bf16.gmra.mrb[0].mxu0 %v328
      %v503 = vpop.f32.mrb[0].mxu0
      %v504 = vadd.f32 %v286, %v503
      %v505 = vpop.f32.mrb[0].mxu0
      %v506 = vpop.f32.mrb[0].mxu0
      %v507 = vadd.f32 %v286, %v506
      %v508 = vpop.f32.mrb[0].mxu0
      %509 = vmatprep.mubr.bf16.mxu0 %v332
      %510 = vmatmul.mubr.bf16.gmra.mrb[0].mxu0 %v331
      %v511 = vpop.f32.mrb[0].mxu0
      %v512 = vadd.f32 %v286, %v511
      %v513 = vpop.f32.mrb[0].mxu0
      %v514 = vpop.f32.mrb[0].mxu0
      %v515 = vadd.f32 %v286, %v514
      %v516 = vpop.f32.mrb[0].mxu0
      %517 = vmatprep.mubr.bf16.mxu0 %v335
      %518 = vmatmul.mubr.bf16.gmra.mrb[0].mxu0 %v334
      %v519 = vpop.f32.mrb[0].mxu0
      %v520 = vadd.f32 %v286, %v519
      %v521 = vpop.f32.mrb[0].mxu0
      %v522 = vpop.f32.mrb[0].mxu0
      %v523 = vadd.f32 %v286, %v522
      %v524 = vpop.f32.mrb[0].mxu0
      %525 = vmatprep.mubr.bf16.mxu0 %v338
      %526 = vmatmul.mubr.bf16.gmra.mrb[0].mxu0 %v337
      %v527 = vpop.f32.mrb[0].mxu0
      %v528 = vadd.f32 %v286, %v527
      %v529 = vpop.f32.mrb[0].mxu0
      %v530 = vpop.f32.mrb[0].mxu0
      %v531 = vadd.f32 %v286, %v530
      %v532 = vpop.f32.mrb[0].mxu0
      %533 = vdwg.mxu0
      %534 = vmatprep.subr.bf16.mxu0 0
      %535 = vmatpush1.bf16.msra.mxu0 %v436
      %536 = vmatprep.subr.bf16.mxu0 0
      %537 = vmatpush1.bf16.msra.mxu0 %v437
      %538 = vmatprep.subr.bf16.mxu0 0
      %539 = vmatpush1.bf16.msra.mxu0 0
      %540 = vmatprep.subr.bf16.mxu0 0
      %541 = vmatpush1.bf16.msra.mxu0 0
      %542 = vmatprep.subr.bf16.mxu0 0
      %543 = vmatpush1.bf16.msra.mxu0 0
      %544 = vmatprep.subr.bf16.mxu0 0
      %545 = vmatpush1.bf16.msra.mxu0 0
      %546 = vmatprep.subr.bf16.mxu0 0
      %547 = vmatpush1.bf16.msra.mxu0 0
      %548 = vmatprep.subr.bf16.mxu0 0
      %549 = vmatpush1.bf16.msra.mxu0 0
      %550 = vmatprep.subr.bf16.mxu0 0
      %551 = vmatpush1.bf16.msra.mxu0 0
      %552 = vmatprep.subr.bf16.mxu0 0
      %553 = vmatpush1.bf16.msra.mxu0 0
      %554 = vmatprep.subr.bf16.mxu0 0
      %555 = vmatpush1.bf16.msra.mxu0 0
      %556 = vmatprep.subr.bf16.mxu0 0
      %557 = vmatpush1.bf16.msra.mxu0 0
      %558 = vmatprep.subr.bf16.mxu0 0
      %559 = vmatpush1.bf16.msra.mxu0 0
      %560 = vmatprep.subr.bf16.mxu0 0
      %561 = vmatpush1.bf16.msra.mxu0 0
      %562 = vmatprep.subr.bf16.mxu0 0
      %563 = vmatpush1.bf16.msra.mxu0 0
      %564 = vmatprep.subr.bf16.mxu0 0
      %565 = vmatpush1.bf16.msra.mxu0 0
      %566 = vmatprep.mubr.bf16.mxu0 0
      %567 = vmatmul.mubr.bf16.gmra.mrb[0].mxu0 %v458
      %v568 = vpop.f32.mrb[0].mxu0
      %v569 = vadd.f32 %v504, %v568
      %v570 = vpop.f32.mrb[0].mxu0
      %v571 = vpop.f32.mrb[0].mxu0
      %v572 = vadd.f32 %v507, %v571
      %v573 = vpop.f32.mrb[0].mxu0
      %574 = vmatprep.mubr.bf16.mxu0 0
      %575 = vmatmul.mubr.bf16.gmra.mrb[0].mxu0 %v461
      %v576 = vpop.f32.mrb[0].mxu0
      %v577 = vadd.f32 %v512, %v576
      %v578 = vpop.f32.mrb[0].mxu0
      %v579 = vpop.f32.mrb[0].mxu0
      %v580 = vadd.f32 %v515, %v579
      %v581 = vpop.f32.mrb[0].mxu0
      %582 = vmatprep.mubr.bf16.mxu0 0
      %583 = vmatmul.mubr.bf16.gmra.mrb[0].mxu0 %v464
      %v584 = vpop.f32.mrb[0].mxu0
      %v585 = vadd.f32 %v520, %v584
      %v586 = vpop.f32.mrb[0].mxu0
      %v587 = vpop.f32.mrb[0].mxu0
      %v588 = vadd.f32 %v523, %v587
      %v589 = vpop.f32.mrb[0].mxu0
      %590 = vmatprep.mubr.bf16.mxu0 0
      %591 = vmatmul.mubr.bf16.gmra.mrb[0].mxu0 %v467
      %v592 = vpop.f32.mrb[0].mxu0
      %v593 = vadd.f32 %v528, %v592
      %v594 = vpop.f32.mrb[0].mxu0
      %v595 = vpop.f32.mrb[0].mxu0
      %v596 = vadd.f32 %v531, %v595
      %v597 = vpop.f32.mrb[0].mxu0
      %598 = vdwg.mxu0
      %v599 = vmax.f32 %v569, 0.0
      %v600 = vmax.f32 %v572, 0.0
      %v601 = vmax.f32 %v577, 0.0
      %v602 = vmax.f32 %v580, 0.0
      %v603 = vmax.f32 %v585, 0.0
      %v604 = vmax.f32 %v588, 0.0
      %v605 = vmax.f32 %v593, 0.0
      %v606 = vmax.f32 %v596, 0.0
      %v607 = vpack.c.bf16 %v600, %v599
      %v608 = vpack.c.bf16 %v602, %v601
      %v609 = vpack.c.bf16 %v604, %v603
      %v610 = vpack.c.bf16 %v606, %v605
      %v615 = vunpack.c.l.b16 %v607
      %v616 = vunpack.c.h.b16 %v607
      %v617 = vunpack.c.l.b16 %v608
      %v618 = vunpack.c.h.b16 %v608
      %v619 = vunpack.c.l.b16 %v609
      %v620 = vunpack.c.h.b16 %v609
      %v621 = vunpack.c.l.b16 %v610
      %v622 = vunpack.c.h.b16 %v610
      %v623 = vpack.c.b16 %v615, %v615
      %v624 = vpack.c.b16 %v616, %v616
      %v625 = vpack.c.b16 %v617, %v617
      %v626 = vpack.c.b16 %v618, %v618
      %v627 = vpack.c.b16 %v619, %v619
      %v628 = vpack.c.b16 %v620, %v620
      %v629 = vpack.c.b16 %v621, %v621
      %v630 = vpack.c.b16 %v622, %v622
      %639 = vst [vmem:[%s226] sm:$0xf] %v623
      %640 = vst [vmem:[%s226 + $0x4] sm:$0xf] %v624
      %641 = vst [vmem:[%s226 + $0x8] sm:$0xf] %v625
      %642 = vst [vmem:[%s226 + $0xc] sm:$0xf] %v626
      %643 = vst [vmem:[%s226 + $0x10] sm:$0xf] %v627
      %644 = vst [vmem:[%s226 + $0x14] sm:$0xf] %v628
      %645 = vst [vmem:[%s226 + $0x18] sm:$0xf] %v629
      %646 = vst [vmem:[%s226 + $0x1c] sm:$0xf] %v630
      %s647 = smul.u32 8, %s18
      %p648 = scmp.lt.s32.totalorder %s647, 15
      %s649 = scalar_select %p648, %s647, 15
      %p650 = scmp.lt.s32.totalorder %s19, 0
      %s651 = scalar_select %p650, %s19, 0
      %s652 = sadd.s32 %s651, %s649
      %s653 = smul.addr %s652, 4
      %s654 = scalar_lea.vmem %s3, %s653
      // Predicated region
      $region33: #{backbone_base_forward.5} parent=31 // pred_check
        %p655 = pneg %p124
      $region34: #{backbone_base_forward.5} parent=31 // pred_check_branch
        %657 = sbr.rel (%p655) target = $region36
      $region35: #{backbone_base_forward.5} parent=31 // pred_region
        %s658 = smul.u32 8, %s18
      $region36: #{backbone_base_forward.5} parent=31 // pred_fallthru
        _
    $region32: #{backbone_base_forward.5} parent=5 // pred_fallthru
      _
    %p659 = scmp.le.s32.totalorder 2, %s9
    // Predicated region
    $region37: #{backbone_base_forward.5} parent=5 // pred_check
      %p660 = pneg %p659
    $region38: #{backbone_base_forward.5} parent=5 // pred_check_branch
      %662 = sbr.rel (%p660) target = $region40
    $region39: #{backbone_base_forward.5} parent=5 // pred_region
      %s663 = ssub.s32 %s9, 2
      // Predicated region
      $region41: #{backbone_base_forward.5} parent=39 // pred_check
        %p664 = pneg %p130
      $region42: #{backbone_base_forward.5} parent=39 // pred_check_branch
        %666 = sbr.rel (%p664) target = $region44
      $region43: #{backbone_base_forward.5} parent=39 // pred_region
        %s667 = smul.u32 8, %s20
        %p668 = scmp.lt.s32.totalorder %s667, 15
        %s669 = scalar_select %p668, %s667, 15
        %p670 = scmp.lt.s32.totalorder %s21, 0
        %s671 = scalar_select %p670, %s21, 0
        %s672 = sadd.s32 %s671, %s669
        %s673 = smul.addr %s672, 4
        %s674 = scalar_lea.vmem %s3, %s673
      $region44: #{backbone_base_forward.5} parent=39 // pred_fallthru
        _
    $region40: #{backbone_base_forward.5} parent=5 // pred_fallthru
      _
  $region6: #{backbone_base_forward.5} parent=0 // loop_footer
    %s13 = sadd.s32 1, %s9
  $region7: #{backbone_base_forward.5} parent=0 // loop_footer_branch
    %8 = sbr.rel target = $region3
  $region8: #{backbone_base_forward.5} parent=0 // loop_exit
    _

// kernel: backbone_base_forward.6
$region0: #{backbone_base_forward.6}
  #allocation0 [shape = 'u32[]', space=smem, size = 0x4, offset = 0x4, fixed_abs, tag = 'smem constant byte address 0x4 - core index']
  #allocation1 [shape = 'u32[144,128]{1,0:T(1,128)}', space=vmem, size = 0x12000, scoped, tag = 'internal scratch']
  %s0 = inlined_call_operand.vmem [shape: bf16[32,576], index: 0, kind: input, shape index: {}]
  %s1 = inlined_call_operand.vmem [shape: bf16[576,128], index: 1, kind: input, shape index: {}]
  %s2 = inlined_call_operand.vmem [shape: f32[1,128], index: 2, kind: input, shape index: {}]
  %s3 = inlined_call_operand.vmem [shape: bf16[32,128], index: 3, kind: output, shape index: {}]
  %s4 = sld [smem:[#allocation0]]
  $region45: #{backbone_base_forward.6} parent=0
    _
  %s6 = ssub.s32 1, %s4
  %s7 = scalar_select 0, %s6, %s4
  loop: start=0, step=1, limit=4
  $region2: #{backbone_base_forward.6} parent=0 // loop_pre_header
    _
  $region3: #{backbone_base_forward.6} parent=0 // loop_header
    %s9 = sphi 0, %s13
    %p10 = scmp.ge.s32.totalorder %s9, 4
    %s16 = sphi 0, %s28
    %s17 = sphi 0, %s24
    %s18 = sphi 0, %s16
    %s19 = sphi 0, %s17
    %s20 = sphi 0, %s18
    %s21 = sphi 0, %s19
    %s31 = sphi 0, %s33
    %s34 = sphi 0, %s31
    %s35 = sphi 0, %s34
    %s51 = sphi 0, %s35
    %s57 = sphi 0, %s59
    %s60 = sphi 0, %s57
    %s61 = sphi 0, %s60
    %s77 = sphi 0, %s61
    %s83 = sphi 0, %s85
    %s86 = sphi 0, %s83
    %s87 = sphi 0, %s86
    %s103 = sphi 0, %s87
    %s111 = sphi 0, %s113
    %s114 = sphi 0, %s111
    %s115 = sphi 0, %s114
    %s131 = sphi 0, %s115
  $region4: #{backbone_base_forward.6} parent=0 // loop_header_branch
    %12 = sbr.rel (%p10) target = $region8
  $region5: #{backbone_base_forward.6} parent=0 // loop_body
    %s14 = ssub.s32 %s9, 1
    %s15 = ssub.s32 %s9, 2
    %s22 = sadd.s32 1, %s17
    %p23 = scmp.ge.s32.totalorder %s22, 1
    %s24 = scalar_select %p23, 0, %s22
    %s25 = sadd.s32 1, %s16
    %s26 = scalar_select %p23, %s25, %s16
    %p27 = scmp.ge.s32.totalorder %s26, 2
    %s28 = scalar_select %p27, 0, %s26
    %s29 = ssub.s32 %s16, %s28
    %p30 = scmp.eq.s32.totalorder %s29, 0
    %s32 = sadd.s32 %s31, 1
    %s33 = scalar_select %p30, %s31, %s32
    %p36 = pneg %p30
    %p37 = scmp.eq.s32.totalorder %s9, 1
    %p38 = por %p36, %p37
    %p39 = scmp.ne.s32.totalorder %s31, %s34
    %p40 = scmp.eq.s32.totalorder %s9, 0
    %p41 = por %p39, %p40
    %p42 = scmp.ne.s32.totalorder %s31, %s34
    %p43 = scmp.eq.s32.totalorder %s14, 1
    %p44 = por %p42, %p43
    %p45 = scmp.ne.s32.totalorder %s34, %s35
    %p46 = scmp.eq.s32.totalorder %s14, 0
    %p47 = por %p45, %p46
    %p48 = scmp.ne.s32.totalorder %s34, %s35
    %p49 = scmp.eq.s32.totalorder %s15, 1
    %p50 = por %p48, %p49
    %p52 = scmp.ne.s32.totalorder %s35, %s51
    %p53 = scmp.eq.s32.totalorder %s15, 0
    %p54 = por %p52, %p53
    %s55 = ssub.s32 %s17, %s24
    %p56 = scmp.eq.s32.totalorder %s55, 0
    %s58 = sadd.s32 %s57, 1
    %s59 = scalar_select %p56, %s57, %s58
    %p62 = pneg %p56
    %p63 = scmp.eq.s32.totalorder %s9, 1
    %p64 = por %p62, %p63
    %p65 = scmp.ne.s32.totalorder %s57, %s60
    %p66 = scmp.eq.s32.totalorder %s9, 0
    %p67 = por %p65, %p66
    %p68 = scmp.ne.s32.totalorder %s57, %s60
    %p69 = scmp.eq.s32.totalorder %s14, 1
    %p70 = por %p68, %p69
    %p71 = scmp.ne.s32.totalorder %s60, %s61
    %p72 = scmp.eq.s32.totalorder %s14, 0
    %p73 = por %p71, %p72
    %p74 = scmp.ne.s32.totalorder %s60, %s61
    %p75 = scmp.eq.s32.totalorder %s15, 1
    %p76 = por %p74, %p75
    %p78 = scmp.ne.s32.totalorder %s61, %s77
    %p79 = scmp.eq.s32.totalorder %s15, 0
    %p80 = por %p78, %p79
    %s81 = ssub.s32 %s17, %s24
    %p82 = scmp.eq.s32.totalorder %s81, 0
    %s84 = sadd.s32 %s83, 1
    %s85 = scalar_select %p82, %s83, %s84
    %p88 = pneg %p82
    %p89 = scmp.eq.s32.totalorder %s9, 1
    %p90 = por %p88, %p89
    %p91 = scmp.ne.s32.totalorder %s83, %s86
    %p92 = scmp.eq.s32.totalorder %s9, 0
    %p93 = por %p91, %p92
    %p94 = scmp.ne.s32.totalorder %s83, %s86
    %p95 = scmp.eq.s32.totalorder %s14, 1
    %p96 = por %p94, %p95
    %p97 = scmp.ne.s32.totalorder %s86, %s87
    %p98 = scmp.eq.s32.totalorder %s14, 0
    %p99 = por %p97, %p98
    %p100 = scmp.ne.s32.totalorder %s86, %s87
    %p101 = scmp.eq.s32.totalorder %s15, 1
    %p102 = por %p100, %p101
    %p104 = scmp.ne.s32.totalorder %s87, %s103
    %p105 = scmp.eq.s32.totalorder %s15, 0
    %p106 = por %p104, %p105
    %s107 = ssub.s32 %s16, %s28
    %s108 = ssub.s32 %s17, %s24
    %s109 = sor.u32 %s107, %s108
    %p110 = scmp.eq.s32.totalorder %s109, 0
    %s112 = sadd.s32 %s111, 1
    %s113 = scalar_select %p110, %s111, %s112
    %p116 = pneg %p110
    %p117 = scmp.eq.s32.totalorder %s9, 1
    %p118 = por %p116, %p117
    %p119 = scmp.ne.s32.totalorder %s111, %s114
    %p120 = scmp.eq.s32.totalorder %s9, 0
    %p121 = por %p119, %p120
    %p122 = scmp.ne.s32.totalorder %s111, %s114
    %p123 = scmp.eq.s32.totalorder %s14, 1
    %p124 = por %p122, %p123
    %p125 = scmp.ne.s32.totalorder %s114, %s115
    %p126 = scmp.eq.s32.totalorder %s14, 0
    %p127 = por %p125, %p126
    %p128 = scmp.ne.s32.totalorder %s114, %s115
    %p129 = scmp.eq.s32.totalorder %s15, 1
    %p130 = por %p128, %p129
    %p132 = scmp.ne.s32.totalorder %s115, %s131
    %p133 = scmp.eq.s32.totalorder %s15, 0
    %p134 = por %p132, %p133
    %p135 = scmp.le.s32.totalorder 1, %s9
    %p136 = scmp.lt.s32.totalorder %s9, 3
    %p137 = pnand %p135, %p136
    %p138 = pneg %p137
    // Predicated region
    $region9: #{backbone_base_forward.6} parent=5 // pred_check
      _
    $region10: #{backbone_base_forward.6} parent=5 // pred_check_branch
      %140 = sbr.rel (%p137) target = $region12
    $region11: #{backbone_base_forward.6} parent=5 // pred_region
      %s141 = ssub.s32 %s9, 1
      // Predicated region
      $region13: #{backbone_base_forward.6} parent=11 // pred_check
        %p142 = pneg %p73
      $region14: #{backbone_base_forward.6} parent=11 // pred_check_branch
        %144 = sbr.rel (%p142) target = $region16
      $region15: #{backbone_base_forward.6} parent=11 // pred_region
        %p145 = scmp.lt.s32.totalorder %s19, 0
        %s146 = scalar_select %p145, %s19, 0
        %s147 = smul.addr %s146, 4
        %s148 = scalar_lea.vmem %s1, %s147
      $region16: #{backbone_base_forward.6} parent=11 // pred_fallthru
        _
      // Predicated region
      $region17: #{backbone_base_forward.6} parent=11 // pred_check
        %p149 = pneg %p99
      $region18: #{backbone_base_forward.6} parent=11 // pred_check_branch
        %151 = sbr.rel (%p149) target = $region20
      $region19: #{backbone_base_forward.6} parent=11 // pred_region
        %p152 = scmp.lt.s32.totalorder %s19, 0
        %s153 = scalar_select %p152, %s19, 0
        %s154 = scalar_lea.vmem %s2, %s153
      $region20: #{backbone_base_forward.6} parent=11 // pred_fallthru
        _
    $region12: #{backbone_base_forward.6} parent=5 // pred_fallthru
      _
    %p155 = scmp.lt.s32.totalorder %s9, 2
    // Predicated region
    $region21: #{backbone_base_forward.6} parent=5 // pred_check
      %p156 = pneg %p155
    $region22: #{backbone_base_forward.6} parent=5 // pred_check_branch
      %158 = sbr.rel (%p156) target = $region24
    $region23: #{backbone_base_forward.6} parent=5 // pred_region
      // Predicated region
      $region25: #{backbone_base_forward.6} parent=23 // pred_check
        %p159 = pneg %p41
      $region26: #{backbone_base_forward.6} parent=23 // pred_check_branch
        %161 = sbr.rel (%p159) target = $region28
      $region27: #{backbone_base_forward.6} parent=23 // pred_region
        %s162 = smul.u32 2, %s16
        %p163 = scmp.lt.s32.totalorder %s162, 3
        %s164 = scalar_select %p163, %s162, 3
        %s165 = smul.addr %s164, 5
        %s166 = smul.addr %s165, 4
        %s167 = scalar_lea.vmem %s0, %s166
        %s168 = smul.u32 2, %s16
      $region28: #{backbone_base_forward.6} parent=23 // pred_fallthru
        _
    $region24: #{backbone_base_forward.6} parent=5 // pred_fallthru
      _
    %p169 = scmp.le.s32.totalorder 1, %s9
    %p170 = scmp.lt.s32.totalorder %s9, 3
    %p171 = pnand %p169, %p170
    %p172 = pneg %p171
    // Predicated region
    $region29: #{backbone_base_forward.6} parent=5 // pred_check
      _
    $region30: #{backbone_base_forward.6} parent=5 // pred_check_branch
      %174 = sbr.rel (%p171) target = $region32
    $region31: #{backbone_base_forward.6} parent=5 // pred_region
      %s175 = ssub.s32 %s9, 1
      %s176 = smul.u32 2, %s18
      %p177 = scmp.lt.s32.totalorder %s176, 3
      %s178 = scalar_select %p177, %s176, 3
      %s179 = smul.addr %s178, 5
      %s180 = smul.addr %s179, 4
      %s181 = scalar_lea.vmem %s0, %s180
      %p182 = pneg %p47
      %p183 = pneg %p44
      %p184 = scmp.lt.s32.totalorder %s19, 0
      %s185 = scalar_select %p184, %s19, 0
      %s186 = smul.addr %s185, 4
      %s187 = scalar_lea.vmem %s1, %s186
      %p188 = pneg %p73
      %p189 = pneg %p70
      %p190 = scmp.lt.s32.totalorder %s19, 0
      %s191 = scalar_select %p190, %s19, 0
      %s192 = scalar_lea.vmem %s2, %s191
      %p193 = pneg %p99
      %p194 = pneg %p96
      %p195 = pneg %p127
      %p196 = pneg %p124
      %s197 = smul.u32 2, %s18
      %p198 = scmp.lt.s32.totalorder %s197, 3
      %s199 = scalar_select %p198, %s197, 3
      %p200 = scmp.lt.s32.totalorder %s19, 0
      %s201 = scalar_select %p200, %s19, 0
      %s202 = sadd.s32 %s201, %s199
      %s203 = smul.addr %s202, 4
      %s204 = scalar_lea.vmem %s3, %s203
      %s205 = smul.u32 2, %s18
      %p206 = scmp.lt.s32.totalorder %s205, 3
      %s207 = scalar_select %p206, %s205, 3
      %s208 = smul.addr %s207, 5
      %s209 = smul.addr %s208, 4
      %s210 = scalar_lea.vmem %s0, %s209
      %s211 = smul.u32 2, %s18
      %p212 = scmp.lt.s32.totalorder %s19, 0
      %s213 = scalar_select %p212, %s19, 0
      %s214 = smul.addr %s213, 4
      %s215 = scalar_lea.vmem %s1, %s214
      %p216 = scmp.lt.s32.totalorder %s19, 0
      %s217 = scalar_select %p216, %s19, 0
      %s218 = scalar_lea.vmem %s2, %s217
      %s219 = smul.u32 2, %s18
      %p220 = scmp.lt.s32.totalorder %s219, 3
      %s221 = scalar_select %p220, %s219, 3
      %p222 = scmp.lt.s32.totalorder %s19, 0
      %s223 = scalar_select %p222, %s19, 0
      %s224 = sadd.s32 %s223, %s221
      %s225 = smul.addr %s224, 4
      %s226 = scalar_lea.vmem %s3, %s225
      %s227 = smul.u32 2, %s18
      %v229 = vld [vmem:[%s210] sm:$0xff]
      %v230 = vld [vmem:[%s210 + $0x8] sm:$0xff]
      %v231 = vld [vmem:[%s210 + $0x10] sm:$0xf]
      %v232 = vld [vmem:[%s210 + $0x14] sm:$0xff]
      %v233 = vld [vmem:[%s210 + $0x1c] sm:$0xff]
      %v234 = vld [vmem:[%s210 + $0x24] sm:$0xf]
      %v235 = vld [vmem:[%s215] sm:$0xf]
      %v236 = vld [vmem:[%s215 + $0x4] sm:$0xf]
      %v237 = vld [vmem:[%s215 + $0x8] sm:$0xf]
      %v238 = vld [vmem:[%s215 + $0xc] sm:$0xf]
      %v239 = vld [vmem:[%s215 + $0x10] sm:$0xf]
      %v240 = vld [vmem:[%s215 + $0x14] sm:$0xf]
      %v241 = vld [vmem:[%s215 + $0x18] sm:$0xf]
      %v242 = vld [vmem:[%s215 + $0x1c] sm:$0xf]
      %v243 = vld [vmem:[%s215 + $0x20] sm:$0xf]
      %v244 = vld [vmem:[%s215 + $0x24] sm:$0xf]
      %v245 = vld [vmem:[%s215 + $0x28] sm:$0xf]
      %v246 = vld [vmem:[%s215 + $0x2c] sm:$0xf]
      %v247 = vld [vmem:[%s215 + $0x30] sm:$0xf]
      %v248 = vld [vmem:[%s215 + $0x34] sm:$0xf]
      %v249 = vld [vmem:[%s215 + $0x38] sm:$0xf]
      %v250 = vld [vmem:[%s215 + $0x3c] sm:$0xf]
      %v251 = vld [vmem:[%s215 + $0x40] sm:$0xf]
      %v252 = vld [vmem:[%s215 + $0x44] sm:$0xf]
      %v253 = vld [vmem:[%s215 + $0x48] sm:$0xf]
      %v254 = vld [vmem:[%s215 + $0x4c] sm:$0xf]
      %v255 = vld [vmem:[%s215 + $0x50] sm:$0xf]
      %v256 = vld [vmem:[%s215 + $0x54] sm:$0xf]
      %v257 = vld [vmem:[%s215 + $0x58] sm:$0xf]
      %v258 = vld [vmem:[%s215 + $0x5c] sm:$0xf]
      %v259 = vld [vmem:[%s215 + $0x60] sm:$0xf]
      %v260 = vld [vmem:[%s215 + $0x64] sm:$0xf]
      %v261 = vld [vmem:[%s215 + $0x68] sm:$0xf]
      %v262 = vld [vmem:[%s215 + $0x6c] sm:$0xf]
      %v263 = vld [vmem:[%s215 + $0x70] sm:$0xf]
      %v264 = vld [vmem:[%s215 + $0x74] sm:$0xf]
      %v265 = vld [vmem:[%s215 + $0x78] sm:$0xf]
      %v266 = vld [vmem:[%s215 + $0x7c] sm:$0xf]
      %v267 = vld [vmem:[%s215 + $0x80] sm:$0xf]
      %v268 = vld [vmem:[%s215 + $0x84] sm:$0xf]
      %v269 = vld [vmem:[%s215 + $0x88] sm:$0xf]
      %v270 = vld [vmem:[%s215 + $0x8c] sm:$0xf]
      %v271 = vld [vmem:[%s215 + $0x90] sm:$0xf]
      %v272 = vld [vmem:[%s215 + $0x94] sm:$0xf]
      %v273 = vld [vmem:[%s215 + $0x98] sm:$0xf]
      %v274 = vld [vmem:[%s215 + $0x9c] sm:$0xf]
      %v275 = vld [vmem:[%s215 + $0xa0] sm:$0xf]
      %v276 = vld [vmem:[%s215 + $0xa4] sm:$0xf]
      %v277 = vld [vmem:[%s215 + $0xa8] sm:$0xf]
      %v278 = vld [vmem:[%s215 + $0xac] sm:$0xf]
      %v279 = vld [vmem:[%s215 + $0xb0] sm:$0xf]
      %v280 = vld [vmem:[%s215 + $0xb4] sm:$0xf]
      %v281 = vld [vmem:[%s215 + $0xb8] sm:$0xf]
      %v282 = vld [vmem:[%s215 + $0xbc] sm:$0xf]
      %v283 = vld [vmem:[%s215 + $0xc0] sm:$0xf]
      %v284 = vld [vmem:[%s215 + $0xc4] sm:$0xf]
      %v285 = vld [vmem:[%s215 + $0xc8] sm:$0xf]
      %v286 = vld [vmem:[%s215 + $0xcc] sm:$0xf]
      %v287 = vld [vmem:[%s215 + $0xd0] sm:$0xf]
      %v288 = vld [vmem:[%s215 + $0xd4] sm:$0xf]
      %v289 = vld [vmem:[%s215 + $0xd8] sm:$0xf]
      %v290 = vld [vmem:[%s215 + $0xdc] sm:$0xf]
      %v291 = vld [vmem:[%s215 + $0xe0] sm:$0xf]
      %v292 = vld [vmem:[%s215 + $0xe4] sm:$0xf]
      %v293 = vld [vmem:[%s215 + $0xe8] sm:$0xf]
      %v294 = vld [vmem:[%s215 + $0xec] sm:$0xf]
      %v295 = vld [vmem:[%s215 + $0xf0] sm:$0xf]
      %v296 = vld [vmem:[%s215 + $0xf4] sm:$0xf]
      %v297 = vld [vmem:[%s215 + $0xf8] sm:$0xf]
      %v298 = vld [vmem:[%s215 + $0xfc] sm:$0xf]
      %v299 = vld [vmem:[%s215 + $0x100] sm:$0xf]
      %v300 = vld [vmem:[%s215 + $0x104] sm:$0xf]
      %v301 = vld [vmem:[%s215 + $0x108] sm:$0xf]
      %v302 = vld [vmem:[%s215 + $0x10c] sm:$0xf]
      %v303 = vld [vmem:[%s215 + $0x110] sm:$0xf]
      %v304 = vld [vmem:[%s215 + $0x114] sm:$0xf]
      %v305 = vld [vmem:[%s215 + $0x118] sm:$0xf]
      %v306 = vld [vmem:[%s215 + $0x11c] sm:$0xf]
      %v307 = vld [vmem:[%s218] sm:$0x1]
      %v309 = vlaneseq
      %v310 = vshrl.u32 %v309, 7
      %v311 = vsub.s32 0, %v310
      %v312 = vrot.slane %v307, %v311
      %v320 = vunpack.c.l.b16 %v229
      %v321 = vunpack.c.h.b16 %v229
      %v322 = vunpack.c.l.b16 %v230
      %v323 = vunpack.c.h.b16 %v230
      %v324 = vunpack.c.l.b16 %v231
      %v325 = vunpack.c.l.b16 %v232
      %v326 = vunpack.c.h.b16 %v232
      %v327 = vunpack.c.l.b16 %v233
      %v328 = vunpack.c.h.b16 %v233
      %v329 = vunpack.c.l.b16 %v234
      %v330 = vpack.c.b16 %v325, %v320
      %v331 = vpack.c.b16 %v326, %v321
      %v332 = vpack.c.b16 %v327, %v322
      %v333 = vpack.c.b16 %v328, %v323
      %v334 = vpack.c.b16 %v329, %v324
      %v411 = vunpack.c.l.b16 %v235
      %v412 = vunpack.c.l.b16 %v236
      %v413 = vunpack.c.l.b16 %v237
      %v414 = vunpack.c.l.b16 %v238
      %v415 = vunpack.c.l.b16 %v239
      %v416 = vunpack.c.l.b16 %v240
      %v417 = vunpack.c.l.b16 %v241
      %v418 = vunpack.c.l.b16 %v242
      %v419 = vunpack.c.l.b16 %v243
      %v420 = vunpack.c.l.b16 %v244
      %v421 = vunpack.c.l.b16 %v245
      %v422 = vunpack.c.l.b16 %v246
      %v423 = vunpack.c.l.b16 %v247
      %v424 = vunpack.c.l.b16 %v248
      %v425 = vunpack.c.l.b16 %v249
      %v426 = vunpack.c.l.b16 %v250
      %v427 = vunpack.c.l.b16 %v251
      %v428 = vunpack.c.l.b16 %v252
      %v429 = vunpack.c.l.b16 %v253
      %v430 = vunpack.c.l.b16 %v254
      %v431 = vunpack.c.l.b16 %v255
      %v432 = vunpack.c.l.b16 %v256
      %v433 = vunpack.c.l.b16 %v257
      %v434 = vunpack.c.l.b16 %v258
      %v435 = vunpack.c.l.b16 %v259
      %v436 = vunpack.c.l.b16 %v260
      %v437 = vunpack.c.l.b16 %v261
      %v438 = vunpack.c.l.b16 %v262
      %v439 = vunpack.c.l.b16 %v263
      %v440 = vunpack.c.l.b16 %v264
      %v441 = vunpack.c.l.b16 %v265
      %v442 = vunpack.c.l.b16 %v266
      %v443 = vunpack.c.l.b16 %v267
      %v444 = vunpack.c.l.b16 %v268
      %v445 = vunpack.c.l.b16 %v269
      %v446 = vunpack.c.l.b16 %v270
      %v447 = vunpack.c.l.b16 %v271
      %v448 = vunpack.c.l.b16 %v272
      %v449 = vunpack.c.l.b16 %v273
      %v450 = vunpack.c.l.b16 %v274
      %v451 = vunpack.c.l.b16 %v275
      %v452 = vunpack.c.l.b16 %v276
      %v453 = vunpack.c.l.b16 %v277
      %v454 = vunpack.c.l.b16 %v278
      %v455 = vunpack.c.l.b16 %v279
      %v456 = vunpack.c.l.b16 %v280
      %v457 = vunpack.c.l.b16 %v281
      %v458 = vunpack.c.l.b16 %v282
      %v459 = vunpack.c.l.b16 %v283
      %v460 = vunpack.c.l.b16 %v284
      %v461 = vunpack.c.l.b16 %v285
      %v462 = vunpack.c.l.b16 %v286
      %v463 = vunpack.c.l.b16 %v287
      %v464 = vunpack.c.l.b16 %v288
      %v465 = vunpack.c.l.b16 %v289
      %v466 = vunpack.c.l.b16 %v290
      %v467 = vunpack.c.l.b16 %v291
      %v468 = vunpack.c.l.b16 %v292
      %v469 = vunpack.c.l.b16 %v293
      %v470 = vunpack.c.l.b16 %v294
      %v471 = vunpack.c.l.b16 %v295
      %v472 = vunpack.c.l.b16 %v296
      %v473 = vunpack.c.l.b16 %v297
      %v474 = vunpack.c.l.b16 %v298
      %v475 = vunpack.c.l.b16 %v299
      %v476 = vunpack.c.l.b16 %v300
      %v477 = vunpack.c.l.b16 %v301
      %v478 = vunpack.c.l.b16 %v302
      %v479 = vunpack.c.l.b16 %v303
      %v480 = vunpack.c.l.b16 %v304
      %v481 = vunpack.c.l.b16 %v305
      %v482 = vunpack.c.l.b16 %v306
      %v483 = vpack.c.b16 %v412, %v411
      %v484 = vpack.c.b16 %v414, %v413
      %v485 = vpack.c.b16 %v416, %v415
      %v486 = vpack.c.b16 %v418, %v417
      %v487 = vpack.c.b16 %v420, %v419
      %v488 = vpack.c.b16 %v422, %v421
      %v489 = vpack.c.b16 %v424, %v423
      %v490 = vpack.c.b16 %v426, %v425
      %v491 = vpack.c.b16 %v428, %v427
      %v492 = vpack.c.b16 %v430, %v429
      %v493 = vpack.c.b16 %v432, %v431
      %v494 = vpack.c.b16 %v434, %v433
      %v495 = vpack.c.b16 %v436, %v435
      %v496 = vpack.c.b16 %v438, %v437
      %v497 = vpack.c.b16 %v440, %v439
      %v498 = vpack.c.b16 %v442, %v441
      %v499 = vpack.c.b16 %v444, %v443
      %v500 = vpack.c.b16 %v446, %v445
      %v501 = vpack.c.b16 %v448, %v447
      %v502 = vpack.c.b16 %v450, %v449
      %v503 = vpack.c.b16 %v452, %v451
      %v504 = vpack.c.b16 %v454, %v453
      %v505 = vpack.c.b16 %v456, %v455
      %v506 = vpack.c.b16 %v458, %v457
      %v507 = vpack.c.b16 %v460, %v459
      %v508 = vpack.c.b16 %v462, %v461
      %v509 = vpack.c.b16 %v464, %v463
      %v510 = vpack.c.b16 %v466, %v465
      %v511 = vpack.c.b16 %v468, %v467
      %v512 = vpack.c.b16 %v470, %v469
      %v513 = vpack.c.b16 %v472, %v471
      %v514 = vpack.c.b16 %v474, %v473
      %v515 = vpack.c.b16 %v476, %v475
      %v516 = vpack.c.b16 %v478, %v477
      %v517 = vpack.c.b16 %v480, %v479
      %v518 = vpack.c.b16 %v482, %v481
      %vm555 = vcmask 523264
      %v557 = vsel %vm555, %v334, 0
      %559 = vmatprep.subr.bf16.mxu0 0
      %560 = vmatpush1.bf16.msra.mxu0 %v483
      %561 = vmatprep.subr.bf16.mxu0 0
      %562 = vmatpush1.bf16.msra.mxu0 %v484
      %563 = vmatprep.subr.bf16.mxu0 0
      %564 = vmatpush1.bf16.msra.mxu0 %v485
      %565 = vmatprep.subr.bf16.mxu0 0
      %566 = vmatpush1.bf16.msra.mxu0 %v486
      %567 = vmatprep.subr.bf16.mxu0 0
      %568 = vmatpush1.bf16.msra.mxu0 %v487
      %569 = vmatprep.subr.bf16.mxu0 0
      %570 = vmatpush1.bf16.msra.mxu0 %v488
      %571 = vmatprep.subr.bf16.mxu0 0
      %572 = vmatpush1.bf16.msra.mxu0 %v489
      %573 = vmatprep.subr.bf16.mxu0 0
      %574 = vmatpush1.bf16.msra.mxu0 %v490
      %575 = vmatprep.subr.bf16.mxu0 0
      %576 = vmatpush1.bf16.msra.mxu0 %v491
      %577 = vmatprep.subr.bf16.mxu0 0
      %578 = vmatpush1.bf16.msra.mxu0 %v492
      %579 = vmatprep.subr.bf16.mxu0 0
      %580 = vmatpush1.bf16.msra.mxu0 %v493
      %581 = vmatprep.subr.bf16.mxu0 0
      %582 = vmatpush1.bf16.msra.mxu0 %v494
      %583 = vmatprep.subr.bf16.mxu0 0
      %584 = vmatpush1.bf16.msra.mxu0 %v495
      %585 = vmatprep.subr.bf16.mxu0 0
      %586 = vmatpush1.bf16.msra.mxu0 %v496
      %587 = vmatprep.subr.bf16.mxu0 0
      %588 = vmatpush1.bf16.msra.mxu0 %v497
      %589 = vmatprep.subr.bf16.mxu0 0
      %590 = vmatpush1.bf16.msra.mxu0 %v498
      %591 = vmatprep.mubr.bf16.mxu0 %v331
      %592 = vmatmul.mubr.bf16.gmra.mrb[0].mxu0 %v330
      %v593 = vpop.f32.mrb[0].mxu0
      %v594 = vadd.f32 %v312, %v593
      %v595 = vpop.f32.mrb[0].mxu0
      %v596 = vpop.f32.mrb[0].mxu0
      %v597 = vadd.f32 %v312, %v596
      %v598 = vpop.f32.mrb[0].mxu0
      %599 = vdwg.mxu0
      %600 = vmatprep.subr.bf16.mxu0 0
      %601 = vmatpush1.bf16.msra.mxu0 %v499
      %602 = vmatprep.subr.bf16.mxu0 0
      %603 = vmatpush1.bf16.msra.mxu0 %v500
      %604 = vmatprep.subr.bf16.mxu0 0
      %605 = vmatpush1.bf16.msra.mxu0 %v501
      %606 = vmatprep.subr.bf16.mxu0 0
      %607 = vmatpush1.bf16.msra.mxu0 %v502
      %608 = vmatprep.subr.bf16.mxu0 0
      %609 = vmatpush1.bf16.msra.mxu0 %v503
      %610 = vmatprep.subr.bf16.mxu0 0
      %611 = vmatpush1.bf16.msra.mxu0 %v504
      %612 = vmatprep.subr.bf16.mxu0 0
      %613 = vmatpush1.bf16.msra.mxu0 %v505
      %614 = vmatprep.subr.bf16.mxu0 0
      %615 = vmatpush1.bf16.msra.mxu0 %v506
      %616 = vmatprep.subr.bf16.mxu0 0
      %617 = vmatpush1.bf16.msra.mxu0 %v507
      %618 = vmatprep.subr.bf16.mxu0 0
      %619 = vmatpush1.bf16.msra.mxu0 %v508
      %620 = vmatprep.subr.bf16.mxu0 0
      %621 = vmatpush1.bf16.msra.mxu0 %v509
      %622 = vmatprep.subr.bf16.mxu0 0
      %623 = vmatpush1.bf16.msra.mxu0 %v510
      %624 = vmatprep.subr.bf16.mxu0 0
      %625 = vmatpush1.bf16.msra.mxu0 %v511
      %626 = vmatprep.subr.bf16.mxu0 0
      %627 = vmatpush1.bf16.msra.mxu0 %v512
      %628 = vmatprep.subr.bf16.mxu0 0
      %629 = vmatpush1.bf16.msra.mxu0 %v513
      %630 = vmatprep.subr.bf16.mxu0 0
      %631 = vmatpush1.bf16.msra.mxu0 %v514
      %632 = vmatprep.mubr.bf16.mxu0 %v333
      %633 = vmatmul.mubr.bf16.gmra.mrb[0].mxu0 %v332
      %v634 = vpop.f32.mrb[0].mxu0
      %v635 = vadd.f32 %v594, %v634
      %v636 = vpop.f32.mrb[0].mxu0
      %v637 = vpop.f32.mrb[0].mxu0
      %v638 = vadd.f32 %v597, %v637
      %v639 = vpop.f32.mrb[0].mxu0
      %640 = vdwg.mxu0
      %641 = vmatprep.subr.bf16.mxu0 0
      %642 = vmatpush1.bf16.msra.mxu0 %v515
      %643 = vmatprep.subr.bf16.mxu0 0
      %644 = vmatpush1.bf16.msra.mxu0 %v516
      %645 = vmatprep.subr.bf16.mxu0 0
      %646 = vmatpush1.bf16.msra.mxu0 %v517
      %647 = vmatprep.subr.bf16.mxu0 0
      %648 = vmatpush1.bf16.msra.mxu0 %v518
      %649 = vmatprep.subr.bf16.mxu0 0
      %650 = vmatpush1.bf16.msra.mxu0 0
      %651 = vmatprep.subr.bf16.mxu0 0
      %652 = vmatpush1.bf16.msra.mxu0 0
      %653 = vmatprep.subr.bf16.mxu0 0
      %654 = vmatpush1.bf16.msra.mxu0 0
      %655 = vmatprep.subr.bf16.mxu0 0
      %656 = vmatpush1.bf16.msra.mxu0 0
      %657 = vmatprep.subr.bf16.mxu0 0
      %658 = vmatpush1.bf16.msra.mxu0 0
      %659 = vmatprep.subr.bf16.mxu0 0
      %660 = vmatpush1.bf16.msra.mxu0 0
      %661 = vmatprep.subr.bf16.mxu0 0
      %662 = vmatpush1.bf16.msra.mxu0 0
      %663 = vmatprep.subr.bf16.mxu0 0
      %664 = vmatpush1.bf16.msra.mxu0 0
      %665 = vmatprep.subr.bf16.mxu0 0
      %666 = vmatpush1.bf16.msra.mxu0 0
      %667 = vmatprep.subr.bf16.mxu0 0
      %668 = vmatpush1.bf16.msra.mxu0 0
      %669 = vmatprep.subr.bf16.mxu0 0
      %670 = vmatpush1.bf16.msra.mxu0 0
      %671 = vmatprep.subr.bf16.mxu0 0
      %672 = vmatpush1.bf16.msra.mxu0 0
      %673 = vmatprep.mubr.bf16.mxu0 0
      %674 = vmatmul.mubr.bf16.gmra.mrb[0].mxu0 %v557
      %v675 = vpop.f32.mrb[0].mxu0
      %v676 = vadd.f32 %v635, %v675
      %v677 = vpop.f32.mrb[0].mxu0
      %v678 = vpop.f32.mrb[0].mxu0
      %v679 = vadd.f32 %v638, %v678
      %v680 = vpop.f32.mrb[0].mxu0
      %681 = vdwg.mxu0
      %v682 = vmax.f32 %v676, 0.0
      %v683 = vmax.f32 %v679, 0.0
      %v684 = vpack.c.bf16 %v683, %v682
      %v686 = vunpack.c.l.b16 %v684
      %v687 = vunpack.c.h.b16 %v684
      %v688 = vpack.c.b16 %v686, %v686
      %v689 = vpack.c.b16 %v687, %v687
      %692 = vst [vmem:[%s226] sm:$0xf] %v688
      %693 = vst [vmem:[%s226 + $0x4] sm:$0xf] %v689
      %s694 = smul.u32 2, %s18
      %p695 = scmp.lt.s32.totalorder %s694, 3
      %s696 = scalar_select %p695, %s694, 3
      %p697 = scmp.lt.s32.totalorder %s19, 0
      %s698 = scalar_select %p697, %s19, 0
      %s699 = sadd.s32 %s698, %s696
      %s700 = smul.addr %s699, 4
      %s701 = scalar_lea.vmem %s3, %s700
      // Predicated region
      $region33: #{backbone_base_forward.6} parent=31 // pred_check
        %p702 = pneg %p124
      $region34: #{backbone_base_forward.6} parent=31 // pred_check_branch
        %704 = sbr.rel (%p702) target = $region36
      $region35: #{backbone_base_forward.6} parent=31 // pred_region
        %s705 = smul.u32 2, %s18
      $region36: #{backbone_base_forward.6} parent=31 // pred_fallthru
        _
    $region32: #{backbone_base_forward.6} parent=5 // pred_fallthru
      _
    %p706 = scmp.le.s32.totalorder 2, %s9
    // Predicated region
    $region37: #{backbone_base_forward.6} parent=5 // pred_check
      %p707 = pneg %p706
    $region38: #{backbone_base_forward.6} parent=5 // pred_check_branch
      %709 = sbr.rel (%p707) target = $region40
    $region39: #{backbone_base_forward.6} parent=5 // pred_region
      %s710 = ssub.s32 %s9, 2
      // Predicated region
      $region41: #{backbone_base_forward.6} parent=39 // pred_check
        %p711 = pneg %p130
      $region42: #{backbone_base_forward.6} parent=39 // pred_check_branch
        %713 = sbr.rel (%p711) target = $region44
      $region43: #{backbone_base_forward.6} parent=39 // pred_region
        %s714 = smul.u32 2, %s20
        %p715 = scmp.lt.s32.totalorder %s714, 3
        %s716 = scalar_select %p715, %s714, 3
        %p717 = scmp.lt.s32.totalorder %s21, 0
        %s718 = scalar_select %p717, %s21, 0
        %s719 = sadd.s32 %s718, %s716
        %s720 = smul.addr %s719, 4
        %s721 = scalar_lea.vmem %s3, %s720
      $region44: #{backbone_base_forward.6} parent=39 // pred_fallthru
        _
    $region40: #{backbone_base_forward.6} parent=5 // pred_fallthru
      _
  $region6: #{backbone_base_forward.6} parent=0 // loop_footer
    %s13 = sadd.s32 1, %s9
  $region7: #{backbone_base_forward.6} parent=0 // loop_footer_branch
    %8 = sbr.rel target = $region3
  $region8: #{backbone_base_forward.6} parent=0 // loop_exit
    _

// kernel: backbone_base_forward.7
$region0: #{backbone_base_forward.7}
  #allocation0 [shape = 'u32[]', space=smem, size = 0x4, offset = 0x4, fixed_abs, tag = 'smem constant byte address 0x4 - core index']
  #allocation1 [shape = 'u32[144,128]{1,0:T(1,128)}', space=vmem, size = 0x12000, scoped, tag = 'internal scratch']
  %s0 = inlined_call_operand.vmem [shape: bf16[8,1152], index: 0, kind: input, shape index: {}]
  %s1 = inlined_call_operand.vmem [shape: bf16[1152,256], index: 1, kind: input, shape index: {}]
  %s2 = inlined_call_operand.vmem [shape: f32[1,256], index: 2, kind: input, shape index: {}]
  %s3 = inlined_call_operand.vmem [shape: bf16[8,256], index: 3, kind: output, shape index: {}]
  %s4 = sld [smem:[#allocation0]]
  $region86: #{backbone_base_forward.7} parent=0
    _
  %s6 = ssub.s32 1, %s4
  %s7 = scalar_select 0, %s6, %s4
  $region1: #{backbone_base_forward.7} parent=0
    #allocation2 [shape = 'u8[589824]{0}', space=vmem, size = 0x90000, scoped, tag = 'input window, operand 1']
    loop: start=0, step=1, limit=4
    $region2: #{backbone_base_forward.7} parent=1 // loop_pre_header
      _
    $region3: #{backbone_base_forward.7} parent=1 // loop_header
      %s9 = sphi 0, %s13
      %p10 = scmp.ge.s32.totalorder %s9, 4
      %s16 = sphi 0, %s28
      %s17 = sphi 0, %s24
      %s18 = sphi 0, %s16
      %s19 = sphi 0, %s17
      %s20 = sphi 0, %s18
      %s21 = sphi 0, %s19
      %s31 = sphi 0, %s33
      %s34 = sphi 0, %s31
      %s35 = sphi 0, %s34
      %s51 = sphi 0, %s35
      %s57 = sphi 0, %s59
      %s60 = sphi 0, %s57
      %s61 = sphi 0, %s60
      %s77 = sphi 0, %s61
      %s83 = sphi 0, %s85
      %s86 = sphi 0, %s83
      %s87 = sphi 0, %s86
      %s103 = sphi 0, %s87
      %s111 = sphi 0, %s113
      %s114 = sphi 0, %s111
      %s115 = sphi 0, %s114
      %s131 = sphi 0, %s115
    $region4: #{backbone_base_forward.7} parent=1 // loop_header_branch
      %12 = sbr.rel (%p10) target = $region8
    $region5: #{backbone_base_forward.7} parent=1 // loop_body
      %s14 = ssub.s32 %s9, 1
      %s15 = ssub.s32 %s9, 2
      %s22 = sadd.s32 1, %s17
      %p23 = scmp.ge.s32.totalorder %s22, 2
      %s24 = scalar_select %p23, 0, %s22
      %s25 = sadd.s32 1, %s16
      %s26 = scalar_select %p23, %s25, %s16
      %p27 = scmp.ge.s32.totalorder %s26, 1
      %s28 = scalar_select %p27, 0, %s26
      %s29 = ssub.s32 %s16, %s28
      %p30 = scmp.eq.s32.totalorder %s29, 0
      %s32 = sadd.s32 %s31, 1
      %s33 = scalar_select %p30, %s31, %s32
      %p36 = pneg %p30
      %p37 = scmp.eq.s32.totalorder %s9, 1
      %p38 = por %p36, %p37
      %p39 = scmp.ne.s32.totalorder %s31, %s34
      %p40 = scmp.eq.s32.totalorder %s9, 0
      %p41 = por %p39, %p40
      %p42 = scmp.ne.s32.totalorder %s31, %s34
      %p43 = scmp.eq.s32.totalorder %s14, 1
      %p44 = por %p42, %p43
      %p45 = scmp.ne.s32.totalorder %s34, %s35
      %p46 = scmp.eq.s32.totalorder %s14, 0
      %p47 = por %p45, %p46
      %p48 = scmp.ne.s32.totalorder %s34, %s35
      %p49 = scmp.eq.s32.totalorder %s15, 1
      %p50 = por %p48, %p49
      %p52 = scmp.ne.s32.totalorder %s35, %s51
      %p53 = scmp.eq.s32.totalorder %s15, 0
      %p54 = por %p52, %p53
      %s55 = ssub.s32 %s17, %s24
      %p56 = scmp.eq.s32.totalorder %s55, 0
      %s58 = sadd.s32 %s57, 1
      %s59 = scalar_select %p56, %s57, %s58
      %p62 = pneg %p56
      %p63 = scmp.eq.s32.totalorder %s9, 1
      %p64 = por %p62, %p63
      %p65 = scmp.ne.s32.totalorder %s57, %s60
      %p66 = scmp.eq.s32.totalorder %s9, 0
      %p67 = por %p65, %p66
      %p68 = scmp.ne.s32.totalorder %s57, %s60
      %p69 = scmp.eq.s32.totalorder %s14, 1
      %p70 = por %p68, %p69
      %p71 = scmp.ne.s32.totalorder %s60, %s61
      %p72 = scmp.eq.s32.totalorder %s14, 0
      %p73 = por %p71, %p72
      %p74 = scmp.ne.s32.totalorder %s60, %s61
      %p75 = scmp.eq.s32.totalorder %s15, 1
      %p76 = por %p74, %p75
      %p78 = scmp.ne.s32.totalorder %s61, %s77
      %p79 = scmp.eq.s32.totalorder %s15, 0
      %p80 = por %p78, %p79
      %s81 = ssub.s32 %s17, %s24
      %p82 = scmp.eq.s32.totalorder %s81, 0
      %s84 = sadd.s32 %s83, 1
      %s85 = scalar_select %p82, %s83, %s84
      %p88 = pneg %p82
      %p89 = scmp.eq.s32.totalorder %s9, 1
      %p90 = por %p88, %p89
      %p91 = scmp.ne.s32.totalorder %s83, %s86
      %p92 = scmp.eq.s32.totalorder %s9, 0
      %p93 = por %p91, %p92
      %p94 = scmp.ne.s32.totalorder %s83, %s86
      %p95 = scmp.eq.s32.totalorder %s14, 1
      %p96 = por %p94, %p95
      %p97 = scmp.ne.s32.totalorder %s86, %s87
      %p98 = scmp.eq.s32.totalorder %s14, 0
      %p99 = por %p97, %p98
      %p100 = scmp.ne.s32.totalorder %s86, %s87
      %p101 = scmp.eq.s32.totalorder %s15, 1
      %p102 = por %p100, %p101
      %p104 = scmp.ne.s32.totalorder %s87, %s103
      %p105 = scmp.eq.s32.totalorder %s15, 0
      %p106 = por %p104, %p105
      %s107 = ssub.s32 %s16, %s28
      %s108 = ssub.s32 %s17, %s24
      %s109 = sor.u32 %s107, %s108
      %p110 = scmp.eq.s32.totalorder %s109, 0
      %s112 = sadd.s32 %s111, 1
      %s113 = scalar_select %p110, %s111, %s112
      %p116 = pneg %p110
      %p117 = scmp.eq.s32.totalorder %s9, 1
      %p118 = por %p116, %p117
      %p119 = scmp.ne.s32.totalorder %s111, %s114
      %p120 = scmp.eq.s32.totalorder %s9, 0
      %p121 = por %p119, %p120
      %p122 = scmp.ne.s32.totalorder %s111, %s114
      %p123 = scmp.eq.s32.totalorder %s14, 1
      %p124 = por %p122, %p123
      %p125 = scmp.ne.s32.totalorder %s114, %s115
      %p126 = scmp.eq.s32.totalorder %s14, 0
      %p127 = por %p125, %p126
      %p128 = scmp.ne.s32.totalorder %s114, %s115
      %p129 = scmp.eq.s32.totalorder %s15, 1
      %p130 = por %p128, %p129
      %p132 = scmp.ne.s32.totalorder %s115, %s131
      %p133 = scmp.eq.s32.totalorder %s15, 0
      %p134 = por %p132, %p133
      %p135 = scmp.le.s32.totalorder 1, %s9
      %p136 = scmp.lt.s32.totalorder %s9, 3
      %p137 = pnand %p135, %p136
      %p138 = pneg %p137
      // Predicated region
      $region9: #{backbone_base_forward.7} parent=5 // pred_check
        _
      $region10: #{backbone_base_forward.7} parent=5 // pred_check_branch
        %140 = sbr.rel (%p137) target = $region12
      $region11: #{backbone_base_forward.7} parent=5 // pred_region
        %s141 = ssub.s32 %s9, 1
        // Predicated region
        $region13: #{backbone_base_forward.7} parent=11 // pred_check
          %p142 = pneg %p47
        $region14: #{backbone_base_forward.7} parent=11 // pred_check_branch
          %144 = sbr.rel (%p142) target = $region16
        $region15: #{backbone_base_forward.7} parent=11 // pred_region
          %p145 = scmp.lt.s32.totalorder %s18, 0
          %s146 = scalar_select %p145, %s18, 0
          %s147 = smul.addr %s146, 9
          %s148 = smul.addr %s147, 4
          %s149 = scalar_lea.vmem %s0, %s148
        $region16: #{backbone_base_forward.7} parent=11 // pred_fallthru
          _
      $region12: #{backbone_base_forward.7} parent=5 // pred_fallthru
        _
      %p150 = scmp.lt.s32.totalorder %s9, 2
      // Predicated region
      $region17: #{backbone_base_forward.7} parent=5 // pred_check
        %p151 = pneg %p150
      $region18: #{backbone_base_forward.7} parent=5 // pred_check_branch
        %153 = sbr.rel (%p151) target = $region20
      $region19: #{backbone_base_forward.7} parent=5 // pred_region
        // Predicated region
        $region21: #{backbone_base_forward.7} parent=19 // pred_check
          %p154 = pneg %p67
        $region22: #{backbone_base_forward.7} parent=19 // pred_check_branch
          %156 = sbr.rel (%p154) target = $region24
        $region23: #{backbone_base_forward.7} parent=19 // pred_region
          %s157 = sand.u32 %s57, 1
          %s158 = sand.u32 %s57, 1
          %s159 = smul.addr %s158, 576
          %s160 = scalar_lea.vmem [#allocation2], %s159
          %s161 = smul.addr %s17, 4
          %s162 = scalar_lea.vmem %s1, %s161
          // Predicated region
          $region25: #{backbone_base_forward.7} parent=23 // pred_check
            _
          $region26: #{backbone_base_forward.7} parent=23 // pred_check_branch
            %164 = sbr.rel (0) target = $region28
          $region27: #{backbone_base_forward.7} parent=23 // pred_region
            // Predicated region
            $region29: #{backbone_base_forward.7} parent=27 // pred_check
              _
            $region30: #{backbone_base_forward.7} parent=27 // pred_check_branch
              %166 = sbr.rel target = $region32
            $region31: #{backbone_base_forward.7} parent=27 // pred_region
              // Predicated region
              $region44: #{backbone_base_forward.7} parent=31 // pred_check
                _
              $region45: #{backbone_base_forward.7} parent=31 // pred_check_branch
                %467 = sbr.rel (0) target = $region47
              $region46: #{backbone_base_forward.7} parent=31 // pred_region
                loop: start=0, step=1, limit=1
                $region48: #{backbone_base_forward.7} parent=46 // loop_pre_header
                  _
                $region49: #{backbone_base_forward.7} parent=46 // loop_header
                  %s469 = sphi 0, %s473
                  %p470 = scmp.ge.s32.totalorder %s469, 1
                  %s474 = sphi %s162, %s162
                  %s475 = sphi %s160, %s160
                $region50: #{backbone_base_forward.7} parent=46 // loop_header_branch
                  %472 = sbr.rel (%p470) target = $region54
                $region51: #{backbone_base_forward.7} parent=46 // loop_body
                  _
                $region52: #{backbone_base_forward.7} parent=46 // loop_footer
                  %s473 = sadd.s32 1, %s469
                $region53: #{backbone_base_forward.7} parent=46 // loop_footer_branch
                  %468 = sbr.rel target = $region49
                $region54: #{backbone_base_forward.7} parent=46 // loop_exit
                  _
                loop: start=0, step=1, limit=1
                $region55: #{backbone_base_forward.7} parent=46 // loop_pre_header
                  _
                $region56: #{backbone_base_forward.7} parent=46 // loop_header
                  %s478 = sphi 0, %s482
                  %p479 = scmp.ge.s32.totalorder %s478, 1
                  %s483 = sphi %s162, %s162
                  %s484 = sphi %s160, %s160
                $region57: #{backbone_base_forward.7} parent=46 // loop_header_branch
                  %481 = sbr.rel (%p479) target = $region61
                $region58: #{backbone_base_forward.7} parent=46 // loop_body
                  %v485 = vld [vmem:[%s483] sm:$0xf]
                  %486 = vst [vmem:[%s484] sm:$0xf] %v485
                  %v487 = vld [vmem:[%s483 + $0x8] sm:$0xf]
                  %488 = vst [vmem:[%s484 + $0x4] sm:$0xf] %v487
                  %v489 = vld [vmem:[%s483 + $0x10] sm:$0xf]
                  %490 = vst [vmem:[%s484 + $0x8] sm:$0xf] %v489
                  %v491 = vld [vmem:[%s483 + $0x18] sm:$0xf]
                  %492 = vst [vmem:[%s484 + $0xc] sm:$0xf] %v491
                  %v493 = vld [vmem:[%s483 + $0x20] sm:$0xf]
                  %494 = vst [vmem:[%s484 + $0x10] sm:$0xf] %v493
                  %v495 = vld [vmem:[%s483 + $0x28] sm:$0xf]
                  %496 = vst [vmem:[%s484 + $0x14] sm:$0xf] %v495
                  %v497 = vld [vmem:[%s483 + $0x30] sm:$0xf]
                  %498 = vst [vmem:[%s484 + $0x18] sm:$0xf] %v497
                  %v499 = vld [vmem:[%s483 + $0x38] sm:$0xf]
                  %500 = vst [vmem:[%s484 + $0x1c] sm:$0xf] %v499
                  %v501 = vld [vmem:[%s483 + $0x40] sm:$0xf]
                  %502 = vst [vmem:[%s484 + $0x20] sm:$0xf] %v501
                  %v503 = vld [vmem:[%s483 + $0x48] sm:$0xf]
                  %504 = vst [vmem:[%s484 + $0x24] sm:$0xf] %v503
                  %v505 = vld [vmem:[%s483 + $0x50] sm:$0xf]
                  %506 = vst [vmem:[%s484 + $0x28] sm:$0xf] %v505
                  %v507 = vld [vmem:[%s483 + $0x58] sm:$0xf]
                  %508 = vst [vmem:[%s484 + $0x2c] sm:$0xf] %v507
                  %v509 = vld [vmem:[%s483 + $0x60] sm:$0xf]
                  %510 = vst [vmem:[%s484 + $0x30] sm:$0xf] %v509
                  %v511 = vld [vmem:[%s483 + $0x68] sm:$0xf]
                  %512 = vst [vmem:[%s484 + $0x34] sm:$0xf] %v511
                  %v513 = vld [vmem:[%s483 + $0x70] sm:$0xf]
                  %514 = vst [vmem:[%s484 + $0x38] sm:$0xf] %v513
                  %v515 = vld [vmem:[%s483 + $0x78] sm:$0xf]
                  %516 = vst [vmem:[%s484 + $0x3c] sm:$0xf] %v515
                  %v517 = vld [vmem:[%s483 + $0x80] sm:$0xf]
                  %518 = vst [vmem:[%s484 + $0x40] sm:$0xf] %v517
                  %v519 = vld [vmem:[%s483 + $0x88] sm:$0xf]
                  %520 = vst [vmem:[%s484 + $0x44] sm:$0xf] %v519
                  %v521 = vld [vmem:[%s483 + $0x90] sm:$0xf]
                  %522 = vst [vmem:[%s484 + $0x48] sm:$0xf] %v521
                  %v523 = vld [vmem:[%s483 + $0x98] sm:$0xf]
                  %524 = vst [vmem:[%s484 + $0x4c] sm:$0xf] %v523
                  %v525 = vld [vmem:[%s483 + $0xa0] sm:$0xf]
                  %526 = vst [vmem:[%s484 + $0x50] sm:$0xf] %v525
                  %v527 = vld [vmem:[%s483 + $0xa8] sm:$0xf]
                  %528 = vst [vmem:[%s484 + $0x54] sm:$0xf] %v527
                  %v529 = vld [vmem:[%s483 + $0xb0] sm:$0xf]
                  %530 = vst [vmem:[%s484 + $0x58] sm:$0xf] %v529
                  %v531 = vld [vmem:[%s483 + $0xb8] sm:$0xf]
                  %532 = vst [vmem:[%s484 + $0x5c] sm:$0xf] %v531
                  %v533 = vld [vmem:[%s483 + $0xc0] sm:$0xf]
                  %534 = vst [vmem:[%s484 + $0x60] sm:$0xf] %v533
                  %v535 = vld [vmem:[%s483 + $0xc8] sm:$0xf]
                  %536 = vst [vmem:[%s484 + $0x64] sm:$0xf] %v535
                  %v537 = vld [vmem:[%s483 + $0xd0] sm:$0xf]
                  %538 = vst [vmem:[%s484 + $0x68] sm:$0xf] %v537
                  %v539 = vld [vmem:[%s483 + $0xd8] sm:$0xf]
                  %540 = vst [vmem:[%s484 + $0x6c] sm:$0xf] %v539
                  %v541 = vld [vmem:[%s483 + $0xe0] sm:$0xf]
                  %542 = vst [vmem:[%s484 + $0x70] sm:$0xf] %v541
                  %v543 = vld [vmem:[%s483 + $0xe8] sm:$0xf]
                  %544 = vst [vmem:[%s484 + $0x74] sm:$0xf] %v543
                  %v545 = vld [vmem:[%s483 + $0xf0] sm:$0xf]
                  %546 = vst [vmem:[%s484 + $0x78] sm:$0xf] %v545
                  %v547 = vld [vmem:[%s483 + $0xf8] sm:$0xf]
                  %548 = vst [vmem:[%s484 + $0x7c] sm:$0xf] %v547
                  %v549 = vld [vmem:[%s483 + $0x100] sm:$0xf]
                  %550 = vst [vmem:[%s484 + $0x80] sm:$0xf] %v549
                  %v551 = vld [vmem:[%s483 + $0x108] sm:$0xf]
                  %552 = vst [vmem:[%s484 + $0x84] sm:$0xf] %v551
                  %v553 = vld [vmem:[%s483 + $0x110] sm:$0xf]
                  %554 = vst [vmem:[%s484 + $0x88] sm:$0xf] %v553
                  %v555 = vld [vmem:[%s483 + $0x118] sm:$0xf]
                  %556 = vst [vmem:[%s484 + $0x8c] sm:$0xf] %v555
                  %v557 = vld [vmem:[%s483 + $0x120] sm:$0xf]
                  %558 = vst [vmem:[%s484 + $0x90] sm:$0xf] %v557
                  %v559 = vld [vmem:[%s483 + $0x128] sm:$0xf]
                  %560 = vst [vmem:[%s484 + $0x94] sm:$0xf] %v559
                  %v561 = vld [vmem:[%s483 + $0x130] sm:$0xf]
                  %562 = vst [vmem:[%s484 + $0x98] sm:$0xf] %v561
                  %v563 = vld [vmem:[%s483 + $0x138] sm:$0xf]
                  %564 = vst [vmem:[%s484 + $0x9c] sm:$0xf] %v563
                  %v565 = vld [vmem:[%s483 + $0x140] sm:$0xf]
                  %566 = vst [vmem:[%s484 + $0xa0] sm:$0xf] %v565
                  %v567 = vld [vmem:[%s483 + $0x148] sm:$0xf]
                  %568 = vst [vmem:[%s484 + $0xa4] sm:$0xf] %v567
                  %v569 = vld [vmem:[%s483 + $0x150] sm:$0xf]
                  %570 = vst [vmem:[%s484 + $0xa8] sm:$0xf] %v569
                  %v571 = vld [vmem:[%s483 + $0x158] sm:$0xf]
                  %572 = vst [vmem:[%s484 + $0xac] sm:$0xf] %v571
                  %v573 = vld [vmem:[%s483 + $0x160] sm:$0xf]
                  %574 = vst [vmem:[%s484 + $0xb0] sm:$0xf] %v573
                  %v575 = vld [vmem:[%s483 + $0x168] sm:$0xf]
                  %576 = vst [vmem:[%s484 + $0xb4] sm:$0xf] %v575
                  %v577 = vld [vmem:[%s483 + $0x170] sm:$0xf]
                  %578 = vst [vmem:[%s484 + $0xb8] sm:$0xf] %v577
                  %v579 = vld [vmem:[%s483 + $0x178] sm:$0xf]
                  %580 = vst [vmem:[%s484 + $0xbc] sm:$0xf] %v579
                  %v581 = vld [vmem:[%s483 + $0x180] sm:$0xf]
                  %582 = vst [vmem:[%s484 + $0xc0] sm:$0xf] %v581
                  %v583 = vld [vmem:[%s483 + $0x188] sm:$0xf]
                  %584 = vst [vmem:[%s484 + $0xc4] sm:$0xf] %v583
                  %v585 = vld [vmem:[%s483 + $0x190] sm:$0xf]
                  %586 = vst [vmem:[%s484 + $0xc8] sm:$0xf] %v585
                  %v587 = vld [vmem:[%s483 + $0x198] sm:$0xf]
                  %588 = vst [vmem:[%s484 + $0xcc] sm:$0xf] %v587
                  %v589 = vld [vmem:[%s483 + $0x1a0] sm:$0xf]
                  %590 = vst [vmem:[%s484 + $0xd0] sm:$0xf] %v589
                  %v591 = vld [vmem:[%s483 + $0x1a8] sm:$0xf]
                  %592 = vst [vmem:[%s484 + $0xd4] sm:$0xf] %v591
                  %v593 = vld [vmem:[%s483 + $0x1b0] sm:$0xf]
                  %594 = vst [vmem:[%s484 + $0xd8] sm:$0xf] %v593
                  %v595 = vld [vmem:[%s483 + $0x1b8] sm:$0xf]
                  %596 = vst [vmem:[%s484 + $0xdc] sm:$0xf] %v595
                  %v597 = vld [vmem:[%s483 + $0x1c0] sm:$0xf]
                  %598 = vst [vmem:[%s484 + $0xe0] sm:$0xf] %v597
                  %v599 = vld [vmem:[%s483 + $0x1c8] sm:$0xf]
                  %600 = vst [vmem:[%s484 + $0xe4] sm:$0xf] %v599
                  %v601 = vld [vmem:[%s483 + $0x1d0] sm:$0xf]
                  %602 = vst [vmem:[%s484 + $0xe8] sm:$0xf] %v601
                  %v603 = vld [vmem:[%s483 + $0x1d8] sm:$0xf]
                  %604 = vst [vmem:[%s484 + $0xec] sm:$0xf] %v603
                  %v605 = vld [vmem:[%s483 + $0x1e0] sm:$0xf]
                  %606 = vst [vmem:[%s484 + $0xf0] sm:$0xf] %v605
                  %v607 = vld [vmem:[%s483 + $0x1e8] sm:$0xf]
                  %608 = vst [vmem:[%s484 + $0xf4] sm:$0xf] %v607
                  %v609 = vld [vmem:[%s483 + $0x1f0] sm:$0xf]
                  %610 = vst [vmem:[%s484 + $0xf8] sm:$0xf] %v609
                  %v611 = vld [vmem:[%s483 + $0x1f8] sm:$0xf]
                  %612 = vst [vmem:[%s484 + $0xfc] sm:$0xf] %v611
                  %v613 = vld [vmem:[%s483 + $0x200] sm:$0xf]
                  %614 = vst [vmem:[%s484 + $0x100] sm:$0xf] %v613
                  %v615 = vld [vmem:[%s483 + $0x208] sm:$0xf]
                  %616 = vst [vmem:[%s484 + $0x104] sm:$0xf] %v615
                  %v617 = vld [vmem:[%s483 + $0x210] sm:$0xf]
                  %618 = vst [vmem:[%s484 + $0x108] sm:$0xf] %v617
                  %v619 = vld [vmem:[%s483 + $0x218] sm:$0xf]
                  %620 = vst [vmem:[%s484 + $0x10c] sm:$0xf] %v619
                  %v621 = vld [vmem:[%s483 + $0x220] sm:$0xf]
                  %622 = vst [vmem:[%s484 + $0x110] sm:$0xf] %v621
                  %v623 = vld [vmem:[%s483 + $0x228] sm:$0xf]
                  %624 = vst [vmem:[%s484 + $0x114] sm:$0xf] %v623
                  %v625 = vld [vmem:[%s483 + $0x230] sm:$0xf]
                  %626 = vst [vmem:[%s484 + $0x118] sm:$0xf] %v625
                  %v627 = vld [vmem:[%s483 + $0x238] sm:$0xf]
                  %628 = vst [vmem:[%s484 + $0x11c] sm:$0xf] %v627
                  %v629 = vld [vmem:[%s483 + $0x240] sm:$0xf]
                  %630 = vst [vmem:[%s484 + $0x120] sm:$0xf] %v629
                  %v631 = vld [vmem:[%s483 + $0x248] sm:$0xf]
                  %632 = vst [vmem:[%s484 + $0x124] sm:$0xf] %v631
                  %v633 = vld [vmem:[%s483 + $0x250] sm:$0xf]
                  %634 = vst [vmem:[%s484 + $0x128] sm:$0xf] %v633
                  %v635 = vld [vmem:[%s483 + $0x258] sm:$0xf]
                  %636 = vst [vmem:[%s484 + $0x12c] sm:$0xf] %v635
                  %v637 = vld [vmem:[%s483 + $0x260] sm:$0xf]
                  %638 = vst [vmem:[%s484 + $0x130] sm:$0xf] %v637
                  %v639 = vld [vmem:[%s483 + $0x268] sm:$0xf]
                  %640 = vst [vmem:[%s484 + $0x134] sm:$0xf] %v639
                  %v641 = vld [vmem:[%s483 + $0x270] sm:$0xf]
                  %642 = vst [vmem:[%s484 + $0x138] sm:$0xf] %v641
                  %v643 = vld [vmem:[%s483 + $0x278] sm:$0xf]
                  %644 = vst [vmem:[%s484 + $0x13c] sm:$0xf] %v643
                  %v645 = vld [vmem:[%s483 + $0x280] sm:$0xf]
                  %646 = vst [vmem:[%s484 + $0x140] sm:$0xf] %v645
                  %v647 = vld [vmem:[%s483 + $0x288] sm:$0xf]
                  %648 = vst [vmem:[%s484 + $0x144] sm:$0xf] %v647
                  %v649 = vld [vmem:[%s483 + $0x290] sm:$0xf]
                  %650 = vst [vmem:[%s484 + $0x148] sm:$0xf] %v649
                  %v651 = vld [vmem:[%s483 + $0x298] sm:$0xf]
                  %652 = vst [vmem:[%s484 + $0x14c] sm:$0xf] %v651
                  %v653 = vld [vmem:[%s483 + $0x2a0] sm:$0xf]
                  %654 = vst [vmem:[%s484 + $0x150] sm:$0xf] %v653
                  %v655 = vld [vmem:[%s483 + $0x2a8] sm:$0xf]
                  %656 = vst [vmem:[%s484 + $0x154] sm:$0xf] %v655
                  %v657 = vld [vmem:[%s483 + $0x2b0] sm:$0xf]
                  %658 = vst [vmem:[%s484 + $0x158] sm:$0xf] %v657
                  %v659 = vld [vmem:[%s483 + $0x2b8] sm:$0xf]
                  %660 = vst [vmem:[%s484 + $0x15c] sm:$0xf] %v659
                  %v661 = vld [vmem:[%s483 + $0x2c0] sm:$0xf]
                  %662 = vst [vmem:[%s484 + $0x160] sm:$0xf] %v661
                  %v663 = vld [vmem:[%s483 + $0x2c8] sm:$0xf]
                  %664 = vst [vmem:[%s484 + $0x164] sm:$0xf] %v663
                  %v665 = vld [vmem:[%s483 + $0x2d0] sm:$0xf]
                  %666 = vst [vmem:[%s484 + $0x168] sm:$0xf] %v665
                  %v667 = vld [vmem:[%s483 + $0x2d8] sm:$0xf]
                  %668 = vst [vmem:[%s484 + $0x16c] sm:$0xf] %v667
                  %v669 = vld [vmem:[%s483 + $0x2e0] sm:$0xf]
                  %670 = vst [vmem:[%s484 + $0x170] sm:$0xf] %v669
                  %v671 = vld [vmem:[%s483 + $0x2e8] sm:$0xf]
                  %672 = vst [vmem:[%s484 + $0x174] sm:$0xf] %v671
                  %v673 = vld [vmem:[%s483 + $0x2f0] sm:$0xf]
                  %674 = vst [vmem:[%s484 + $0x178] sm:$0xf] %v673
                  %v675 = vld [vmem:[%s483 + $0x2f8] sm:$0xf]
                  %676 = vst [vmem:[%s484 + $0x17c] sm:$0xf] %v675
                  %v677 = vld [vmem:[%s483 + $0x300] sm:$0xf]
                  %678 = vst [vmem:[%s484 + $0x180] sm:$0xf] %v677
                  %v679 = vld [vmem:[%s483 + $0x308] sm:$0xf]
                  %680 = vst [vmem:[%s484 + $0x184] sm:$0xf] %v679
                  %v681 = vld [vmem:[%s483 + $0x310] sm:$0xf]
                  %682 = vst [vmem:[%s484 + $0x188] sm:$0xf] %v681
                  %v683 = vld [vmem:[%s483 + $0x318] sm:$0xf]
                  %684 = vst [vmem:[%s484 + $0x18c] sm:$0xf] %v683
                  %v685 = vld [vmem:[%s483 + $0x320] sm:$0xf]
                  %686 = vst [vmem:[%s484 + $0x190] sm:$0xf] %v685
                  %v687 = vld [vmem:[%s483 + $0x328] sm:$0xf]
                  %688 = vst [vmem:[%s484 + $0x194] sm:$0xf] %v687
                  %v689 = vld [vmem:[%s483 + $0x330] sm:$0xf]
                  %690 = vst [vmem:[%s484 + $0x198] sm:$0xf] %v689
                  %v691 = vld [vmem:[%s483 + $0x338] sm:$0xf]
                  %692 = vst [vmem:[%s484 + $0x19c] sm:$0xf] %v691
                  %v693 = vld [vmem:[%s483 + $0x340] sm:$0xf]
                  %694 = vst [vmem:[%s484 + $0x1a0] sm:$0xf] %v693
                  %v695 = vld [vmem:[%s483 + $0x348] sm:$0xf]
                  %696 = vst [vmem:[%s484 + $0x1a4] sm:$0xf] %v695
                  %v697 = vld [vmem:[%s483 + $0x350] sm:$0xf]
                  %698 = vst [vmem:[%s484 + $0x1a8] sm:$0xf] %v697
                  %v699 = vld [vmem:[%s483 + $0x358] sm:$0xf]
                  %700 = vst [vmem:[%s484 + $0x1ac] sm:$0xf] %v699
                  %v701 = vld [vmem:[%s483 + $0x360] sm:$0xf]
                  %702 = vst [vmem:[%s484 + $0x1b0] sm:$0xf] %v701
                  %v703 = vld [vmem:[%s483 + $0x368] sm:$0xf]
                  %704 = vst [vmem:[%s484 + $0x1b4] sm:$0xf] %v703
                  %v705 = vld [vmem:[%s483 + $0x370] sm:$0xf]
                  %706 = vst [vmem:[%s484 + $0x1b8] sm:$0xf] %v705
                  %v707 = vld [vmem:[%s483 + $0x378] sm:$0xf]
                  %708 = vst [vmem:[%s484 + $0x1bc] sm:$0xf] %v707
                  %v709 = vld [vmem:[%s483 + $0x380] sm:$0xf]
                  %710 = vst [vmem:[%s484 + $0x1c0] sm:$0xf] %v709
                  %v711 = vld [vmem:[%s483 + $0x388] sm:$0xf]
                  %712 = vst [vmem:[%s484 + $0x1c4] sm:$0xf] %v711
                  %v713 = vld [vmem:[%s483 + $0x390] sm:$0xf]
                  %714 = vst [vmem:[%s484 + $0x1c8] sm:$0xf] %v713
                  %v715 = vld [vmem:[%s483 + $0x398] sm:$0xf]
                  %716 = vst [vmem:[%s484 + $0x1cc] sm:$0xf] %v715
                  %v717 = vld [vmem:[%s483 + $0x3a0] sm:$0xf]
                  %718 = vst [vmem:[%s484 + $0x1d0] sm:$0xf] %v717
                  %v719 = vld [vmem:[%s483 + $0x3a8] sm:$0xf]
                  %720 = vst [vmem:[%s484 + $0x1d4] sm:$0xf] %v719
                  %v721 = vld [vmem:[%s483 + $0x3b0] sm:$0xf]
                  %722 = vst [vmem:[%s484 + $0x1d8] sm:$0xf] %v721
                  %v723 = vld [vmem:[%s483 + $0x3b8] sm:$0xf]
                  %724 = vst [vmem:[%s484 + $0x1dc] sm:$0xf] %v723
                  %v725 = vld [vmem:[%s483 + $0x3c0] sm:$0xf]
                  %726 = vst [vmem:[%s484 + $0x1e0] sm:$0xf] %v725
                  %v727 = vld [vmem:[%s483 + $0x3c8] sm:$0xf]
                  %728 = vst [vmem:[%s484 + $0x1e4] sm:$0xf] %v727
                  %v729 = vld [vmem:[%s483 + $0x3d0] sm:$0xf]
                  %730 = vst [vmem:[%s484 + $0x1e8] sm:$0xf] %v729
                  %v731 = vld [vmem:[%s483 + $0x3d8] sm:$0xf]
                  %732 = vst [vmem:[%s484 + $0x1ec] sm:$0xf] %v731
                  %v733 = vld [vmem:[%s483 + $0x3e0] sm:$0xf]
                  %734 = vst [vmem:[%s484 + $0x1f0] sm:$0xf] %v733
                  %v735 = vld [vmem:[%s483 + $0x3e8] sm:$0xf]
                  %736 = vst [vmem:[%s484 + $0x1f4] sm:$0xf] %v735
                  %v737 = vld [vmem:[%s483 + $0x3f0] sm:$0xf]
                  %738 = vst [vmem:[%s484 + $0x1f8] sm:$0xf] %v737
                  %v739 = vld [vmem:[%s483 + $0x3f8] sm:$0xf]
                  %740 = vst [vmem:[%s484 + $0x1fc] sm:$0xf] %v739
                  %v741 = vld [vmem:[%s483 + $0x400] sm:$0xf]
                  %742 = vst [vmem:[%s484 + $0x200] sm:$0xf] %v741
                  %v743 = vld [vmem:[%s483 + $0x408] sm:$0xf]
                  %744 = vst [vmem:[%s484 + $0x204] sm:$0xf] %v743
                  %v745 = vld [vmem:[%s483 + $0x410] sm:$0xf]
                  %746 = vst [vmem:[%s484 + $0x208] sm:$0xf] %v745
                  %v747 = vld [vmem:[%s483 + $0x418] sm:$0xf]
                  %748 = vst [vmem:[%s484 + $0x20c] sm:$0xf] %v747
                  %v749 = vld [vmem:[%s483 + $0x420] sm:$0xf]
                  %750 = vst [vmem:[%s484 + $0x210] sm:$0xf] %v749
                  %v751 = vld [vmem:[%s483 + $0x428] sm:$0xf]
                  %752 = vst [vmem:[%s484 + $0x214] sm:$0xf] %v751
                  %v753 = vld [vmem:[%s483 + $0x430] sm:$0xf]
                  %754 = vst [vmem:[%s484 + $0x218] sm:$0xf] %v753
                  %v755 = vld [vmem:[%s483 + $0x438] sm:$0xf]
                  %756 = vst [vmem:[%s484 + $0x21c] sm:$0xf] %v755
                  %v757 = vld [vmem:[%s483 + $0x440] sm:$0xf]
                  %758 = vst [vmem:[%s484 + $0x220] sm:$0xf] %v757
                  %v759 = vld [vmem:[%s483 + $0x448] sm:$0xf]
                  %760 = vst [vmem:[%s484 + $0x224] sm:$0xf] %v759
                  %v761 = vld [vmem:[%s483 + $0x450] sm:$0xf]
                  %762 = vst [vmem:[%s484 + $0x228] sm:$0xf] %v761
                  %v763 = vld [vmem:[%s483 + $0x458] sm:$0xf]
                  %764 = vst [vmem:[%s484 + $0x22c] sm:$0xf] %v763
                  %v765 = vld [vmem:[%s483 + $0x460] sm:$0xf]
                  %766 = vst [vmem:[%s484 + $0x230] sm:$0xf] %v765
                  %v767 = vld [vmem:[%s483 + $0x468] sm:$0xf]
                  %768 = vst [vmem:[%s484 + $0x234] sm:$0xf] %v767
                  %v769 = vld [vmem:[%s483 + $0x470] sm:$0xf]
                  %770 = vst [vmem:[%s484 + $0x238] sm:$0xf] %v769
                  %v771 = vld [vmem:[%s483 + $0x478] sm:$0xf]
                  %772 = vst [vmem:[%s484 + $0x23c] sm:$0xf] %v771
                $region59: #{backbone_base_forward.7} parent=46 // loop_footer
                  %s482 = sadd.s32 1, %s478
                $region60: #{backbone_base_forward.7} parent=46 // loop_footer_branch
                  %477 = sbr.rel target = $region56
                $region61: #{backbone_base_forward.7} parent=46 // loop_exit
                  _
              $region47: #{backbone_base_forward.7} parent=31 // pred_fallthru
                _
            $region32: #{backbone_base_forward.7} parent=27 // pred_fallthru
              _
            // Predicated region
            $region33: #{backbone_base_forward.7} parent=27 // pred_check
              _
            $region34: #{backbone_base_forward.7} parent=27 // pred_check_branch
              %168 = sbr.rel (0) target = $region36
            $region35: #{backbone_base_forward.7} parent=27 // pred_region
              loop: start=0, step=1, limit=1
              $region37: #{backbone_base_forward.7} parent=35 // loop_pre_header
                _
              $region38: #{backbone_base_forward.7} parent=35 // loop_header
                %s171 = sphi 0, %s175
                %p172 = scmp.ge.s32.totalorder %s171, 1
                %s176 = sphi %s162, %s162
                %s177 = sphi %s160, %s160
              $region39: #{backbone_base_forward.7} parent=35 // loop_header_branch
                %174 = sbr.rel (%p172) target = $region43
              $region40: #{backbone_base_forward.7} parent=35 // loop_body
                %v178 = vld [vmem:[%s176] sm:$0xf]
                %179 = vst [vmem:[%s177] sm:$0xf] %v178
                %v180 = vld [vmem:[%s176 + $0x8] sm:$0xf]
                %181 = vst [vmem:[%s177 + $0x4] sm:$0xf] %v180
                %v182 = vld [vmem:[%s176 + $0x10] sm:$0xf]
                %183 = vst [vmem:[%s177 + $0x8] sm:$0xf] %v182
                %v184 = vld [vmem:[%s176 + $0x18] sm:$0xf]
                %185 = vst [vmem:[%s177 + $0xc] sm:$0xf] %v184
                %v186 = vld [vmem:[%s176 + $0x20] sm:$0xf]
                %187 = vst [vmem:[%s177 + $0x10] sm:$0xf] %v186
                %v188 = vld [vmem:[%s176 + $0x28] sm:$0xf]
                %189 = vst [vmem:[%s177 + $0x14] sm:$0xf] %v188
                %v190 = vld [vmem:[%s176 + $0x30] sm:$0xf]
                %191 = vst [vmem:[%s177 + $0x18] sm:$0xf] %v190
                %v192 = vld [vmem:[%s176 + $0x38] sm:$0xf]
                %193 = vst [vmem:[%s177 + $0x1c] sm:$0xf] %v192
                %v194 = vld [vmem:[%s176 + $0x40] sm:$0xf]
                %195 = vst [vmem:[%s177 + $0x20] sm:$0xf] %v194
                %v196 = vld [vmem:[%s176 + $0x48] sm:$0xf]
                %197 = vst [vmem:[%s177 + $0x24] sm:$0xf] %v196
                %v198 = vld [vmem:[%s176 + $0x50] sm:$0xf]
                %199 = vst [vmem:[%s177 + $0x28] sm:$0xf] %v198
                %v200 = vld [vmem:[%s176 + $0x58] sm:$0xf]
                %201 = vst [vmem:[%s177 + $0x2c] sm:$0xf] %v200
                %v202 = vld [vmem:[%s176 + $0x60] sm:$0xf]
                %203 = vst [vmem:[%s177 + $0x30] sm:$0xf] %v202
                %v204 = vld [vmem:[%s176 + $0x68] sm:$0xf]
                %205 = vst [vmem:[%s177 + $0x34] sm:$0xf] %v204
                %v206 = vld [vmem:[%s176 + $0x70] sm:$0xf]
                %207 = vst [vmem:[%s177 + $0x38] sm:$0xf] %v206
                %v208 = vld [vmem:[%s176 + $0x78] sm:$0xf]
                %209 = vst [vmem:[%s177 + $0x3c] sm:$0xf] %v208
                %v210 = vld [vmem:[%s176 + $0x80] sm:$0xf]
                %211 = vst [vmem:[%s177 + $0x40] sm:$0xf] %v210
                %v212 = vld [vmem:[%s176 + $0x88] sm:$0xf]
                %213 = vst [vmem:[%s177 + $0x44] sm:$0xf] %v212
                %v214 = vld [vmem:[%s176 + $0x90] sm:$0xf]
                %215 = vst [vmem:[%s177 + $0x48] sm:$0xf] %v214
                %v216 = vld [vmem:[%s176 + $0x98] sm:$0xf]
                %217 = vst [vmem:[%s177 + $0x4c] sm:$0xf] %v216
                %v218 = vld [vmem:[%s176 + $0xa0] sm:$0xf]
                %219 = vst [vmem:[%s177 + $0x50] sm:$0xf] %v218
                %v220 = vld [vmem:[%s176 + $0xa8] sm:$0xf]
                %221 = vst [vmem:[%s177 + $0x54] sm:$0xf] %v220
                %v222 = vld [vmem:[%s176 + $0xb0] sm:$0xf]
                %223 = vst [vmem:[%s177 + $0x58] sm:$0xf] %v222
                %v224 = vld [vmem:[%s176 + $0xb8] sm:$0xf]
                %225 = vst [vmem:[%s177 + $0x5c] sm:$0xf] %v224
                %v226 = vld [vmem:[%s176 + $0xc0] sm:$0xf]
                %227 = vst [vmem:[%s177 + $0x60] sm:$0xf] %v226
                %v228 = vld [vmem:[%s176 + $0xc8] sm:$0xf]
                %229 = vst [vmem:[%s177 + $0x64] sm:$0xf] %v228
                %v230 = vld [vmem:[%s176 + $0xd0] sm:$0xf]
                %231 = vst [vmem:[%s177 + $0x68] sm:$0xf] %v230
                %v232 = vld [vmem:[%s176 + $0xd8] sm:$0xf]
                %233 = vst [vmem:[%s177 + $0x6c] sm:$0xf] %v232
                %v234 = vld [vmem:[%s176 + $0xe0] sm:$0xf]
                %235 = vst [vmem:[%s177 + $0x70] sm:$0xf] %v234
                %v236 = vld [vmem:[%s176 + $0xe8] sm:$0xf]
                %237 = vst [vmem:[%s177 + $0x74] sm:$0xf] %v236
                %v238 = vld [vmem:[%s176 + $0xf0] sm:$0xf]
                %239 = vst [vmem:[%s177 + $0x78] sm:$0xf] %v238
                %v240 = vld [vmem:[%s176 + $0xf8] sm:$0xf]
                %241 = vst [vmem:[%s177 + $0x7c] sm:$0xf] %v240
                %v242 = vld [vmem:[%s176 + $0x100] sm:$0xf]
                %243 = vst [vmem:[%s177 + $0x80] sm:$0xf] %v242
                %v244 = vld [vmem:[%s176 + $0x108] sm:$0xf]
                %245 = vst [vmem:[%s177 + $0x84] sm:$0xf] %v244
                %v246 = vld [vmem:[%s176 + $0x110] sm:$0xf]
                %247 = vst [vmem:[%s177 + $0x88] sm:$0xf] %v246
                %v248 = vld [vmem:[%s176 + $0x118] sm:$0xf]
                %249 = vst [vmem:[%s177 + $0x8c] sm:$0xf] %v248
                %v250 = vld [vmem:[%s176 + $0x120] sm:$0xf]
                %251 = vst [vmem:[%s177 + $0x90] sm:$0xf] %v250
                %v252 = vld [vmem:[%s176 + $0x128] sm:$0xf]
                %253 = vst [vmem:[%s177 + $0x94] sm:$0xf] %v252
                %v254 = vld [vmem:[%s176 + $0x130] sm:$0xf]
                %255 = vst [vmem:[%s177 + $0x98] sm:$0xf] %v254
                %v256 = vld [vmem:[%s176 + $0x138] sm:$0xf]
                %257 = vst [vmem:[%s177 + $0x9c] sm:$0xf] %v256
                %v258 = vld [vmem:[%s176 + $0x140] sm:$0xf]
                %259 = vst [vmem:[%s177 + $0xa0] sm:$0xf] %v258
                %v260 = vld [vmem:[%s176 + $0x148] sm:$0xf]
                %261 = vst [vmem:[%s177 + $0xa4] sm:$0xf] %v260
                %v262 = vld [vmem:[%s176 + $0x150] sm:$0xf]
                %263 = vst [vmem:[%s177 + $0xa8] sm:$0xf] %v262
                %v264 = vld [vmem:[%s176 + $0x158] sm:$0xf]
                %265 = vst [vmem:[%s177 + $0xac] sm:$0xf] %v264
                %v266 = vld [vmem:[%s176 + $0x160] sm:$0xf]
                %267 = vst [vmem:[%s177 + $0xb0] sm:$0xf] %v266
                %v268 = vld [vmem:[%s176 + $0x168] sm:$0xf]
                %269 = vst [vmem:[%s177 + $0xb4] sm:$0xf] %v268
                %v270 = vld [vmem:[%s176 + $0x170] sm:$0xf]
                %271 = vst [vmem:[%s177 + $0xb8] sm:$0xf] %v270
                %v272 = vld [vmem:[%s176 + $0x178] sm:$0xf]
                %273 = vst [vmem:[%s177 + $0xbc] sm:$0xf] %v272
                %v274 = vld [vmem:[%s176 + $0x180] sm:$0xf]
                %275 = vst [vmem:[%s177 + $0xc0] sm:$0xf] %v274
                %v276 = vld [vmem:[%s176 + $0x188] sm:$0xf]
                %277 = vst [vmem:[%s177 + $0xc4] sm:$0xf] %v276
                %v278 = vld [vmem:[%s176 + $0x190] sm:$0xf]
                %279 = vst [vmem:[%s177 + $0xc8] sm:$0xf] %v278
                %v280 = vld [vmem:[%s176 + $0x198] sm:$0xf]
                %281 = vst [vmem:[%s177 + $0xcc] sm:$0xf] %v280
                %v282 = vld [vmem:[%s176 + $0x1a0] sm:$0xf]
                %283 = vst [vmem:[%s177 + $0xd0] sm:$0xf] %v282
                %v284 = vld [vmem:[%s176 + $0x1a8] sm:$0xf]
                %285 = vst [vmem:[%s177 + $0xd4] sm:$0xf] %v284
                %v286 = vld [vmem:[%s176 + $0x1b0] sm:$0xf]
                %287 = vst [vmem:[%s177 + $0xd8] sm:$0xf] %v286
                %v288 = vld [vmem:[%s176 + $0x1b8] sm:$0xf]
                %289 = vst [vmem:[%s177 + $0xdc] sm:$0xf] %v288
                %v290 = vld [vmem:[%s176 + $0x1c0] sm:$0xf]
                %291 = vst [vmem:[%s177 + $0xe0] sm:$0xf] %v290
                %v292 = vld [vmem:[%s176 + $0x1c8] sm:$0xf]
                %293 = vst [vmem:[%s177 + $0xe4] sm:$0xf] %v292
                %v294 = vld [vmem:[%s176 + $0x1d0] sm:$0xf]
                %295 = vst [vmem:[%s177 + $0xe8] sm:$0xf] %v294
                %v296 = vld [vmem:[%s176 + $0x1d8] sm:$0xf]
                %297 = vst [vmem:[%s177 + $0xec] sm:$0xf] %v296
                %v298 = vld [vmem:[%s176 + $0x1e0] sm:$0xf]
                %299 = vst [vmem:[%s177 + $0xf0] sm:$0xf] %v298
                %v300 = vld [vmem:[%s176 + $0x1e8] sm:$0xf]
                %301 = vst [vmem:[%s177 + $0xf4] sm:$0xf] %v300
                %v302 = vld [vmem:[%s176 + $0x1f0] sm:$0xf]
                %303 = vst [vmem:[%s177 + $0xf8] sm:$0xf] %v302
                %v304 = vld [vmem:[%s176 + $0x1f8] sm:$0xf]
                %305 = vst [vmem:[%s177 + $0xfc] sm:$0xf] %v304
                %v306 = vld [vmem:[%s176 + $0x200] sm:$0xf]
                %307 = vst [vmem:[%s177 + $0x100] sm:$0xf] %v306
                %v308 = vld [vmem:[%s176 + $0x208] sm:$0xf]
                %309 = vst [vmem:[%s177 + $0x104] sm:$0xf] %v308
                %v310 = vld [vmem:[%s176 + $0x210] sm:$0xf]
                %311 = vst [vmem:[%s177 + $0x108] sm:$0xf] %v310
                %v312 = vld [vmem:[%s176 + $0x218] sm:$0xf]
                %313 = vst [vmem:[%s177 + $0x10c] sm:$0xf] %v312
                %v314 = vld [vmem:[%s176 + $0x220] sm:$0xf]
                %315 = vst [vmem:[%s177 + $0x110] sm:$0xf] %v314
                %v316 = vld [vmem:[%s176 + $0x228] sm:$0xf]
                %317 = vst [vmem:[%s177 + $0x114] sm:$0xf] %v316
                %v318 = vld [vmem:[%s176 + $0x230] sm:$0xf]
                %319 = vst [vmem:[%s177 + $0x118] sm:$0xf] %v318
                %v320 = vld [vmem:[%s176 + $0x238] sm:$0xf]
                %321 = vst [vmem:[%s177 + $0x11c] sm:$0xf] %v320
                %v322 = vld [vmem:[%s176 + $0x240] sm:$0xf]
                %323 = vst [vmem:[%s177 + $0x120] sm:$0xf] %v322
                %v324 = vld [vmem:[%s176 + $0x248] sm:$0xf]
                %325 = vst [vmem:[%s177 + $0x124] sm:$0xf] %v324
                %v326 = vld [vmem:[%s176 + $0x250] sm:$0xf]
                %327 = vst [vmem:[%s177 + $0x128] sm:$0xf] %v326
                %v328 = vld [vmem:[%s176 + $0x258] sm:$0xf]
                %329 = vst [vmem:[%s177 + $0x12c] sm:$0xf] %v328
                %v330 = vld [vmem:[%s176 + $0x260] sm:$0xf]
                %331 = vst [vmem:[%s177 + $0x130] sm:$0xf] %v330
                %v332 = vld [vmem:[%s176 + $0x268] sm:$0xf]
                %333 = vst [vmem:[%s177 + $0x134] sm:$0xf] %v332
                %v334 = vld [vmem:[%s176 + $0x270] sm:$0xf]
                %335 = vst [vmem:[%s177 + $0x138] sm:$0xf] %v334
                %v336 = vld [vmem:[%s176 + $0x278] sm:$0xf]
                %337 = vst [vmem:[%s177 + $0x13c] sm:$0xf] %v336
                %v338 = vld [vmem:[%s176 + $0x280] sm:$0xf]
                %339 = vst [vmem:[%s177 + $0x140] sm:$0xf] %v338
                %v340 = vld [vmem:[%s176 + $0x288] sm:$0xf]
                %341 = vst [vmem:[%s177 + $0x144] sm:$0xf] %v340
                %v342 = vld [vmem:[%s176 + $0x290] sm:$0xf]
                %343 = vst [vmem:[%s177 + $0x148] sm:$0xf] %v342
                %v344 = vld [vmem:[%s176 + $0x298] sm:$0xf]
                %345 = vst [vmem:[%s177 + $0x14c] sm:$0xf] %v344
                %v346 = vld [vmem:[%s176 + $0x2a0] sm:$0xf]
                %347 = vst [vmem:[%s177 + $0x150] sm:$0xf] %v346
                %v348 = vld [vmem:[%s176 + $0x2a8] sm:$0xf]
                %349 = vst [vmem:[%s177 + $0x154] sm:$0xf] %v348
                %v350 = vld [vmem:[%s176 + $0x2b0] sm:$0xf]
                %351 = vst [vmem:[%s177 + $0x158] sm:$0xf] %v350
                %v352 = vld [vmem:[%s176 + $0x2b8] sm:$0xf]
                %353 = vst [vmem:[%s177 + $0x15c] sm:$0xf] %v352
                %v354 = vld [vmem:[%s176 + $0x2c0] sm:$0xf]
                %355 = vst [vmem:[%s177 + $0x160] sm:$0xf] %v354
                %v356 = vld [vmem:[%s176 + $0x2c8] sm:$0xf]
                %357 = vst [vmem:[%s177 + $0x164] sm:$0xf] %v356
                %v358 = vld [vmem:[%s176 + $0x2d0] sm:$0xf]
                %359 = vst [vmem:[%s177 + $0x168] sm:$0xf] %v358
                %v360 = vld [vmem:[%s176 + $0x2d8] sm:$0xf]
                %361 = vst [vmem:[%s177 + $0x16c] sm:$0xf] %v360
                %v362 = vld [vmem:[%s176 + $0x2e0] sm:$0xf]
                %363 = vst [vmem:[%s177 + $0x170] sm:$0xf] %v362
                %v364 = vld [vmem:[%s176 + $0x2e8] sm:$0xf]
                %365 = vst [vmem:[%s177 + $0x174] sm:$0xf] %v364
                %v366 = vld [vmem:[%s176 + $0x2f0] sm:$0xf]
                %367 = vst [vmem:[%s177 + $0x178] sm:$0xf] %v366
                %v368 = vld [vmem:[%s176 + $0x2f8] sm:$0xf]
                %369 = vst [vmem:[%s177 + $0x17c] sm:$0xf] %v368
                %v370 = vld [vmem:[%s176 + $0x300] sm:$0xf]
                %371 = vst [vmem:[%s177 + $0x180] sm:$0xf] %v370
                %v372 = vld [vmem:[%s176 + $0x308] sm:$0xf]
                %373 = vst [vmem:[%s177 + $0x184] sm:$0xf] %v372
                %v374 = vld [vmem:[%s176 + $0x310] sm:$0xf]
                %375 = vst [vmem:[%s177 + $0x188] sm:$0xf] %v374
                %v376 = vld [vmem:[%s176 + $0x318] sm:$0xf]
                %377 = vst [vmem:[%s177 + $0x18c] sm:$0xf] %v376
                %v378 = vld [vmem:[%s176 + $0x320] sm:$0xf]
                %379 = vst [vmem:[%s177 + $0x190] sm:$0xf] %v378
                %v380 = vld [vmem:[%s176 + $0x328] sm:$0xf]
                %381 = vst [vmem:[%s177 + $0x194] sm:$0xf] %v380
                %v382 = vld [vmem:[%s176 + $0x330] sm:$0xf]
                %383 = vst [vmem:[%s177 + $0x198] sm:$0xf] %v382
                %v384 = vld [vmem:[%s176 + $0x338] sm:$0xf]
                %385 = vst [vmem:[%s177 + $0x19c] sm:$0xf] %v384
                %v386 = vld [vmem:[%s176 + $0x340] sm:$0xf]
                %387 = vst [vmem:[%s177 + $0x1a0] sm:$0xf] %v386
                %v388 = vld [vmem:[%s176 + $0x348] sm:$0xf]
                %389 = vst [vmem:[%s177 + $0x1a4] sm:$0xf] %v388
                %v390 = vld [vmem:[%s176 + $0x350] sm:$0xf]
                %391 = vst [vmem:[%s177 + $0x1a8] sm:$0xf] %v390
                %v392 = vld [vmem:[%s176 + $0x358] sm:$0xf]
                %393 = vst [vmem:[%s177 + $0x1ac] sm:$0xf] %v392
                %v394 = vld [vmem:[%s176 + $0x360] sm:$0xf]
                %395 = vst [vmem:[%s177 + $0x1b0] sm:$0xf] %v394
                %v396 = vld [vmem:[%s176 + $0x368] sm:$0xf]
                %397 = vst [vmem:[%s177 + $0x1b4] sm:$0xf] %v396
                %v398 = vld [vmem:[%s176 + $0x370] sm:$0xf]
                %399 = vst [vmem:[%s177 + $0x1b8] sm:$0xf] %v398
                %v400 = vld [vmem:[%s176 + $0x378] sm:$0xf]
                %401 = vst [vmem:[%s177 + $0x1bc] sm:$0xf] %v400
                %v402 = vld [vmem:[%s176 + $0x380] sm:$0xf]
                %403 = vst [vmem:[%s177 + $0x1c0] sm:$0xf] %v402
                %v404 = vld [vmem:[%s176 + $0x388] sm:$0xf]
                %405 = vst [vmem:[%s177 + $0x1c4] sm:$0xf] %v404
                %v406 = vld [vmem:[%s176 + $0x390] sm:$0xf]
                %407 = vst [vmem:[%s177 + $0x1c8] sm:$0xf] %v406
                %v408 = vld [vmem:[%s176 + $0x398] sm:$0xf]
                %409 = vst [vmem:[%s177 + $0x1cc] sm:$0xf] %v408
                %v410 = vld [vmem:[%s176 + $0x3a0] sm:$0xf]
                %411 = vst [vmem:[%s177 + $0x1d0] sm:$0xf] %v410
                %v412 = vld [vmem:[%s176 + $0x3a8] sm:$0xf]
                %413 = vst [vmem:[%s177 + $0x1d4] sm:$0xf] %v412
                %v414 = vld [vmem:[%s176 + $0x3b0] sm:$0xf]
                %415 = vst [vmem:[%s177 + $0x1d8] sm:$0xf] %v414
                %v416 = vld [vmem:[%s176 + $0x3b8] sm:$0xf]
                %417 = vst [vmem:[%s177 + $0x1dc] sm:$0xf] %v416
                %v418 = vld [vmem:[%s176 + $0x3c0] sm:$0xf]
                %419 = vst [vmem:[%s177 + $0x1e0] sm:$0xf] %v418
                %v420 = vld [vmem:[%s176 + $0x3c8] sm:$0xf]
                %421 = vst [vmem:[%s177 + $0x1e4] sm:$0xf] %v420
                %v422 = vld [vmem:[%s176 + $0x3d0] sm:$0xf]
                %423 = vst [vmem:[%s177 + $0x1e8] sm:$0xf] %v422
                %v424 = vld [vmem:[%s176 + $0x3d8] sm:$0xf]
                %425 = vst [vmem:[%s177 + $0x1ec] sm:$0xf] %v424
                %v426 = vld [vmem:[%s176 + $0x3e0] sm:$0xf]
                %427 = vst [vmem:[%s177 + $0x1f0] sm:$0xf] %v426
                %v428 = vld [vmem:[%s176 + $0x3e8] sm:$0xf]
                %429 = vst [vmem:[%s177 + $0x1f4] sm:$0xf] %v428
                %v430 = vld [vmem:[%s176 + $0x3f0] sm:$0xf]
                %431 = vst [vmem:[%s177 + $0x1f8] sm:$0xf] %v430
                %v432 = vld [vmem:[%s176 + $0x3f8] sm:$0xf]
                %433 = vst [vmem:[%s177 + $0x1fc] sm:$0xf] %v432
                %v434 = vld [vmem:[%s176 + $0x400] sm:$0xf]
                %435 = vst [vmem:[%s177 + $0x200] sm:$0xf] %v434
                %v436 = vld [vmem:[%s176 + $0x408] sm:$0xf]
                %437 = vst [vmem:[%s177 + $0x204] sm:$0xf] %v436
                %v438 = vld [vmem:[%s176 + $0x410] sm:$0xf]
                %439 = vst [vmem:[%s177 + $0x208] sm:$0xf] %v438
                %v440 = vld [vmem:[%s176 + $0x418] sm:$0xf]
                %441 = vst [vmem:[%s177 + $0x20c] sm:$0xf] %v440
                %v442 = vld [vmem:[%s176 + $0x420] sm:$0xf]
                %443 = vst [vmem:[%s177 + $0x210] sm:$0xf] %v442
                %v444 = vld [vmem:[%s176 + $0x428] sm:$0xf]
                %445 = vst [vmem:[%s177 + $0x214] sm:$0xf] %v444
                %v446 = vld [vmem:[%s176 + $0x430] sm:$0xf]
                %447 = vst [vmem:[%s177 + $0x218] sm:$0xf] %v446
                %v448 = vld [vmem:[%s176 + $0x438] sm:$0xf]
                %449 = vst [vmem:[%s177 + $0x21c] sm:$0xf] %v448
                %v450 = vld [vmem:[%s176 + $0x440] sm:$0xf]
                %451 = vst [vmem:[%s177 + $0x220] sm:$0xf] %v450
                %v452 = vld [vmem:[%s176 + $0x448] sm:$0xf]
                %453 = vst [vmem:[%s177 + $0x224] sm:$0xf] %v452
                %v454 = vld [vmem:[%s176 + $0x450] sm:$0xf]
                %455 = vst [vmem:[%s177 + $0x228] sm:$0xf] %v454
                %v456 = vld [vmem:[%s176 + $0x458] sm:$0xf]
                %457 = vst [vmem:[%s177 + $0x22c] sm:$0xf] %v456
                %v458 = vld [vmem:[%s176 + $0x460] sm:$0xf]
                %459 = vst [vmem:[%s177 + $0x230] sm:$0xf] %v458
                %v460 = vld [vmem:[%s176 + $0x468] sm:$0xf]
                %461 = vst [vmem:[%s177 + $0x234] sm:$0xf] %v460
                %v462 = vld [vmem:[%s176 + $0x470] sm:$0xf]
                %463 = vst [vmem:[%s177 + $0x238] sm:$0xf] %v462
                %v464 = vld [vmem:[%s176 + $0x478] sm:$0xf]
                %465 = vst [vmem:[%s177 + $0x23c] sm:$0xf] %v464
              $region41: #{backbone_base_forward.7} parent=35 // loop_footer
                %s175 = sadd.s32 1, %s171
              $region42: #{backbone_base_forward.7} parent=35 // loop_footer_branch
                %170 = sbr.rel target = $region38
              $region43: #{backbone_base_forward.7} parent=35 // loop_exit
                _
            $region36: #{backbone_base_forward.7} parent=27 // pred_fallthru
              _
          $region28: #{backbone_base_forward.7} parent=23 // pred_fallthru
            _
          %773 = vnop
        $region24: #{backbone_base_forward.7} parent=19 // pred_fallthru
          _
        // Predicated region
        $region62: #{backbone_base_forward.7} parent=19 // pred_check
          %p774 = pneg %p93
        $region63: #{backbone_base_forward.7} parent=19 // pred_check_branch
          %776 = sbr.rel (%p774) target = $region65
        $region64: #{backbone_base_forward.7} parent=19 // pred_region
          %p777 = scmp.lt.s32.totalorder %s17, 1
          %s778 = scalar_select %p777, %s17, 1
          %s779 = scalar_lea.vmem %s2, %s778
        $region65: #{backbone_base_forward.7} parent=19 // pred_fallthru
          _
      $region20: #{backbone_base_forward.7} parent=5 // pred_fallthru
        _
      %p780 = scmp.le.s32.totalorder 1, %s9
      %p781 = scmp.lt.s32.totalorder %s9, 3
      %p782 = pnand %p780, %p781
      %p783 = pneg %p782
      // Predicated region
      $region66: #{backbone_base_forward.7} parent=5 // pred_check
        _
      $region67: #{backbone_base_forward.7} parent=5 // pred_check_branch
        %785 = sbr.rel (%p782) target = $region69
      $region68: #{backbone_base_forward.7} parent=5 // pred_region
        %s786 = ssub.s32 %s9, 1
        %s787 = sand.u32 %s60, 1
        %s788 = sand.u32 %s60, 1
        %s789 = smul.addr %s788, 576
        %s790 = scalar_lea.vmem [#allocation2], %s789
        // Predicated region
        $region70: #{backbone_base_forward.7} parent=68 // pred_check
          %p791 = pneg %p73
        $region71: #{backbone_base_forward.7} parent=68 // pred_check_branch
          %793 = sbr.rel (%p791) target = $region73
        $region72: #{backbone_base_forward.7} parent=68 // pred_region
          _
        $region73: #{backbone_base_forward.7} parent=68 // pred_fallthru
          _
        %p794 = scmp.lt.s32.totalorder %s18, 0
        %s795 = scalar_select %p794, %s18, 0
        %s796 = smul.addr %s795, 9
        %s797 = smul.addr %s796, 4
        %s798 = scalar_lea.vmem %s0, %s797
        %p799 = pneg %p47
        %p800 = pneg %p44
        %s801 = sand.u32 %s60, 1
        %s802 = sand.u32 %s60, 1
        %s803 = smul.addr %s802, 576
        %s804 = scalar_lea.vmem [#allocation2], %s803
        %p805 = pneg %p73
        %p806 = pneg %p70
        %p807 = scmp.lt.s32.totalorder %s19, 1
        %s808 = scalar_select %p807, %s19, 1
        %s809 = scalar_lea.vmem %s2, %s808
        %p810 = pneg %p99
        %p811 = pneg %p96
        %p812 = pneg %p127
        %p813 = pneg %p124
        %p814 = scmp.lt.s32.totalorder %s18, 0
        %s815 = scalar_select %p814, %s18, 0
        %p816 = scmp.lt.s32.totalorder %s19, 1
        %s817 = scalar_select %p816, %s19, 1
        %s818 = smul.addr %s815, 2
        %s819 = sadd.s32 %s817, %s818
        %s820 = smul.addr %s819, 4
        %s821 = scalar_lea.vmem %s3, %s820
        %p822 = scmp.lt.s32.totalorder %s18, 0
        %s823 = scalar_select %p822, %s18, 0
        %s824 = smul.addr %s823, 9
        %s825 = smul.addr %s824, 4
        %s826 = scalar_lea.vmem %s0, %s825
        %p827 = scmp.lt.s32.totalorder %s19, 1
        %s828 = scalar_select %p827, %s19, 1
        %s829 = scalar_lea.vmem %s2, %s828
        %p830 = scmp.lt.s32.totalorder %s18, 0
        %s831 = scalar_select %p830, %s18, 0
        %p832 = scmp.lt.s32.totalorder %s19, 1
        %s833 = scalar_select %p832, %s19, 1
        %s834 = smul.addr %s831, 2
        %s835 = sadd.s32 %s833, %s834
        %s836 = smul.addr %s835, 4
        %s837 = scalar_lea.vmem %s3, %s836
        %v839 = vld [vmem:[%s826] sm:$0xff]
        %v840 = vld [vmem:[%s826 + $0x8] sm:$0xff]
        %v841 = vld [vmem:[%s826 + $0x10] sm:$0xff]
        %v842 = vld [vmem:[%s826 + $0x18] sm:$0xff]
        %v843 = vld [vmem:[%s826 + $0x20] sm:$0xf]
        %v844 = vld [vmem:[%s790] sm:$0xf]
        %v845 = vld [vmem:[%s790 + $0x4] sm:$0xf]
        %v846 = vld [vmem:[%s790 + $0x8] sm:$0xf]
        %v847 = vld [vmem:[%s790 + $0xc] sm:$0xf]
        %v848 = vld [vmem:[%s790 + $0x10] sm:$0xf]
        %v849 = vld [vmem:[%s790 + $0x14] sm:$0xf]
        %v850 = vld [vmem:[%s790 + $0x18] sm:$0xf]
        %v851 = vld [vmem:[%s790 + $0x1c] sm:$0xf]
        %v852 = vld [vmem:[%s790 + $0x20] sm:$0xf]
        %v853 = vld [vmem:[%s790 + $0x24] sm:$0xf]
        %v854 = vld [vmem:[%s790 + $0x28] sm:$0xf]
        %v855 = vld [vmem:[%s790 + $0x2c] sm:$0xf]
        %v856 = vld [vmem:[%s790 + $0x30] sm:$0xf]
        %v857 = vld [vmem:[%s790 + $0x34] sm:$0xf]
        %v858 = vld [vmem:[%s790 + $0x38] sm:$0xf]
        %v859 = vld [vmem:[%s790 + $0x3c] sm:$0xf]
        %v860 = vld [vmem:[%s790 + $0x40] sm:$0xf]
        %v861 = vld [vmem:[%s790 + $0x44] sm:$0xf]
        %v862 = vld [vmem:[%s790 + $0x48] sm:$0xf]
        %v863 = vld [vmem:[%s790 + $0x4c] sm:$0xf]
        %v864 = vld [vmem:[%s790 + $0x50] sm:$0xf]
        %v865 = vld [vmem:[%s790 + $0x54] sm:$0xf]
        %v866 = vld [vmem:[%s790 + $0x58] sm:$0xf]
        %v867 = vld [vmem:[%s790 + $0x5c] sm:$0xf]
        %v868 = vld [vmem:[%s790 + $0x60] sm:$0xf]
        %v869 = vld [vmem:[%s790 + $0x64] sm:$0xf]
        %v870 = vld [vmem:[%s790 + $0x68] sm:$0xf]
        %v871 = vld [vmem:[%s790 + $0x6c] sm:$0xf]
        %v872 = vld [vmem:[%s790 + $0x70] sm:$0xf]
        %v873 = vld [vmem:[%s790 + $0x74] sm:$0xf]
        %v874 = vld [vmem:[%s790 + $0x78] sm:$0xf]
        %v875 = vld [vmem:[%s790 + $0x7c] sm:$0xf]
        %v876 = vld [vmem:[%s790 + $0x80] sm:$0xf]
        %v877 = vld [vmem:[%s790 + $0x84] sm:$0xf]
        %v878 = vld [vmem:[%s790 + $0x88] sm:$0xf]
        %v879 = vld [vmem:[%s790 + $0x8c] sm:$0xf]
        %v880 = vld [vmem:[%s790 + $0x90] sm:$0xf]
        %v881 = vld [vmem:[%s790 + $0x94] sm:$0xf]
        %v882 = vld [vmem:[%s790 + $0x98] sm:$0xf]
        %v883 = vld [vmem:[%s790 + $0x9c] sm:$0xf]
        %v884 = vld [vmem:[%s790 + $0xa0] sm:$0xf]
        %v885 = vld [vmem:[%s790 + $0xa4] sm:$0xf]
        %v886 = vld [vmem:[%s790 + $0xa8] sm:$0xf]
        %v887 = vld [vmem:[%s790 + $0xac] sm:$0xf]
        %v888 = vld [vmem:[%s790 + $0xb0] sm:$0xf]
        %v889 = vld [vmem:[%s790 + $0xb4] sm:$0xf]
        %v890 = vld [vmem:[%s790 + $0xb8] sm:$0xf]
        %v891 = vld [vmem:[%s790 + $0xbc] sm:$0xf]
        %v892 = vld [vmem:[%s790 + $0xc0] sm:$0xf]
        %v893 = vld [vmem:[%s790 + $0xc4] sm:$0xf]
        %v894 = vld [vmem:[%s790 + $0xc8] sm:$0xf]
        %v895 = vld [vmem:[%s790 + $0xcc] sm:$0xf]
        %v896 = vld [vmem:[%s790 + $0xd0] sm:$0xf]
        %v897 = vld [vmem:[%s790 + $0xd4] sm:$0xf]
        %v898 = vld [vmem:[%s790 + $0xd8] sm:$0xf]
        %v899 = vld [vmem:[%s790 + $0xdc] sm:$0xf]
        %v900 = vld [vmem:[%s790 + $0xe0] sm:$0xf]
        %v901 = vld [vmem:[%s790 + $0xe4] sm:$0xf]
        %v902 = vld [vmem:[%s790 + $0xe8] sm:$0xf]
        %v903 = vld [vmem:[%s790 + $0xec] sm:$0xf]
        %v904 = vld [vmem:[%s790 + $0xf0] sm:$0xf]
        %v905 = vld [vmem:[%s790 + $0xf4] sm:$0xf]
        %v906 = vld [vmem:[%s790 + $0xf8] sm:$0xf]
        %v907 = vld [vmem:[%s790 + $0xfc] sm:$0xf]
        %v908 = vld [vmem:[%s790 + $0x100] sm:$0xf]
        %v909 = vld [vmem:[%s790 + $0x104] sm:$0xf]
        %v910 = vld [vmem:[%s790 + $0x108] sm:$0xf]
        %v911 = vld [vmem:[%s790 + $0x10c] sm:$0xf]
        %v912 = vld [vmem:[%s790 + $0x110] sm:$0xf]
        %v913 = vld [vmem:[%s790 + $0x114] sm:$0xf]
        %v914 = vld [vmem:[%s790 + $0x118] sm:$0xf]
        %v915 = vld [vmem:[%s790 + $0x11c] sm:$0xf]
        %v916 = vld [vmem:[%s790 + $0x120] sm:$0xf]
        %v917 = vld [vmem:[%s790 + $0x124] sm:$0xf]
        %v918 = vld [vmem:[%s790 + $0x128] sm:$0xf]
        %v919 = vld [vmem:[%s790 + $0x12c] sm:$0xf]
        %v920 = vld [vmem:[%s790 + $0x130] sm:$0xf]
        %v921 = vld [vmem:[%s790 + $0x134] sm:$0xf]
        %v922 = vld [vmem:[%s790 + $0x138] sm:$0xf]
        %v923 = vld [vmem:[%s790 + $0x13c] sm:$0xf]
        %v924 = vld [vmem:[%s790 + $0x140] sm:$0xf]
        %v925 = vld [vmem:[%s790 + $0x144] sm:$0xf]
        %v926 = vld [vmem:[%s790 + $0x148] sm:$0xf]
        %v927 = vld [vmem:[%s790 + $0x14c] sm:$0xf]
        %v928 = vld [vmem:[%s790 + $0x150] sm:$0xf]
        %v929 = vld [vmem:[%s790 + $0x154] sm:$0xf]
        %v930 = vld [vmem:[%s790 + $0x158] sm:$0xf]
        %v931 = vld [vmem:[%s790 + $0x15c] sm:$0xf]
        %v932 = vld [vmem:[%s790 + $0x160] sm:$0xf]
        %v933 = vld [vmem:[%s790 + $0x164] sm:$0xf]
        %v934 = vld [vmem:[%s790 + $0x168] sm:$0xf]
        %v935 = vld [vmem:[%s790 + $0x16c] sm:$0xf]
        %v936 = vld [vmem:[%s790 + $0x170] sm:$0xf]
        %v937 = vld [vmem:[%s790 + $0x174] sm:$0xf]
        %v938 = vld [vmem:[%s790 + $0x178] sm:$0xf]
        %v939 = vld [vmem:[%s790 + $0x17c] sm:$0xf]
        %v940 = vld [vmem:[%s790 + $0x180] sm:$0xf]
        %v941 = vld [vmem:[%s790 + $0x184] sm:$0xf]
        %v942 = vld [vmem:[%s790 + $0x188] sm:$0xf]
        %v943 = vld [vmem:[%s790 + $0x18c] sm:$0xf]
        %v944 = vld [vmem:[%s790 + $0x190] sm:$0xf]
        %v945 = vld [vmem:[%s790 + $0x194] sm:$0xf]
        %v946 = vld [vmem:[%s790 + $0x198] sm:$0xf]
        %v947 = vld [vmem:[%s790 + $0x19c] sm:$0xf]
        %v948 = vld [vmem:[%s790 + $0x1a0] sm:$0xf]
        %v949 = vld [vmem:[%s790 + $0x1a4] sm:$0xf]
        %v950 = vld [vmem:[%s790 + $0x1a8] sm:$0xf]
        %v951 = vld [vmem:[%s790 + $0x1ac] sm:$0xf]
        %v952 = vld [vmem:[%s790 + $0x1b0] sm:$0xf]
        %v953 = vld [vmem:[%s790 + $0x1b4] sm:$0xf]
        %v954 = vld [vmem:[%s790 + $0x1b8] sm:$0xf]
        %v955 = vld [vmem:[%s790 + $0x1bc] sm:$0xf]
        %v956 = vld [vmem:[%s790 + $0x1c0] sm:$0xf]
        %v957 = vld [vmem:[%s790 + $0x1c4] sm:$0xf]
        %v958 = vld [vmem:[%s790 + $0x1c8] sm:$0xf]
        %v959 = vld [vmem:[%s790 + $0x1cc] sm:$0xf]
        %v960 = vld [vmem:[%s790 + $0x1d0] sm:$0xf]
        %v961 = vld [vmem:[%s790 + $0x1d4] sm:$0xf]
        %v962 = vld [vmem:[%s790 + $0x1d8] sm:$0xf]
        %v963 = vld [vmem:[%s790 + $0x1dc] sm:$0xf]
        %v964 = vld [vmem:[%s790 + $0x1e0] sm:$0xf]
        %v965 = vld [vmem:[%s790 + $0x1e4] sm:$0xf]
        %v966 = vld [vmem:[%s790 + $0x1e8] sm:$0xf]
        %v967 = vld [vmem:[%s790 + $0x1ec] sm:$0xf]
        %v968 = vld [vmem:[%s790 + $0x1f0] sm:$0xf]
        %v969 = vld [vmem:[%s790 + $0x1f4] sm:$0xf]
        %v970 = vld [vmem:[%s790 + $0x1f8] sm:$0xf]
        %v971 = vld [vmem:[%s790 + $0x1fc] sm:$0xf]
        %v972 = vld [vmem:[%s790 + $0x200] sm:$0xf]
        %v973 = vld [vmem:[%s790 + $0x204] sm:$0xf]
        %v974 = vld [vmem:[%s790 + $0x208] sm:$0xf]
        %v975 = vld [vmem:[%s790 + $0x20c] sm:$0xf]
        %v976 = vld [vmem:[%s790 + $0x210] sm:$0xf]
        %v977 = vld [vmem:[%s790 + $0x214] sm:$0xf]
        %v978 = vld [vmem:[%s790 + $0x218] sm:$0xf]
        %v979 = vld [vmem:[%s790 + $0x21c] sm:$0xf]
        %v980 = vld [vmem:[%s790 + $0x220] sm:$0xf]
        %v981 = vld [vmem:[%s790 + $0x224] sm:$0xf]
        %v982 = vld [vmem:[%s790 + $0x228] sm:$0xf]
        %v983 = vld [vmem:[%s790 + $0x22c] sm:$0xf]
        %v984 = vld [vmem:[%s790 + $0x230] sm:$0xf]
        %v985 = vld [vmem:[%s790 + $0x234] sm:$0xf]
        %v986 = vld [vmem:[%s790 + $0x238] sm:$0xf]
        %v987 = vld [vmem:[%s790 + $0x23c] sm:$0xf]
        %v988 = vld [vmem:[%s829] sm:$0x1]
        %v990 = vlaneseq
        %v991 = vshrl.u32 %v990, 7
        %v992 = vsub.s32 0, %v991
        %v993 = vrot.slane %v988, %v992
        %v1000 = vunpack.c.l.b16 %v839
        %v1001 = vunpack.c.h.b16 %v839
        %v1002 = vunpack.c.l.b16 %v840
        %v1003 = vunpack.c.h.b16 %v840
        %v1004 = vunpack.c.l.b16 %v841
        %v1005 = vunpack.c.h.b16 %v841
        %v1006 = vunpack.c.l.b16 %v842
        %v1007 = vunpack.c.h.b16 %v842
        %v1008 = vunpack.c.l.b16 %v843
        %v1009 = vpack.c.b16 %v1000, %v1000
        %v1010 = vpack.c.b16 %v1001, %v1001
        %v1011 = vpack.c.b16 %v1002, %v1002
        %v1012 = vpack.c.b16 %v1003, %v1003
        %v1013 = vpack.c.b16 %v1004, %v1004
        %v1014 = vpack.c.b16 %v1005, %v1005
        %v1015 = vpack.c.b16 %v1006, %v1006
        %v1016 = vpack.c.b16 %v1007, %v1007
        %v1017 = vpack.c.b16 %v1008, %v1008
        %v1171 = vunpack.c.l.b16 %v844
        %v1172 = vunpack.c.l.b16 %v845
        %v1173 = vunpack.c.l.b16 %v846
        %v1174 = vunpack.c.l.b16 %v847
        %v1175 = vunpack.c.l.b16 %v848
        %v1176 = vunpack.c.l.b16 %v849
        %v1177 = vunpack.c.l.b16 %v850
        %v1178 = vunpack.c.l.b16 %v851
        %v1179 = vunpack.c.l.b16 %v852
        %v1180 = vunpack.c.l.b16 %v853
        %v1181 = vunpack.c.l.b16 %v854
        %v1182 = vunpack.c.l.b16 %v855
        %v1183 = vunpack.c.l.b16 %v856
        %v1184 = vunpack.c.l.b16 %v857
        %v1185 = vunpack.c.l.b16 %v858
        %v1186 = vunpack.c.l.b16 %v859
        %v1187 = vunpack.c.l.b16 %v860
        %v1188 = vunpack.c.l.b16 %v861
        %v1189 = vunpack.c.l.b16 %v862
        %v1190 = vunpack.c.l.b16 %v863
        %v1191 = vunpack.c.l.b16 %v864
        %v1192 = vunpack.c.l.b16 %v865
        %v1193 = vunpack.c.l.b16 %v866
        %v1194 = vunpack.c.l.b16 %v867
        %v1195 = vunpack.c.l.b16 %v868
        %v1196 = vunpack.c.l.b16 %v869
        %v1197 = vunpack.c.l.b16 %v870
        %v1198 = vunpack.c.l.b16 %v871
        %v1199 = vunpack.c.l.b16 %v872
        %v1200 = vunpack.c.l.b16 %v873
        %v1201 = vunpack.c.l.b16 %v874
        %v1202 = vunpack.c.l.b16 %v875
        %v1203 = vunpack.c.l.b16 %v876
        %v1204 = vunpack.c.l.b16 %v877
        %v1205 = vunpack.c.l.b16 %v878
        %v1206 = vunpack.c.l.b16 %v879
        %v1207 = vunpack.c.l.b16 %v880
        %v1208 = vunpack.c.l.b16 %v881
        %v1209 = vunpack.c.l.b16 %v882
        %v1210 = vunpack.c.l.b16 %v883
        %v1211 = vunpack.c.l.b16 %v884
        %v1212 = vunpack.c.l.b16 %v885
        %v1213 = vunpack.c.l.b16 %v886
        %v1214 = vunpack.c.l.b16 %v887
        %v1215 = vunpack.c.l.b16 %v888
        %v1216 = vunpack.c.l.b16 %v889
        %v1217 = vunpack.c.l.b16 %v890
        %v1218 = vunpack.c.l.b16 %v891
        %v1219 = vunpack.c.l.b16 %v892
        %v1220 = vunpack.c.l.b16 %v893
        %v1221 = vunpack.c.l.b16 %v894
        %v1222 = vunpack.c.l.b16 %v895
        %v1223 = vunpack.c.l.b16 %v896
        %v1224 = vunpack.c.l.b16 %v897
        %v1225 = vunpack.c.l.b16 %v898
        %v1226 = vunpack.c.l.b16 %v899
        %v1227 = vunpack.c.l.b16 %v900
        %v1228 = vunpack.c.l.b16 %v901
        %v1229 = vunpack.c.l.b16 %v902
        %v1230 = vunpack.c.l.b16 %v903
        %v1231 = vunpack.c.l.b16 %v904
        %v1232 = vunpack.c.l.b16 %v905
        %v1233 = vunpack.c.l.b16 %v906
        %v1234 = vunpack.c.l.b16 %v907
        %v1235 = vunpack.c.l.b16 %v908
        %v1236 = vunpack.c.l.b16 %v909
        %v1237 = vunpack.c.l.b16 %v910
        %v1238 = vunpack.c.l.b16 %v911
        %v1239 = vunpack.c.l.b16 %v912
        %v1240 = vunpack.c.l.b16 %v913
        %v1241 = vunpack.c.l.b16 %v914
        %v1242 = vunpack.c.l.b16 %v915
        %v1243 = vunpack.c.l.b16 %v916
        %v1244 = vunpack.c.l.b16 %v917
        %v1245 = vunpack.c.l.b16 %v918
        %v1246 = vunpack.c.l.b16 %v919
        %v1247 = vunpack.c.l.b16 %v920
        %v1248 = vunpack.c.l.b16 %v921
        %v1249 = vunpack.c.l.b16 %v922
        %v1250 = vunpack.c.l.b16 %v923
        %v1251 = vunpack.c.l.b16 %v924
        %v1252 = vunpack.c.l.b16 %v925
        %v1253 = vunpack.c.l.b16 %v926
        %v1254 = vunpack.c.l.b16 %v927
        %v1255 = vunpack.c.l.b16 %v928
        %v1256 = vunpack.c.l.b16 %v929
        %v1257 = vunpack.c.l.b16 %v930
        %v1258 = vunpack.c.l.b16 %v931
        %v1259 = vunpack.c.l.b16 %v932
        %v1260 = vunpack.c.l.b16 %v933
        %v1261 = vunpack.c.l.b16 %v934
        %v1262 = vunpack.c.l.b16 %v935
        %v1263 = vunpack.c.l.b16 %v936
        %v1264 = vunpack.c.l.b16 %v937
        %v1265 = vunpack.c.l.b16 %v938
        %v1266 = vunpack.c.l.b16 %v939
        %v1267 = vunpack.c.l.b16 %v940
        %v1268 = vunpack.c.l.b16 %v941
        %v1269 = vunpack.c.l.b16 %v942
        %v1270 = vunpack.c.l.b16 %v943
        %v1271 = vunpack.c.l.b16 %v944
        %v1272 = vunpack.c.l.b16 %v945
        %v1273 = vunpack.c.l.b16 %v946
        %v1274 = vunpack.c.l.b16 %v947
        %v1275 = vunpack.c.l.b16 %v948
        %v1276 = vunpack.c.l.b16 %v949
        %v1277 = vunpack.c.l.b16 %v950
        %v1278 = vunpack.c.l.b16 %v951
        %v1279 = vunpack.c.l.b16 %v952
        %v1280 = vunpack.c.l.b16 %v953
        %v1281 = vunpack.c.l.b16 %v954
        %v1282 = vunpack.c.l.b16 %v955
        %v1283 = vunpack.c.l.b16 %v956
        %v1284 = vunpack.c.l.b16 %v957
        %v1285 = vunpack.c.l.b16 %v958
        %v1286 = vunpack.c.l.b16 %v959
        %v1287 = vunpack.c.l.b16 %v960
        %v1288 = vunpack.c.l.b16 %v961
        %v1289 = vunpack.c.l.b16 %v962
        %v1290 = vunpack.c.l.b16 %v963
        %v1291 = vunpack.c.l.b16 %v964
        %v1292 = vunpack.c.l.b16 %v965
        %v1293 = vunpack.c.l.b16 %v966
        %v1294 = vunpack.c.l.b16 %v967
        %v1295 = vunpack.c.l.b16 %v968
        %v1296 = vunpack.c.l.b16 %v969
        %v1297 = vunpack.c.l.b16 %v970
        %v1298 = vunpack.c.l.b16 %v971
        %v1299 = vunpack.c.l.b16 %v972
        %v1300 = vunpack.c.l.b16 %v973
        %v1301 = vunpack.c.l.b16 %v974
        %v1302 = vunpack.c.l.b16 %v975
        %v1303 = vunpack.c.l.b16 %v976
        %v1304 = vunpack.c.l.b16 %v977
        %v1305 = vunpack.c.l.b16 %v978
        %v1306 = vunpack.c.l.b16 %v979
        %v1307 = vunpack.c.l.b16 %v980
        %v1308 = vunpack.c.l.b16 %v981
        %v1309 = vunpack.c.l.b16 %v982
        %v1310 = vunpack.c.l.b16 %v983
        %v1311 = vunpack.c.l.b16 %v984
        %v1312 = vunpack.c.l.b16 %v985
        %v1313 = vunpack.c.l.b16 %v986
        %v1314 = vunpack.c.l.b16 %v987
        %v1315 = vpack.c.b16 %v1172, %v1171
        %v1316 = vpack.c.b16 %v1174, %v1173
        %v1317 = vpack.c.b16 %v1176, %v1175
        %v1318 = vpack.c.b16 %v1178, %v1177
        %v1319 = vpack.c.b16 %v1180, %v1179
        %v1320 = vpack.c.b16 %v1182, %v1181
        %v1321 = vpack.c.b16 %v1184, %v1183
        %v1322 = vpack.c.b16 %v1186, %v1185
        %v1323 = vpack.c.b16 %v1188, %v1187
        %v1324 = vpack.c.b16 %v1190, %v1189
        %v1325 = vpack.c.b16 %v1192, %v1191
        %v1326 = vpack.c.b16 %v1194, %v1193
        %v1327 = vpack.c.b16 %v1196, %v1195
        %v1328 = vpack.c.b16 %v1198, %v1197
        %v1329 = vpack.c.b16 %v1200, %v1199
        %v1330 = vpack.c.b16 %v1202, %v1201
        %v1331 = vpack.c.b16 %v1204, %v1203
        %v1332 = vpack.c.b16 %v1206, %v1205
        %v1333 = vpack.c.b16 %v1208, %v1207
        %v1334 = vpack.c.b16 %v1210, %v1209
        %v1335 = vpack.c.b16 %v1212, %v1211
        %v1336 = vpack.c.b16 %v1214, %v1213
        %v1337 = vpack.c.b16 %v1216, %v1215
        %v1338 = vpack.c.b16 %v1218, %v1217
        %v1339 = vpack.c.b16 %v1220, %v1219
        %v1340 = vpack.c.b16 %v1222, %v1221
        %v1341 = vpack.c.b16 %v1224, %v1223
        %v1342 = vpack.c.b16 %v1226, %v1225
        %v1343 = vpack.c.b16 %v1228, %v1227
        %v1344 = vpack.c.b16 %v1230, %v1229
        %v1345 = vpack.c.b16 %v1232, %v1231
        %v1346 = vpack.c.b16 %v1234, %v1233
        %v1347 = vpack.c.b16 %v1236, %v1235
        %v1348 = vpack.c.b16 %v1238, %v1237
        %v1349 = vpack.c.b16 %v1240, %v1239
        %v1350 = vpack.c.b16 %v1242, %v1241
        %v1351 = vpack.c.b16 %v1244, %v1243
        %v1352 = vpack.c.b16 %v1246, %v1245
        %v1353 = vpack.c.b16 %v1248, %v1247
        %v1354 = vpack.c.b16 %v1250, %v1249
        %v1355 = vpack.c.b16 %v1252, %v1251
        %v1356 = vpack.c.b16 %v1254, %v1253
        %v1357 = vpack.c.b16 %v1256, %v1255
        %v1358 = vpack.c.b16 %v1258, %v1257
        %v1359 = vpack.c.b16 %v1260, %v1259
        %v1360 = vpack.c.b16 %v1262, %v1261
        %v1361 = vpack.c.b16 %v1264, %v1263
        %v1362 = vpack.c.b16 %v1266, %v1265
        %v1363 = vpack.c.b16 %v1268, %v1267
        %v1364 = vpack.c.b16 %v1270, %v1269
        %v1365 = vpack.c.b16 %v1272, %v1271
        %v1366 = vpack.c.b16 %v1274, %v1273
        %v1367 = vpack.c.b16 %v1276, %v1275
        %v1368 = vpack.c.b16 %v1278, %v1277
        %v1369 = vpack.c.b16 %v1280, %v1279
        %v1370 = vpack.c.b16 %v1282, %v1281
        %v1371 = vpack.c.b16 %v1284, %v1283
        %v1372 = vpack.c.b16 %v1286, %v1285
        %v1373 = vpack.c.b16 %v1288, %v1287
        %v1374 = vpack.c.b16 %v1290, %v1289
        %v1375 = vpack.c.b16 %v1292, %v1291
        %v1376 = vpack.c.b16 %v1294, %v1293
        %v1377 = vpack.c.b16 %v1296, %v1295
        %v1378 = vpack.c.b16 %v1298, %v1297
        %v1379 = vpack.c.b16 %v1300, %v1299
        %v1380 = vpack.c.b16 %v1302, %v1301
        %v1381 = vpack.c.b16 %v1304, %v1303
        %v1382 = vpack.c.b16 %v1306, %v1305
        %v1383 = vpack.c.b16 %v1308, %v1307
        %v1384 = vpack.c.b16 %v1310, %v1309
        %v1385 = vpack.c.b16 %v1312, %v1311
        %v1386 = vpack.c.b16 %v1314, %v1313
        %1459 = vmatprep.subr.bf16.mxu0 0
        %1460 = vmatpush1.bf16.msra.mxu0 %v1315
        %1461 = vmatprep.subr.bf16.mxu0 0
        %1462 = vmatpush1.bf16.msra.mxu0 %v1316
        %1463 = vmatprep.subr.bf16.mxu0 0
        %1464 = vmatpush1.bf16.msra.mxu0 %v1317
        %1465 = vmatprep.subr.bf16.mxu0 0
        %1466 = vmatpush1.bf16.msra.mxu0 %v1318
        %1467 = vmatprep.subr.bf16.mxu0 0
        %1468 = vmatpush1.bf16.msra.mxu0 %v1319
        %1469 = vmatprep.subr.bf16.mxu0 0
        %1470 = vmatpush1.bf16.msra.mxu0 %v1320
        %1471 = vmatprep.subr.bf16.mxu0 0
        %1472 = vmatpush1.bf16.msra.mxu0 %v1321
        %1473 = vmatprep.subr.bf16.mxu0 0
        %1474 = vmatpush1.bf16.msra.mxu0 %v1322
        %1475 = vmatprep.subr.bf16.mxu0 0
        %1476 = vmatpush1.bf16.msra.mxu0 %v1323
        %1477 = vmatprep.subr.bf16.mxu0 0
        %1478 = vmatpush1.bf16.msra.mxu0 %v1324
        %1479 = vmatprep.subr.bf16.mxu0 0
        %1480 = vmatpush1.bf16.msra.mxu0 %v1325
        %1481 = vmatprep.subr.bf16.mxu0 0
        %1482 = vmatpush1.bf16.msra.mxu0 %v1326
        %1483 = vmatprep.subr.bf16.mxu0 0
        %1484 = vmatpush1.bf16.msra.mxu0 %v1327
        %1485 = vmatprep.subr.bf16.mxu0 0
        %1486 = vmatpush1.bf16.msra.mxu0 %v1328
        %1487 = vmatprep.subr.bf16.mxu0 0
        %1488 = vmatpush1.bf16.msra.mxu0 %v1329
        %1489 = vmatprep.subr.bf16.mxu0 0
        %1490 = vmatpush1.bf16.msra.mxu0 %v1330
        %1491 = vmatprep.mubr.bf16.mxu0 %v1010
        %1492 = vmatmul.mubr.bf16.gmra.mrb[0].mxu0 %v1009
        %v1493 = vpop.f32.mrb[0].mxu0
        %v1494 = vadd.f32 %v993, %v1493
        %v1495 = vpop.f32.mrb[0].mxu0
        %v1496 = vpop.f32.mrb[0].mxu0
        %v1497 = vpop.f32.mrb[0].mxu0
        %1498 = vdwg.mxu0
        %1499 = vmatprep.subr.bf16.mxu0 0
        %1500 = vmatpush1.bf16.msra.mxu0 %v1331
        %1501 = vmatprep.subr.bf16.mxu0 0
        %1502 = vmatpush1.bf16.msra.mxu0 %v1332
        %1503 = vmatprep.subr.bf16.mxu0 0
        %1504 = vmatpush1.bf16.msra.mxu0 %v1333
        %1505 = vmatprep.subr.bf16.mxu0 0
        %1506 = vmatpush1.bf16.msra.mxu0 %v1334
        %1507 = vmatprep.subr.bf16.mxu0 0
        %1508 = vmatpush1.bf16.msra.mxu0 %v1335
        %1509 = vmatprep.subr.bf16.mxu0 0
        %1510 = vmatpush1.bf16.msra.mxu0 %v1336
        %1511 = vmatprep.subr.bf16.mxu0 0
        %1512 = vmatpush1.bf16.msra.mxu0 %v1337
        %1513 = vmatprep.subr.bf16.mxu0 0
        %1514 = vmatpush1.bf16.msra.mxu0 %v1338
        %1515 = vmatprep.subr.bf16.mxu0 0
        %1516 = vmatpush1.bf16.msra.mxu0 %v1339
        %1517 = vmatprep.subr.bf16.mxu0 0
        %1518 = vmatpush1.bf16.msra.mxu0 %v1340
        %1519 = vmatprep.subr.bf16.mxu0 0
        %1520 = vmatpush1.bf16.msra.mxu0 %v1341
        %1521 = vmatprep.subr.bf16.mxu0 0
        %1522 = vmatpush1.bf16.msra.mxu0 %v1342
        %1523 = vmatprep.subr.bf16.mxu0 0
        %1524 = vmatpush1.bf16.msra.mxu0 %v1343
        %1525 = vmatprep.subr.bf16.mxu0 0
        %1526 = vmatpush1.bf16.msra.mxu0 %v1344
        %1527 = vmatprep.subr.bf16.mxu0 0
        %1528 = vmatpush1.bf16.msra.mxu0 %v1345
        %1529 = vmatprep.subr.bf16.mxu0 0
        %1530 = vmatpush1.bf16.msra.mxu0 %v1346
        %1531 = vmatprep.mubr.bf16.mxu0 %v1012
        %1532 = vmatmul.mubr.bf16.gmra.mrb[0].mxu0 %v1011
        %v1533 = vpop.f32.mrb[0].mxu0
        %v1534 = vadd.f32 %v1494, %v1533
        %v1535 = vpop.f32.mrb[0].mxu0
        %v1536 = vpop.f32.mrb[0].mxu0
        %v1537 = vpop.f32.mrb[0].mxu0
        %1538 = vdwg.mxu0
        %1539 = vmatprep.subr.bf16.mxu0 0
        %1540 = vmatpush1.bf16.msra.mxu0 %v1347
        %1541 = vmatprep.subr.bf16.mxu0 0
        %1542 = vmatpush1.bf16.msra.mxu0 %v1348
        %1543 = vmatprep.subr.bf16.mxu0 0
        %1544 = vmatpush1.bf16.msra.mxu0 %v1349
        %1545 = vmatprep.subr.bf16.mxu0 0
        %1546 = vmatpush1.bf16.msra.mxu0 %v1350
        %1547 = vmatprep.subr.bf16.mxu0 0
        %1548 = vmatpush1.bf16.msra.mxu0 %v1351
        %1549 = vmatprep.subr.bf16.mxu0 0
        %1550 = vmatpush1.bf16.msra.mxu0 %v1352
        %1551 = vmatprep.subr.bf16.mxu0 0
        %1552 = vmatpush1.bf16.msra.mxu0 %v1353
        %1553 = vmatprep.subr.bf16.mxu0 0
        %1554 = vmatpush1.bf16.msra.mxu0 %v1354
        %1555 = vmatprep.subr.bf16.mxu0 0
        %1556 = vmatpush1.bf16.msra.mxu0 %v1355
        %1557 = vmatprep.subr.bf16.mxu0 0
        %1558 = vmatpush1.bf16.msra.mxu0 %v1356
        %1559 = vmatprep.subr.bf16.mxu0 0
        %1560 = vmatpush1.bf16.msra.mxu0 %v1357
        %1561 = vmatprep.subr.bf16.mxu0 0
        %1562 = vmatpush1.bf16.msra.mxu0 %v1358
        %1563 = vmatprep.subr.bf16.mxu0 0
        %1564 = vmatpush1.bf16.msra.mxu0 %v1359
        %1565 = vmatprep.subr.bf16.mxu0 0
        %1566 = vmatpush1.bf16.msra.mxu0 %v1360
        %1567 = vmatprep.subr.bf16.mxu0 0
        %1568 = vmatpush1.bf16.msra.mxu0 %v1361
        %1569 = vmatprep.subr.bf16.mxu0 0
        %1570 = vmatpush1.bf16.msra.mxu0 %v1362
        %1571 = vmatprep.mubr.bf16.mxu0 %v1014
        %1572 = vmatmul.mubr.bf16.gmra.mrb[0].mxu0 %v1013
        %v1573 = vpop.f32.mrb[0].mxu0
        %v1574 = vadd.f32 %v1534, %v1573
        %v1575 = vpop.f32.mrb[0].mxu0
        %v1576 = vpop.f32.mrb[0].mxu0
        %v1577 = vpop.f32.mrb[0].mxu0
        %1578 = vdwg.mxu0
        %1579 = vmatprep.subr.bf16.mxu0 0
        %1580 = vmatpush1.bf16.msra.mxu0 %v1363
        %1581 = vmatprep.subr.bf16.mxu0 0
        %1582 = vmatpush1.bf16.msra.mxu0 %v1364
        %1583 = vmatprep.subr.bf16.mxu0 0
        %1584 = vmatpush1.bf16.msra.mxu0 %v1365
        %1585 = vmatprep.subr.bf16.mxu0 0
        %1586 = vmatpush1.bf16.msra.mxu0 %v1366
        %1587 = vmatprep.subr.bf16.mxu0 0
        %1588 = vmatpush1.bf16.msra.mxu0 %v1367
        %1589 = vmatprep.subr.bf16.mxu0 0
        %1590 = vmatpush1.bf16.msra.mxu0 %v1368
        %1591 = vmatprep.subr.bf16.mxu0 0
        %1592 = vmatpush1.bf16.msra.mxu0 %v1369
        %1593 = vmatprep.subr.bf16.mxu0 0
        %1594 = vmatpush1.bf16.msra.mxu0 %v1370
        %1595 = vmatprep.subr.bf16.mxu0 0
        %1596 = vmatpush1.bf16.msra.mxu0 %v1371
        %1597 = vmatprep.subr.bf16.mxu0 0
        %1598 = vmatpush1.bf16.msra.mxu0 %v1372
        %1599 = vmatprep.subr.bf16.mxu0 0
        %1600 = vmatpush1.bf16.msra.mxu0 %v1373
        %1601 = vmatprep.subr.bf16.mxu0 0
        %1602 = vmatpush1.bf16.msra.mxu0 %v1374
        %1603 = vmatprep.subr.bf16.mxu0 0
        %1604 = vmatpush1.bf16.msra.mxu0 %v1375
        %1605 = vmatprep.subr.bf16.mxu0 0
        %1606 = vmatpush1.bf16.msra.mxu0 %v1376
        %1607 = vmatprep.subr.bf16.mxu0 0
        %1608 = vmatpush1.bf16.msra.mxu0 %v1377
        %1609 = vmatprep.subr.bf16.mxu0 0
        %1610 = vmatpush1.bf16.msra.mxu0 %v1378
        %1611 = vmatprep.mubr.bf16.mxu0 %v1016
        %1612 = vmatmul.mubr.bf16.gmra.mrb[0].mxu0 %v1015
        %v1613 = vpop.f32.mrb[0].mxu0
        %v1614 = vadd.f32 %v1574, %v1613
        %v1615 = vpop.f32.mrb[0].mxu0
        %v1616 = vpop.f32.mrb[0].mxu0
        %v1617 = vpop.f32.mrb[0].mxu0
        %1618 = vdwg.mxu0
        %1619 = vmatprep.subr.bf16.mxu0 0
        %1620 = vmatpush1.bf16.msra.mxu0 %v1379
        %1621 = vmatprep.subr.bf16.mxu0 0
        %1622 = vmatpush1.bf16.msra.mxu0 %v1380
        %1623 = vmatprep.subr.bf16.mxu0 0
        %1624 = vmatpush1.bf16.msra.mxu0 %v1381
        %1625 = vmatprep.subr.bf16.mxu0 0
        %1626 = vmatpush1.bf16.msra.mxu0 %v1382
        %1627 = vmatprep.subr.bf16.mxu0 0
        %1628 = vmatpush1.bf16.msra.mxu0 %v1383
        %1629 = vmatprep.subr.bf16.mxu0 0
        %1630 = vmatpush1.bf16.msra.mxu0 %v1384
        %1631 = vmatprep.subr.bf16.mxu0 0
        %1632 = vmatpush1.bf16.msra.mxu0 %v1385
        %1633 = vmatprep.subr.bf16.mxu0 0
        %1634 = vmatpush1.bf16.msra.mxu0 %v1386
        %1635 = vmatprep.subr.bf16.mxu0 0
        %1636 = vmatpush1.bf16.msra.mxu0 0
        %1637 = vmatprep.subr.bf16.mxu0 0
        %1638 = vmatpush1.bf16.msra.mxu0 0
        %1639 = vmatprep.subr.bf16.mxu0 0
        %1640 = vmatpush1.bf16.msra.mxu0 0
        %1641 = vmatprep.subr.bf16.mxu0 0
        %1642 = vmatpush1.bf16.msra.mxu0 0
        %1643 = vmatprep.subr.bf16.mxu0 0
        %1644 = vmatpush1.bf16.msra.mxu0 0
        %1645 = vmatprep.subr.bf16.mxu0 0
        %1646 = vmatpush1.bf16.msra.mxu0 0
        %1647 = vmatprep.subr.bf16.mxu0 0
        %1648 = vmatpush1.bf16.msra.mxu0 0
        %1649 = vmatprep.subr.bf16.mxu0 0
        %1650 = vmatpush1.bf16.msra.mxu0 0
        %1651 = vmatprep.mubr.bf16.mxu0 0
        %1652 = vmatmul.mubr.bf16.gmra.mrb[0].mxu0 %v1017
        %v1653 = vpop.f32.mrb[0].mxu0
        %v1654 = vadd.f32 %v1614, %v1653
        %v1655 = vpop.f32.mrb[0].mxu0
        %v1656 = vpop.f32.mrb[0].mxu0
        %v1657 = vpop.f32.mrb[0].mxu0
        %1658 = vdwg.mxu0
        %v1659 = vmax.f32 %v1654, 0.0
        %v1660 = vpack.c.bf16 %v1659, %v1659
        %1661 = vst [vmem:[%s837] sm:$0xf] %v1660
        %p1662 = scmp.lt.s32.totalorder %s18, 0
        %s1663 = scalar_select %p1662, %s18, 0
        %p1664 = scmp.lt.s32.totalorder %s19, 1
        %s1665 = scalar_select %p1664, %s19, 1
        %s1666 = smul.addr %s1663, 2
        %s1667 = sadd.s32 %s1665, %s1666
        %s1668 = smul.addr %s1667, 4
        %s1669 = scalar_lea.vmem %s3, %s1668
        // Predicated region
        $region74: #{backbone_base_forward.7} parent=68 // pred_check
          %p1670 = pneg %p124
        $region75: #{backbone_base_forward.7} parent=68 // pred_check_branch
          %1672 = sbr.rel (%p1670) target = $region77
        $region76: #{backbone_base_forward.7} parent=68 // pred_region
          _
        $region77: #{backbone_base_forward.7} parent=68 // pred_fallthru
          _
      $region69: #{backbone_base_forward.7} parent=5 // pred_fallthru
        _
      %p1673 = scmp.le.s32.totalorder 2, %s9
      // Predicated region
      $region78: #{backbone_base_forward.7} parent=5 // pred_check
        %p1674 = pneg %p1673
      $region79: #{backbone_base_forward.7} parent=5 // pred_check_branch
        %1676 = sbr.rel (%p1674) target = $region81
      $region80: #{backbone_base_forward.7} parent=5 // pred_region
        %s1677 = ssub.s32 %s9, 2
        // Predicated region
        $region82: #{backbone_base_forward.7} parent=80 // pred_check
          %p1678 = pneg %p130
        $region83: #{backbone_base_forward.7} parent=80 // pred_check_branch
          %1680 = sbr.rel (%p1678) target = $region85
        $region84: #{backbone_base_forward.7} parent=80 // pred_region
          %p1681 = scmp.lt.s32.totalorder %s20, 0
          %s1682 = scalar_select %p1681, %s20, 0
          %p1683 = scmp.lt.s32.totalorder %s21, 1
          %s1684 = scalar_select %p1683, %s21, 1
          %s1685 = smul.addr %s1682, 2
          %s1686 = sadd.s32 %s1684, %s1685
          %s1687 = smul.addr %s1686, 4
          %s1688 = scalar_lea.vmem %s3, %s1687
        $region85: #{backbone_base_forward.7} parent=80 // pred_fallthru
          _
      $region81: #{backbone_base_forward.7} parent=5 // pred_fallthru
        _
    $region6: #{backbone_base_forward.7} parent=1 // loop_footer
      %s13 = sadd.s32 1, %s9
    $region7: #{backbone_base_forward.7} parent=1 // loop_footer_branch
      %8 = sbr.rel target = $region3
    $region8: #{backbone_base_forward.7} parent=1 // loop_exit
      _

</llo_original>
